<compile_context>
chip_gen: v7x
topology: tpu7x:2x2x1
jax: 0.10.0
libtpu: 0.0.40
codegen_flags: <defaults>
</compile_context>

<pallas_src>
import math
from functools import partial

import jax
import jax.numpy as jnp
from jax.experimental import pallas as pl
from jax.experimental.pallas import tpu as pltpu


def _round_up(x, m):
    return ((x + m - 1) // m) * m


def _pick_tile(n_nbrs, tile_n):
    """Row tile: multiple of 16 (bf16 packing); >=2 grid blocks when possible (v7x)."""
    n_pad = _round_up(max(n_nbrs, 1), 16)
    tile = min(_round_up(max(tile_n, 16), 16), n_pad)
    if pl.cdiv(n_nbrs, tile) < 2 and n_pad >= 32:
        tile = _round_up(n_pad // 2, 16)          # guarantee >=2 blocks for megacore
    return tile


# ----------------------------------------------------------------------------
# Fused kernel: per neighbor tile (all intermediates stay in VMEM)
#   phi   = (swish(s_g @ W1 + b1)) @ W2 + b2                       (bf16 MXU, f32 acc)
#   theta = d * [k_1..k_R, pi/c] + [0..0, pi/2]  -> sin(theta)     (env cos folded in)
#   w_s   = (env * [rbf, 1]) @ [W3; b3]                            (bias+env folded)
#   out   = phi * w_s
# ----------------------------------------------------------------------------
def _fused_message_kernel(s_ref, d_ref, w1_ref, b1_ref, w2_ref, b2_ref,
                          coef_ref, phase_ref, w3a_ref, out_ref, *, cutoff, n_rbf):
    # --- InvariantDense: Dense(F->F, swish) ; Dense(F->3F) --------------------
    s = s_ref[...]                                                    # (tn, F) bf16
    h = jnp.dot(s, w1_ref[...], preferred_element_type=jnp.float32) + b1_ref[...]
    h = h * jax.nn.sigmoid(h)                                         # swish, f32 (v5e-safe)
    phi = jnp.dot(h.astype(s.dtype), w2_ref[...],
                  preferred_element_type=jnp.float32) + b2_ref[...]   # (tn, 3F) f32

    # --- DistanceEmbed: rbf -> Dense(R->3F), CosineEnvelope (folded) ----------
    d = d_ref[...]                                                    # (tn, 1) f32
    coef = coef_ref[...]                                              # (1, R+1)
    theta = d * coef + phase_ref[...]                                 # (tn, R+1)
    sin_t = jnp.sin(theta)                                            # col R == cos(pi*d/cutoff)
    env = jnp.where(d < cutoff, 0.5 * (sin_t[:, n_rbf:] + 1.0), 0.0)  # (tn, 1) envelope * mask
    num = jnp.where(d == 0.0, coef[:, :n_rbf], sin_t[:, :n_rbf])      # sinc limit at d == 0
    scale = env / jnp.where(d == 0.0, 1.0, d)                         # (tn, 1)
    rbf_aug = jnp.concatenate([num * scale, env], axis=-1)            # (tn, R+1) = env*[rbf, 1]
    w_s = jnp.dot(rbf_aug, w3a_ref[...],
                  preferred_element_type=jnp.float32)                 # (tn, 3F), W3' = [W3; b3]

    out_ref[...] = (phi * w_s).astype(out_ref.dtype)                  # (tn, 3F)


def invariant_message(s_j, dist, nbrs, params, *, cutoff, tile_n=1024,
                      out_dtype=jnp.float32, mxu_dtype=jnp.bfloat16):
    n_atoms, feat_dim = s_j.shape
    n_nbrs = dist.shape[0]
    n_rbf = params["w3"].shape[0]
    out_dim = 3 * feat_dim

    # Narrow (F-wide) gather in bf16 as XLA glue; wide dense layers recomputed in-kernel.
    # TODO(synk): replace with in-kernel DMA gather of contiguous slabs for huge systems.
    s_g = jnp.take(s_j.astype(mxu_dtype), nbrs[:, 1], axis=0)          # (n_nbrs, F) bf16
    d_col = dist.reshape(-1, 1).astype(jnp.float32)                    # (n_nbrs, 1)

    w1 = params["w1"].astype(mxu_dtype)
    b1 = params["b1"].astype(jnp.float32)
    w2 = params["w2"].astype(mxu_dtype)
    b2 = params["b2"].astype(jnp.float32)
    # Fold Dense(n_rbf->3F) bias + cosine envelope into one augmented matmul (f32, tiny).
    w3a = jnp.concatenate([params["w3"], params["b3"]], axis=0).astype(jnp.float32)  # (R+1, 3F)
    coef_aug = jnp.concatenate(
        [params["coef"].reshape(1, n_rbf).astype(jnp.float32),
         jnp.full((1, 1), math.pi / cutoff, jnp.float32)], axis=1)     # (1, R+1)
    phase_aug = jnp.concatenate(
        [jnp.zeros((1, n_rbf), jnp.float32),
         jnp.full((1, 1), 0.5 * math.pi, jnp.float32)], axis=1)        # (1, R+1): sin->cos

    tile = _pick_tile(n_nbrs, tile_n)
    grid = (pl.cdiv(n_nbrs, tile),)

    out = pl.pallas_call(
        partial(_fused_message_kernel, cutoff=float(cutoff), n_rbf=n_rbf),
        out_shape=jax.ShapeDtypeStruct((n_nbrs, out_dim), out_dtype),
        grid_spec=pltpu.PrefetchScalarGridSpec(
            num_scalar_prefetch=0,
            grid=grid,
            in_specs=[
                pl.BlockSpec((tile, feat_dim), lambda i: (i, 0)),         # s_g (bf16)
                pl.BlockSpec((tile, 1), lambda i: (i, 0)),                # dist column
                pl.BlockSpec((feat_dim, feat_dim), lambda i: (0, 0)),     # w1 (resident)
                pl.BlockSpec((1, feat_dim), lambda i: (0, 0)),            # b1
                pl.BlockSpec((feat_dim, out_dim), lambda i: (0, 0)),      # w2
                pl.BlockSpec((1, out_dim), lambda i: (0, 0)),             # b2
                pl.BlockSpec((1, n_rbf + 1), lambda i: (0, 0)),           # coef (augmented)
                pl.BlockSpec((1, n_rbf + 1), lambda i: (0, 0)),           # phase (augmented)
                pl.BlockSpec((n_rbf + 1, out_dim), lambda i: (0, 0)),     # [W3; b3]
            ],
            out_specs=pl.BlockSpec((tile, out_dim), lambda i: (i, 0)),
        ),
        compiler_params=pltpu.CompilerParams(
            dimension_semantics=("parallel",),        # megacore split on v7x (>=2 blocks)
            vmem_limit_bytes=32 * 1024 * 1024,        # safe on v5e/v6e/v7x, >> actual use
        ),
    )(s_g, d_col, w1, b1, w2, b2, coef_aug, phase_aug, w3a)

    # No padded-lane slice pass; only the module-mandated reshape remains.
    return out.reshape(n_nbrs, 3, feat_dim)


# ----------------------------------------------------------------------------
# Pure-JAX reference (mirrors the PyTorch forward; optional bf16-matmul variant
# for a tight structural check of the kernel)
# ----------------------------------------------------------------------------
def invariant_message_ref(s_j, dist, nbrs, params, *, cutoff, mxu_dtype=None):
    feat_dim = s_j.shape[-1]
    if mxu_dtype is not None:
        cast = lambda x: x.astype(mxu_dtype).astype(jnp.float32)
    else:
        cast = lambda x: x

    h = cast(s_j) @ cast(params["w1"]) + params["b1"]
    h = h * jax.nn.sigmoid(h)
    phi_all = cast(h) @ cast(params["w2"]) + params["b2"]
    phi = phi_all[nbrs[:, 1]]

    d = dist.reshape(-1, 1)
    coef = params["coef"].reshape(1, -1)
    denom = jnp.where(d == 0.0, 1.0, d)
    num = jnp.where(d == 0.0, coef, jnp.sin(coef * d))      # PainnRadialBasis sinc limit
    rbf = jnp.where(d >= cutoff, 0.0, num / denom)
    dense = rbf @ params["w3"] + params["b3"]
    env = jnp.where(d >= cutoff, 0.0, 0.5 * (jnp.cos(jnp.pi * d / cutoff) + 1.0))
    out = phi * (dense * env)
    return out.reshape(out.shape[0], 3, feat_dim)


if __name__ == "__main__":
    feat_dim = 32
    n_rbf = 16
    cutoff = 5.0
    n_atoms = 64
    n_nbrs = 512          # split into 2 tiles of 256 -> exercises the parallel grid axis

    key = jax.random.PRNGKey(0)
    ks = jax.random.split(key, 8)

    params = {
        # InvariantDense: Dense(F -> F, swish) ; Dense(F -> 3F)   (weights stored (in, out))
        "w1": jax.random.normal(ks[0], (feat_dim, feat_dim), jnp.float32) * 0.1,
        "b1": jax.random.normal(ks[1], (1, feat_dim), jnp.float32) * 0.1,
        "w2": jax.random.normal(ks[2], (feat_dim, 3 * feat_dim), jnp.float32) * 0.1,
        "b2": jax.random.normal(ks[3], (1, 3 * feat_dim), jnp.float32) * 0.1,
        # DistanceEmbed: Dense(n_rbf -> 3F); RBF coefficients n*pi/cutoff (learnable_k init)
        "w3": jax.random.normal(ks[4], (n_rbf, 3 * feat_dim), jnp.float32) * 0.1,
        "b3": jax.random.normal(ks[5], (1, 3 * feat_dim), jnp.float32) * 0.1,
        "coef": (jnp.arange(1, n_rbf + 1, dtype=jnp.float32) * math.pi / cutoff).reshape(1, n_rbf),
    }

    s_j = jax.random.normal(ks[6], (n_atoms, feat_dim), jnp.float32)
    dist = jax.random.uniform(ks[7], (n_nbrs,), jnp.float32, minval=0.0, maxval=cutoff * 1.2)
    dist = dist.at[0].set(0.0)           # exercise the d == 0 sinc-limit guard
    dist = dist.at[1].set(cutoff + 1.0)  # exercise the cutoff mask
    nbrs = jnp.stack(
        [jnp.arange(n_nbrs, dtype=jnp.int32) % n_atoms,
         (jnp.arange(n_nbrs, dtype=jnp.int32) * 7 + 3) % n_atoms],
        axis=1,
    )

    fwd = jax.jit(partial(invariant_message, cutoff=cutoff))
    out = jax.block_until_ready(fwd(s_j, dist, nbrs, params))
    assert out.shape == (n_nbrs, 3, feat_dim)

    # Tight structural check vs a reference with matched bf16 matmul operands.
    ref_bf16 = invariant_message_ref(s_j, dist, nbrs, params, cutoff=cutoff,
                                     mxu_dtype=jnp.bfloat16)
    assert jnp.allclose(out, ref_bf16, atol=2e-3, rtol=2e-3), \
        f"structural mismatch, max abs err {float(jnp.max(jnp.abs(out - ref_bf16)))}"

    # Loose end-to-end check vs the exact f32 module semantics (bf16 MXU operands are a
    # deliberate bandwidth/precision tradeoff; accumulation stays f32).
    ref_f32 = invariant_message_ref(s_j, dist, nbrs, params, cutoff=cutoff)
    max_err = float(jnp.max(jnp.abs(out - ref_f32)))
    ref_scale = float(jnp.max(jnp.abs(ref_f32)))
    assert max_err <= 0.05 * max(ref_scale, 1.0), \
        f"mismatch vs f32 reference: max abs err {max_err}, ref scale {ref_scale}"

    print("KERNEL_OK")
</pallas_src>

<mosaic_0001>
module attributes {stable_mosaic.version = 11 : i64} {
  func.func @_fused_message_kernel(%arg0: i32, %arg1: memref<256x32xbf16, #tpu.memory_space<vmem>>, %arg2: memref<256x1xf32, #tpu.memory_space<vmem>>, %arg3: memref<32x32xbf16, #tpu.memory_space<vmem>>, %arg4: memref<1x32xf32, #tpu.memory_space<vmem>>, %arg5: memref<32x96xbf16, #tpu.memory_space<vmem>>, %arg6: memref<1x96xf32, #tpu.memory_space<vmem>>, %arg7: memref<1x17xf32, #tpu.memory_space<vmem>>, %arg8: memref<1x17xf32, #tpu.memory_space<vmem>>, %arg9: memref<17x96xf32, #tpu.memory_space<vmem>>, %arg10: memref<256x96xf32, #tpu.memory_space<vmem>>) attributes {dimension_semantics = [#tpu.dimension_semantics<parallel>], iteration_bounds = array<i64: 2>, scalar_prefetch = 0 : i64, scratch_operands = 0 : i64, tpu.core_type = #tpu.core_type<tc>, window_params = [{transform_indices = @transform_0, window_bounds = array<i64: 256, 32>}, {transform_indices = @transform_1, window_bounds = array<i64: 256, 1>}, {pipeline_mode = #tpu.pipeline_mode<synchronous>, transform_indices = @transform_2, window_bounds = array<i64: 32, 32>}, {pipeline_mode = #tpu.pipeline_mode<synchronous>, transform_indices = @transform_3, window_bounds = array<i64: 1, 32>}, {pipeline_mode = #tpu.pipeline_mode<synchronous>, transform_indices = @transform_4, window_bounds = array<i64: 32, 96>}, {pipeline_mode = #tpu.pipeline_mode<synchronous>, transform_indices = @transform_5, window_bounds = array<i64: 1, 96>}, {pipeline_mode = #tpu.pipeline_mode<synchronous>, transform_indices = @transform_6, window_bounds = array<i64: 1, 17>}, {pipeline_mode = #tpu.pipeline_mode<synchronous>, transform_indices = @transform_7, window_bounds = array<i64: 1, 17>}, {pipeline_mode = #tpu.pipeline_mode<synchronous>, transform_indices = @transform_8, window_bounds = array<i64: 17, 96>}, {transform_indices = @transform_9, window_bounds = array<i64: 256, 96>}]} {
    %c0 = arith.constant 0 : index
    %c0_0 = arith.constant 0 : index
    %0 = vector.load %arg1[%c0, %c0_0] : memref<256x32xbf16, #tpu.memory_space<vmem>>, vector<256x32xbf16>
    %c0_1 = arith.constant 0 : index
    %c0_2 = arith.constant 0 : index
    %1 = vector.load %arg3[%c0_1, %c0_2] : memref<32x32xbf16, #tpu.memory_space<vmem>>, vector<32x32xbf16>
    %cst = arith.constant dense<0.000000e+00> : vector<256x32xf32>
    %2 = tpu.matmul %0, %1, %cst {dimension_numbers = #tpu.dot_dimension_numbers<[1], [0], [0], [1], [0, 0, 1, 1], [], []>} : vector<256x32xbf16>, vector<32x32xbf16>, vector<256x32xf32> -> vector<256x32xf32>
    %c0_3 = arith.constant 0 : index
    %c0_4 = arith.constant 0 : index
    %3 = vector.load %arg4[%c0_3, %c0_4] : memref<1x32xf32, #tpu.memory_space<vmem>>, vector<1x32xf32>
    %4 = vector.broadcast %3 : vector<1x32xf32> to vector<256x32xf32>
    %5 = arith.addf %2, %4 : vector<256x32xf32>
    %6 = arith.negf %5 : vector<256x32xf32>
    %7 = math.exp %6 : vector<256x32xf32>
    %cst_5 = arith.constant 1.000000e+00 : f32
    %8 = vector.broadcast %cst_5 : f32 to vector<256x32xf32>
    %9 = arith.addf %8, %7 : vector<256x32xf32>
    %10 = arith.divf %8, %9 : vector<256x32xf32>
    %11 = arith.mulf %5, %10 : vector<256x32xf32>
    %12 = arith.truncf %11 : vector<256x32xf32> to vector<256x32xbf16>
    %c0_6 = arith.constant 0 : index
    %c0_7 = arith.constant 0 : index
    %13 = vector.load %arg5[%c0_6, %c0_7] : memref<32x96xbf16, #tpu.memory_space<vmem>>, vector<32x96xbf16>
    %cst_8 = arith.constant dense<0.000000e+00> : vector<256x96xf32>
    %14 = tpu.matmul %12, %13, %cst_8 {dimension_numbers = #tpu.dot_dimension_numbers<[1], [0], [0], [1], [0, 0, 1, 1], [], []>} : vector<256x32xbf16>, vector<32x96xbf16>, vector<256x96xf32> -> vector<256x96xf32>
    %c0_9 = arith.constant 0 : index
    %c0_10 = arith.constant 0 : index
    %15 = vector.load %arg6[%c0_9, %c0_10] : memref<1x96xf32, #tpu.memory_space<vmem>>, vector<1x96xf32>
    %16 = vector.broadcast %15 : vector<1x96xf32> to vector<256x96xf32>
    %17 = arith.addf %14, %16 : vector<256x96xf32>
    %c0_11 = arith.constant 0 : index
    %c0_12 = arith.constant 0 : index
    %18 = vector.load %arg2[%c0_11, %c0_12] : memref<256x1xf32, #tpu.memory_space<vmem>>, vector<256x1xf32>
    %c0_13 = arith.constant 0 : index
    %c0_14 = arith.constant 0 : index
    %19 = vector.load %arg7[%c0_13, %c0_14] : memref<1x17xf32, #tpu.memory_space<vmem>>, vector<1x17xf32>
    %20 = vector.broadcast %18 : vector<256x1xf32> to vector<256x17xf32>
    %21 = vector.broadcast %19 : vector<1x17xf32> to vector<256x17xf32>
    %22 = arith.mulf %20, %21 : vector<256x17xf32>
    %c0_15 = arith.constant 0 : index
    %c0_16 = arith.constant 0 : index
    %23 = vector.load %arg8[%c0_15, %c0_16] : memref<1x17xf32, #tpu.memory_space<vmem>>, vector<1x17xf32>
    %24 = vector.broadcast %23 : vector<1x17xf32> to vector<256x17xf32>
    %25 = arith.addf %22, %24 : vector<256x17xf32>
    %26 = math.sin %25 : vector<256x17xf32>
    %cst_17 = arith.constant 5.000000e+00 : f32
    %27 = vector.broadcast %cst_17 : f32 to vector<256x1xf32>
    %28 = arith.cmpf olt, %18, %27 : vector<256x1xf32>
    %29 = vector.extract_strided_slice %26 {offsets = [0, 16], sizes = [256, 1], strides = [1, 1]} : vector<256x17xf32> to vector<256x1xf32>
    %cst_18 = arith.constant 1.000000e+00 : f32
    %30 = vector.broadcast %cst_18 : f32 to vector<256x1xf32>
    %31 = arith.addf %29, %30 : vector<256x1xf32>
    %cst_19 = arith.constant 5.000000e-01 : f32
    %32 = vector.broadcast %cst_19 : f32 to vector<256x1xf32>
    %33 = arith.mulf %32, %31 : vector<256x1xf32>
    %cst_20 = arith.constant 0.000000e+00 : f32
    %34 = vector.broadcast %cst_20 : f32 to vector<256x1xf32>
    %35 = arith.select %28, %33, %34 : vector<256x1xi1>, vector<256x1xf32>
    %cst_21 = arith.constant 0.000000e+00 : f32
    %36 = vector.broadcast %cst_21 : f32 to vector<256x1xf32>
    %37 = arith.cmpf oeq, %18, %36 : vector<256x1xf32>
    %38 = vector.extract_strided_slice %19 {offsets = [0, 0], sizes = [1, 16], strides = [1, 1]} : vector<1x17xf32> to vector<1x16xf32>
    %39 = vector.extract_strided_slice %26 {offsets = [0, 0], sizes = [256, 16], strides = [1, 1]} : vector<256x17xf32> to vector<256x16xf32>
    %40 = vector.shape_cast %37 : vector<256x1xi1> to vector<256x1xi1>
    %41 = vector.broadcast %40 : vector<256x1xi1> to vector<256x16xi1>
    %42 = vector.shape_cast %38 : vector<1x16xf32> to vector<1x16xf32>
    %43 = vector.broadcast %42 : vector<1x16xf32> to vector<256x16xf32>
    %44 = arith.select %41, %43, %39 : vector<256x16xi1>, vector<256x16xf32>
    %cst_22 = arith.constant 0.000000e+00 : f32
    %45 = vector.broadcast %cst_22 : f32 to vector<256x1xf32>
    %46 = arith.cmpf oeq, %18, %45 : vector<256x1xf32>
    %cst_23 = arith.constant 1.000000e+00 : f32
    %47 = vector.broadcast %cst_23 : f32 to vector<256x1xf32>
    %48 = arith.select %46, %47, %18 : vector<256x1xi1>, vector<256x1xf32>
    %49 = arith.divf %35, %48 : vector<256x1xf32>
    %50 = vector.broadcast %49 : vector<256x1xf32> to vector<256x16xf32>
    %51 = arith.mulf %44, %50 : vector<256x16xf32>
    %52 = tpu.concatenate %51, %35 in 1 : vector<256x16xf32>, vector<256x1xf32> -> vector<256x17xf32>
    %c0_24 = arith.constant 0 : index
    %c0_25 = arith.constant 0 : index
    %53 = vector.load %arg9[%c0_24, %c0_25] : memref<17x96xf32, #tpu.memory_space<vmem>>, vector<17x96xf32>
    %cst_26 = arith.constant dense<0.000000e+00> : vector<256x96xf32>
    %54 = tpu.matmul %52, %53, %cst_26 {dimension_numbers = #tpu.dot_dimension_numbers<[1], [0], [0], [1], [0, 0, 1, 1], [], []>} : vector<256x17xf32>, vector<17x96xf32>, vector<256x96xf32> -> vector<256x96xf32>
    %55 = arith.mulf %17, %54 : vector<256x96xf32>
    %c0_27 = arith.constant 0 : index
    %c0_28 = arith.constant 0 : index
    %56 = vector.load %arg10[%c0_27, %c0_28] : memref<256x96xf32, #tpu.memory_space<vmem>>, vector<256x96xf32>
    tpu.vector_store %arg10[%c0_27, %c0_28], %55 {strides = array<i32>} : memref<256x96xf32, #tpu.memory_space<vmem>>, vector<256x96xf32>,
    return
  }
  func.func @transform_0(%arg0: i32) -> (i32, i32) {
    %c0_i32 = arith.constant 0 : i32
    %c0_i32_0 = arith.constant 0 : i32
    return %arg0, %c0_i32 : i32, i32
  }
  func.func @transform_1(%arg0: i32) -> (i32, i32) {
    %c0_i32 = arith.constant 0 : i32
    %c0_i32_0 = arith.constant 0 : i32
    return %arg0, %c0_i32 : i32, i32
  }
  func.func @transform_2(%arg0: i32) -> (i32, i32) {
    %c0_i32 = arith.constant 0 : i32
    %c0_i32_0 = arith.constant 0 : i32
    %c0_i32_1 = arith.constant 0 : i32
    return %c0_i32, %c0_i32_0 : i32, i32
  }
  func.func @transform_3(%arg0: i32) -> (i32, i32) {
    %c0_i32 = arith.constant 0 : i32
    %c0_i32_0 = arith.constant 0 : i32
    %c0_i32_1 = arith.constant 0 : i32
    return %c0_i32, %c0_i32_0 : i32, i32
  }
  func.func @transform_4(%arg0: i32) -> (i32, i32) {
    %c0_i32 = arith.constant 0 : i32
    %c0_i32_0 = arith.constant 0 : i32
    %c0_i32_1 = arith.constant 0 : i32
    return %c0_i32, %c0_i32_0 : i32, i32
  }
  func.func @transform_5(%arg0: i32) -> (i32, i32) {
    %c0_i32 = arith.constant 0 : i32
    %c0_i32_0 = arith.constant 0 : i32
    %c0_i32_1 = arith.constant 0 : i32
    return %c0_i32, %c0_i32_0 : i32, i32
  }
  func.func @transform_6(%arg0: i32) -> (i32, i32) {
    %c0_i32 = arith.constant 0 : i32
    %c0_i32_0 = arith.constant 0 : i32
    %c0_i32_1 = arith.constant 0 : i32
    return %c0_i32, %c0_i32_0 : i32, i32
  }
  func.func @transform_7(%arg0: i32) -> (i32, i32) {
    %c0_i32 = arith.constant 0 : i32
    %c0_i32_0 = arith.constant 0 : i32
    %c0_i32_1 = arith.constant 0 : i32
    return %c0_i32, %c0_i32_0 : i32, i32
  }
  func.func @transform_8(%arg0: i32) -> (i32, i32) {
    %c0_i32 = arith.constant 0 : i32
    %c0_i32_0 = arith.constant 0 : i32
    %c0_i32_1 = arith.constant 0 : i32
    return %c0_i32, %c0_i32_0 : i32, i32
  }
  func.func @transform_9(%arg0: i32) -> (i32, i32) {
    %c0_i32 = arith.constant 0 : i32
    %c0_i32_0 = arith.constant 0 : i32
    return %arg0, %c0_i32 : i32, i32
  }
}

</mosaic_0001>

<llo_original>
// kernel: invariant_message.1
$region0: #{invariant_message.1}
  #allocation0 [shape = 'u32[]', space=smem, size = 0x4, offset = 0x4, fixed_abs, tag = 'smem constant byte address 0x4 - core index']
  #allocation1 [shape = 'u32[144,128]{1,0:T(1,128)}', space=vmem, size = 0x12000, scoped, tag = 'internal scratch']
  %s0 = inlined_call_operand.vmem [shape: bf16[512,32], index: 0, kind: input, shape index: {}]
  %s1 = inlined_call_operand.vmem [shape: f32[512,1], index: 1, kind: input, shape index: {}]
  %s2 = inlined_call_operand.vmem [shape: bf16[32,32], index: 2, kind: input, shape index: {}]
  %s3 = inlined_call_operand.vmem [shape: f32[1,32], index: 3, kind: input, shape index: {}]
  %s4 = inlined_call_operand.vmem [shape: bf16[32,96], index: 4, kind: input, shape index: {}]
  %s5 = inlined_call_operand.vmem [shape: f32[1,96], index: 5, kind: input, shape index: {}]
  %s6 = inlined_call_operand.vmem [shape: f32[1,17], index: 6, kind: input, shape index: {}]
  %s7 = inlined_call_operand.vmem [shape: f32[1,17], index: 7, kind: input, shape index: {}]
  %s8 = inlined_call_operand.vmem [shape: f32[17,96], index: 8, kind: input, shape index: {}]
  %s9 = inlined_call_operand.vmem [shape: f32[512,96], index: 9, kind: output, shape index: {}]
  %s10 = sld [smem:[#allocation0]]
  $region69: #{invariant_message.1} parent=0
    _
  %s12 = ssub.s32 1, %s10
  %s13 = scalar_select 0, %s12, %s10
  loop: start=0, step=1, limit=4
  $region2: #{invariant_message.1} parent=0 // loop_pre_header
    _
  $region3: #{invariant_message.1} parent=0 // loop_header
    %s15 = sphi 0, %s19
    %p16 = scmp.ge.s32.totalorder %s15, 4
    %s25 = sphi 0, %s27
    %s28 = sphi 0, %s25
    %s29 = sphi 0, %s28
    %s45 = sphi 0, %s29
    %s51 = sphi 0, %s53
    %s54 = sphi 0, %s51
    %s55 = sphi 0, %s54
    %s71 = sphi 0, %s55
    %s75 = sphi 0, %s75
    %s77 = sphi 0, %s75
    %s78 = sphi 0, %s77
    %s92 = sphi 0, %s78
    %s96 = sphi 0, %s96
    %s98 = sphi 0, %s96
    %s99 = sphi 0, %s98
    %s113 = sphi 0, %s99
    %s117 = sphi 0, %s117
    %s119 = sphi 0, %s117
    %s120 = sphi 0, %s119
    %s134 = sphi 0, %s120
    %s138 = sphi 0, %s138
    %s140 = sphi 0, %s138
    %s141 = sphi 0, %s140
    %s155 = sphi 0, %s141
    %s159 = sphi 0, %s159
    %s161 = sphi 0, %s159
    %s162 = sphi 0, %s161
    %s176 = sphi 0, %s162
    %s180 = sphi 0, %s180
    %s182 = sphi 0, %s180
    %s183 = sphi 0, %s182
    %s197 = sphi 0, %s183
    %s201 = sphi 0, %s201
    %s203 = sphi 0, %s201
    %s204 = sphi 0, %s203
    %s218 = sphi 0, %s204
    %s224 = sphi 0, %s226
    %s227 = sphi 0, %s224
    %s228 = sphi 0, %s227
    %s244 = sphi 0, %s228
  $region4: #{invariant_message.1} parent=0 // loop_header_branch
    %18 = sbr.rel (%p16) target = $region8
  $region5: #{invariant_message.1} parent=0 // loop_body
    %s20 = ssub.s32 %s15, 1
    %s21 = ssub.s32 %s15, 2
    %s22 = sadd.s32 %s15, 1
    %s23 = ssub.s32 %s15, %s22
    %p24 = scmp.eq.s32.totalorder %s23, 0
    %s26 = sadd.s32 %s25, 1
    %s27 = scalar_select %p24, %s25, %s26
    %p30 = pneg %p24
    %p31 = scmp.eq.s32.totalorder %s15, 1
    %p32 = por %p30, %p31
    %p33 = scmp.ne.s32.totalorder %s25, %s28
    %p34 = scmp.eq.s32.totalorder %s15, 0
    %p35 = por %p33, %p34
    %p36 = scmp.ne.s32.totalorder %s25, %s28
    %p37 = scmp.eq.s32.totalorder %s20, 1
    %p38 = por %p36, %p37
    %p39 = scmp.ne.s32.totalorder %s28, %s29
    %p40 = scmp.eq.s32.totalorder %s20, 0
    %p41 = por %p39, %p40
    %p42 = scmp.ne.s32.totalorder %s28, %s29
    %p43 = scmp.eq.s32.totalorder %s21, 1
    %p44 = por %p42, %p43
    %p46 = scmp.ne.s32.totalorder %s29, %s45
    %p47 = scmp.eq.s32.totalorder %s21, 0
    %p48 = por %p46, %p47
    %s49 = ssub.s32 %s15, %s22
    %p50 = scmp.eq.s32.totalorder %s49, 0
    %s52 = sadd.s32 %s51, 1
    %s53 = scalar_select %p50, %s51, %s52
    %p56 = pneg %p50
    %p57 = scmp.eq.s32.totalorder %s15, 1
    %p58 = por %p56, %p57
    %p59 = scmp.ne.s32.totalorder %s51, %s54
    %p60 = scmp.eq.s32.totalorder %s15, 0
    %p61 = por %p59, %p60
    %p62 = scmp.ne.s32.totalorder %s51, %s54
    %p63 = scmp.eq.s32.totalorder %s20, 1
    %p64 = por %p62, %p63
    %p65 = scmp.ne.s32.totalorder %s54, %s55
    %p66 = scmp.eq.s32.totalorder %s20, 0
    %p67 = por %p65, %p66
    %p68 = scmp.ne.s32.totalorder %s54, %s55
    %p69 = scmp.eq.s32.totalorder %s21, 1
    %p70 = por %p68, %p69
    %p72 = scmp.ne.s32.totalorder %s55, %s71
    %p73 = scmp.eq.s32.totalorder %s21, 0
    %p74 = por %p72, %p73
    %s76 = sadd.s32 %s75, 1
    %p79 = scmp.eq.s32.totalorder %s15, 1
    %p80 = scmp.ne.s32.totalorder %s75, %s77
    %p81 = scmp.eq.s32.totalorder %s15, 0
    %p82 = por %p80, %p81
    %p83 = scmp.ne.s32.totalorder %s75, %s77
    %p84 = scmp.eq.s32.totalorder %s20, 1
    %p85 = por %p83, %p84
    %p86 = scmp.ne.s32.totalorder %s77, %s78
    %p87 = scmp.eq.s32.totalorder %s20, 0
    %p88 = por %p86, %p87
    %p89 = scmp.ne.s32.totalorder %s77, %s78
    %p90 = scmp.eq.s32.totalorder %s21, 1
    %p91 = por %p89, %p90
    %p93 = scmp.ne.s32.totalorder %s78, %s92
    %p94 = scmp.eq.s32.totalorder %s21, 0
    %p95 = por %p93, %p94
    %s97 = sadd.s32 %s96, 1
    %p100 = scmp.eq.s32.totalorder %s15, 1
    %p101 = scmp.ne.s32.totalorder %s96, %s98
    %p102 = scmp.eq.s32.totalorder %s15, 0
    %p103 = por %p101, %p102
    %p104 = scmp.ne.s32.totalorder %s96, %s98
    %p105 = scmp.eq.s32.totalorder %s20, 1
    %p106 = por %p104, %p105
    %p107 = scmp.ne.s32.totalorder %s98, %s99
    %p108 = scmp.eq.s32.totalorder %s20, 0
    %p109 = por %p107, %p108
    %p110 = scmp.ne.s32.totalorder %s98, %s99
    %p111 = scmp.eq.s32.totalorder %s21, 1
    %p112 = por %p110, %p111
    %p114 = scmp.ne.s32.totalorder %s99, %s113
    %p115 = scmp.eq.s32.totalorder %s21, 0
    %p116 = por %p114, %p115
    %s118 = sadd.s32 %s117, 1
    %p121 = scmp.eq.s32.totalorder %s15, 1
    %p122 = scmp.ne.s32.totalorder %s117, %s119
    %p123 = scmp.eq.s32.totalorder %s15, 0
    %p124 = por %p122, %p123
    %p125 = scmp.ne.s32.totalorder %s117, %s119
    %p126 = scmp.eq.s32.totalorder %s20, 1
    %p127 = por %p125, %p126
    %p128 = scmp.ne.s32.totalorder %s119, %s120
    %p129 = scmp.eq.s32.totalorder %s20, 0
    %p130 = por %p128, %p129
    %p131 = scmp.ne.s32.totalorder %s119, %s120
    %p132 = scmp.eq.s32.totalorder %s21, 1
    %p133 = por %p131, %p132
    %p135 = scmp.ne.s32.totalorder %s120, %s134
    %p136 = scmp.eq.s32.totalorder %s21, 0
    %p137 = por %p135, %p136
    %s139 = sadd.s32 %s138, 1
    %p142 = scmp.eq.s32.totalorder %s15, 1
    %p143 = scmp.ne.s32.totalorder %s138, %s140
    %p144 = scmp.eq.s32.totalorder %s15, 0
    %p145 = por %p143, %p144
    %p146 = scmp.ne.s32.totalorder %s138, %s140
    %p147 = scmp.eq.s32.totalorder %s20, 1
    %p148 = por %p146, %p147
    %p149 = scmp.ne.s32.totalorder %s140, %s141
    %p150 = scmp.eq.s32.totalorder %s20, 0
    %p151 = por %p149, %p150
    %p152 = scmp.ne.s32.totalorder %s140, %s141
    %p153 = scmp.eq.s32.totalorder %s21, 1
    %p154 = por %p152, %p153
    %p156 = scmp.ne.s32.totalorder %s141, %s155
    %p157 = scmp.eq.s32.totalorder %s21, 0
    %p158 = por %p156, %p157
    %s160 = sadd.s32 %s159, 1
    %p163 = scmp.eq.s32.totalorder %s15, 1
    %p164 = scmp.ne.s32.totalorder %s159, %s161
    %p165 = scmp.eq.s32.totalorder %s15, 0
    %p166 = por %p164, %p165
    %p167 = scmp.ne.s32.totalorder %s159, %s161
    %p168 = scmp.eq.s32.totalorder %s20, 1
    %p169 = por %p167, %p168
    %p170 = scmp.ne.s32.totalorder %s161, %s162
    %p171 = scmp.eq.s32.totalorder %s20, 0
    %p172 = por %p170, %p171
    %p173 = scmp.ne.s32.totalorder %s161, %s162
    %p174 = scmp.eq.s32.totalorder %s21, 1
    %p175 = por %p173, %p174
    %p177 = scmp.ne.s32.totalorder %s162, %s176
    %p178 = scmp.eq.s32.totalorder %s21, 0
    %p179 = por %p177, %p178
    %s181 = sadd.s32 %s180, 1
    %p184 = scmp.eq.s32.totalorder %s15, 1
    %p185 = scmp.ne.s32.totalorder %s180, %s182
    %p186 = scmp.eq.s32.totalorder %s15, 0
    %p187 = por %p185, %p186
    %p188 = scmp.ne.s32.totalorder %s180, %s182
    %p189 = scmp.eq.s32.totalorder %s20, 1
    %p190 = por %p188, %p189
    %p191 = scmp.ne.s32.totalorder %s182, %s183
    %p192 = scmp.eq.s32.totalorder %s20, 0
    %p193 = por %p191, %p192
    %p194 = scmp.ne.s32.totalorder %s182, %s183
    %p195 = scmp.eq.s32.totalorder %s21, 1
    %p196 = por %p194, %p195
    %p198 = scmp.ne.s32.totalorder %s183, %s197
    %p199 = scmp.eq.s32.totalorder %s21, 0
    %p200 = por %p198, %p199
    %s202 = sadd.s32 %s201, 1
    %p205 = scmp.eq.s32.totalorder %s15, 1
    %p206 = scmp.ne.s32.totalorder %s201, %s203
    %p207 = scmp.eq.s32.totalorder %s15, 0
    %p208 = por %p206, %p207
    %p209 = scmp.ne.s32.totalorder %s201, %s203
    %p210 = scmp.eq.s32.totalorder %s20, 1
    %p211 = por %p209, %p210
    %p212 = scmp.ne.s32.totalorder %s203, %s204
    %p213 = scmp.eq.s32.totalorder %s20, 0
    %p214 = por %p212, %p213
    %p215 = scmp.ne.s32.totalorder %s203, %s204
    %p216 = scmp.eq.s32.totalorder %s21, 1
    %p217 = por %p215, %p216
    %p219 = scmp.ne.s32.totalorder %s204, %s218
    %p220 = scmp.eq.s32.totalorder %s21, 0
    %p221 = por %p219, %p220
    %s222 = ssub.s32 %s15, %s22
    %p223 = scmp.eq.s32.totalorder %s222, 0
    %s225 = sadd.s32 %s224, 1
    %s226 = scalar_select %p223, %s224, %s225
    %p229 = pneg %p223
    %p230 = scmp.eq.s32.totalorder %s15, 1
    %p231 = por %p229, %p230
    %p232 = scmp.ne.s32.totalorder %s224, %s227
    %p233 = scmp.eq.s32.totalorder %s15, 0
    %p234 = por %p232, %p233
    %p235 = scmp.ne.s32.totalorder %s224, %s227
    %p236 = scmp.eq.s32.totalorder %s20, 1
    %p237 = por %p235, %p236
    %p238 = scmp.ne.s32.totalorder %s227, %s228
    %p239 = scmp.eq.s32.totalorder %s20, 0
    %p240 = por %p238, %p239
    %p241 = scmp.ne.s32.totalorder %s227, %s228
    %p242 = scmp.eq.s32.totalorder %s21, 1
    %p243 = por %p241, %p242
    %p245 = scmp.ne.s32.totalorder %s228, %s244
    %p246 = scmp.eq.s32.totalorder %s21, 0
    %p247 = por %p245, %p246
    %p248 = scmp.le.s32.totalorder 1, %s15
    %p249 = scmp.lt.s32.totalorder %s15, 3
    %p250 = pnand %p248, %p249
    %p251 = pneg %p250
    // Predicated region
    $region9: #{invariant_message.1} parent=5 // pred_check
      _
    $region10: #{invariant_message.1} parent=5 // pred_check_branch
      %253 = sbr.rel (%p250) target = $region12
    $region11: #{invariant_message.1} parent=5 // pred_region
      %s254 = ssub.s32 %s15, 1
      // Predicated region
      $region13: #{invariant_message.1} parent=11 // pred_check
        %p255 = pneg %p88
      $region14: #{invariant_message.1} parent=11 // pred_check_branch
        %257 = sbr.rel (%p255) target = $region16
      $region15: #{invariant_message.1} parent=11 // pred_region
        _
      $region16: #{invariant_message.1} parent=11 // pred_fallthru
        _
      // Predicated region
      $region17: #{invariant_message.1} parent=11 // pred_check
        %p258 = pneg %p109
      $region18: #{invariant_message.1} parent=11 // pred_check_branch
        %260 = sbr.rel (%p258) target = $region20
      $region19: #{invariant_message.1} parent=11 // pred_region
        _
      $region20: #{invariant_message.1} parent=11 // pred_fallthru
        _
      // Predicated region
      $region21: #{invariant_message.1} parent=11 // pred_check
        %p261 = pneg %p130
      $region22: #{invariant_message.1} parent=11 // pred_check_branch
        %263 = sbr.rel (%p261) target = $region24
      $region23: #{invariant_message.1} parent=11 // pred_region
        _
      $region24: #{invariant_message.1} parent=11 // pred_fallthru
        _
      // Predicated region
      $region25: #{invariant_message.1} parent=11 // pred_check
        %p264 = pneg %p151
      $region26: #{invariant_message.1} parent=11 // pred_check_branch
        %266 = sbr.rel (%p264) target = $region28
      $region27: #{invariant_message.1} parent=11 // pred_region
        _
      $region28: #{invariant_message.1} parent=11 // pred_fallthru
        _
      // Predicated region
      $region29: #{invariant_message.1} parent=11 // pred_check
        %p267 = pneg %p172
      $region30: #{invariant_message.1} parent=11 // pred_check_branch
        %269 = sbr.rel (%p267) target = $region32
      $region31: #{invariant_message.1} parent=11 // pred_region
        _
      $region32: #{invariant_message.1} parent=11 // pred_fallthru
        _
      // Predicated region
      $region33: #{invariant_message.1} parent=11 // pred_check
        %p270 = pneg %p193
      $region34: #{invariant_message.1} parent=11 // pred_check_branch
        %272 = sbr.rel (%p270) target = $region36
      $region35: #{invariant_message.1} parent=11 // pred_region
        _
      $region36: #{invariant_message.1} parent=11 // pred_fallthru
        _
      // Predicated region
      $region37: #{invariant_message.1} parent=11 // pred_check
        %p273 = pneg %p214
      $region38: #{invariant_message.1} parent=11 // pred_check_branch
        %275 = sbr.rel (%p273) target = $region40
      $region39: #{invariant_message.1} parent=11 // pred_region
        _
      $region40: #{invariant_message.1} parent=11 // pred_fallthru
        _
    $region12: #{invariant_message.1} parent=5 // pred_fallthru
      _
    %p276 = scmp.lt.s32.totalorder %s15, 2
    // Predicated region
    $region41: #{invariant_message.1} parent=5 // pred_check
      %p277 = pneg %p276
    $region42: #{invariant_message.1} parent=5 // pred_check_branch
      %279 = sbr.rel (%p277) target = $region44
    $region43: #{invariant_message.1} parent=5 // pred_region
      // Predicated region
      $region45: #{invariant_message.1} parent=43 // pred_check
        %p280 = pneg %p35
      $region46: #{invariant_message.1} parent=43 // pred_check_branch
        %282 = sbr.rel (%p280) target = $region48
      $region47: #{invariant_message.1} parent=43 // pred_region
        %s283 = smul.u32 32, %s15
        %p284 = scmp.lt.s32.totalorder %s283, 63
        %s285 = scalar_select %p284, %s283, 63
        %s286 = smul.addr %s285, 4
        %s287 = scalar_lea.vmem %s0, %s286
        %s288 = smul.u32 32, %s15
      $region48: #{invariant_message.1} parent=43 // pred_fallthru
        _
      // Predicated region
      $region49: #{invariant_message.1} parent=43 // pred_check
        %p289 = pneg %p61
      $region50: #{invariant_message.1} parent=43 // pred_check_branch
        %291 = sbr.rel (%p289) target = $region52
      $region51: #{invariant_message.1} parent=43 // pred_region
        %s292 = smul.u32 32, %s15
        %p293 = scmp.lt.s32.totalorder %s292, 63
        %s294 = scalar_select %p293, %s292, 63
        %s295 = smul.addr %s294, 8
        %s296 = scalar_lea.vmem %s1, %s295
        %s297 = smul.u32 32, %s15
      $region52: #{invariant_message.1} parent=43 // pred_fallthru
        _
    $region44: #{invariant_message.1} parent=5 // pred_fallthru
      _
    %p298 = scmp.le.s32.totalorder 1, %s15
    %p299 = scmp.lt.s32.totalorder %s15, 3
    %p300 = pnand %p298, %p299
    %p301 = pneg %p300
    // Predicated region
    $region53: #{invariant_message.1} parent=5 // pred_check
      _
    $region54: #{invariant_message.1} parent=5 // pred_check_branch
      %303 = sbr.rel (%p300) target = $region56
    $region55: #{invariant_message.1} parent=5 // pred_region
      %s304 = ssub.s32 %s15, 1
      %s305 = smul.u32 32, %s20
      %p306 = scmp.lt.s32.totalorder %s305, 63
      %s307 = scalar_select %p306, %s305, 63
      %s308 = smul.addr %s307, 4
      %s309 = scalar_lea.vmem %s0, %s308
      %p310 = pneg %p41
      %p311 = pneg %p38
      %s312 = smul.u32 32, %s20
      %p313 = scmp.lt.s32.totalorder %s312, 63
      %s314 = scalar_select %p313, %s312, 63
      %s315 = smul.addr %s314, 8
      %s316 = scalar_lea.vmem %s1, %s315
      %p317 = pneg %p67
      %p318 = pneg %p64
      %p319 = pneg %p88
      %p320 = pneg %p85
      %p321 = pneg %p109
      %p322 = pneg %p106
      %p323 = pneg %p130
      %p324 = pneg %p127
      %p325 = pneg %p151
      %p326 = pneg %p148
      %p327 = pneg %p172
      %p328 = pneg %p169
      %p329 = pneg %p193
      %p330 = pneg %p190
      %p331 = pneg %p214
      %p332 = pneg %p211
      %p333 = pneg %p240
      %p334 = pneg %p237
      %s335 = smul.u32 32, %s20
      %p336 = scmp.lt.s32.totalorder %s335, 63
      %s337 = scalar_select %p336, %s335, 63
      %s338 = smul.addr %s337, 8
      %s339 = scalar_lea.vmem %s9, %s338
      %s340 = smul.u32 32, %s20
      %p341 = scmp.lt.s32.totalorder %s340, 63
      %s342 = scalar_select %p341, %s340, 63
      %s343 = smul.addr %s342, 4
      %s344 = scalar_lea.vmem %s0, %s343
      %s345 = smul.u32 32, %s20
      %s346 = smul.u32 32, %s20
      %p347 = scmp.lt.s32.totalorder %s346, 63
      %s348 = scalar_select %p347, %s346, 63
      %s349 = smul.addr %s348, 8
      %s350 = scalar_lea.vmem %s1, %s349
      %s351 = smul.u32 32, %s20
      %s352 = smul.u32 32, %s20
      %p353 = scmp.lt.s32.totalorder %s352, 63
      %s354 = scalar_select %p353, %s352, 63
      %s355 = smul.addr %s354, 8
      %s356 = scalar_lea.vmem %s9, %s355
      %s357 = smul.u32 32, %s20
      %v359 = vld [vmem:[%s344] sm:$0xf]
      %v360 = vld [vmem:[%s344 + $0x4] sm:$0xf]
      %v361 = vld [vmem:[%s344 + $0x8] sm:$0xf]
      %v362 = vld [vmem:[%s344 + $0xc] sm:$0xf]
      %v363 = vld [vmem:[%s344 + $0x10] sm:$0xf]
      %v364 = vld [vmem:[%s344 + $0x14] sm:$0xf]
      %v365 = vld [vmem:[%s344 + $0x18] sm:$0xf]
      %v366 = vld [vmem:[%s344 + $0x1c] sm:$0xf]
      %v367 = vld [vmem:[%s344 + $0x20] sm:$0xf]
      %v368 = vld [vmem:[%s344 + $0x24] sm:$0xf]
      %v369 = vld [vmem:[%s344 + $0x28] sm:$0xf]
      %v370 = vld [vmem:[%s344 + $0x2c] sm:$0xf]
      %v371 = vld [vmem:[%s344 + $0x30] sm:$0xf]
      %v372 = vld [vmem:[%s344 + $0x34] sm:$0xf]
      %v373 = vld [vmem:[%s344 + $0x38] sm:$0xf]
      %v374 = vld [vmem:[%s344 + $0x3c] sm:$0xf]
      %v375 = vld [vmem:[%s344 + $0x40] sm:$0xf]
      %v376 = vld [vmem:[%s344 + $0x44] sm:$0xf]
      %v377 = vld [vmem:[%s344 + $0x48] sm:$0xf]
      %v378 = vld [vmem:[%s344 + $0x4c] sm:$0xf]
      %v379 = vld [vmem:[%s344 + $0x50] sm:$0xf]
      %v380 = vld [vmem:[%s344 + $0x54] sm:$0xf]
      %v381 = vld [vmem:[%s344 + $0x58] sm:$0xf]
      %v382 = vld [vmem:[%s344 + $0x5c] sm:$0xf]
      %v383 = vld [vmem:[%s344 + $0x60] sm:$0xf]
      %v384 = vld [vmem:[%s344 + $0x64] sm:$0xf]
      %v385 = vld [vmem:[%s344 + $0x68] sm:$0xf]
      %v386 = vld [vmem:[%s344 + $0x6c] sm:$0xf]
      %v387 = vld [vmem:[%s344 + $0x70] sm:$0xf]
      %v388 = vld [vmem:[%s344 + $0x74] sm:$0xf]
      %v389 = vld [vmem:[%s344 + $0x78] sm:$0xf]
      %v390 = vld [vmem:[%s344 + $0x7c] sm:$0xf]
      %v391 = vld [vmem:[%s2] sm:$0xf]
      %v392 = vld [vmem:[%s2 + $0x4] sm:$0xf]
      %v393 = vld [vmem:[%s2 + $0x8] sm:$0xf]
      %v394 = vld [vmem:[%s2 + $0xc] sm:$0xf]
      %v395 = vld [vmem:[%s3] sm:$0x1]
      %v397 = vlaneseq
      %v398 = vshrl.u32 %v397, 7
      %v399 = vsub.s32 0, %v398
      %v400 = vrot.slane %v395, %v399
      %v434 = vunpack.c.l.b16 %v359
      %v435 = vunpack.c.l.b16 %v360
      %v436 = vunpack.c.l.b16 %v361
      %v437 = vunpack.c.l.b16 %v362
      %v438 = vunpack.c.l.b16 %v363
      %v439 = vunpack.c.l.b16 %v364
      %v440 = vunpack.c.l.b16 %v365
      %v441 = vunpack.c.l.b16 %v366
      %v442 = vunpack.c.l.b16 %v367
      %v443 = vunpack.c.l.b16 %v368
      %v444 = vunpack.c.l.b16 %v369
      %v445 = vunpack.c.l.b16 %v370
      %v446 = vunpack.c.l.b16 %v371
      %v447 = vunpack.c.l.b16 %v372
      %v448 = vunpack.c.l.b16 %v373
      %v449 = vunpack.c.l.b16 %v374
      %v450 = vunpack.c.l.b16 %v375
      %v451 = vunpack.c.l.b16 %v376
      %v452 = vunpack.c.l.b16 %v377
      %v453 = vunpack.c.l.b16 %v378
      %v454 = vunpack.c.l.b16 %v379
      %v455 = vunpack.c.l.b16 %v380
      %v456 = vunpack.c.l.b16 %v381
      %v457 = vunpack.c.l.b16 %v382
      %v458 = vunpack.c.l.b16 %v383
      %v459 = vunpack.c.l.b16 %v384
      %v460 = vunpack.c.l.b16 %v385
      %v461 = vunpack.c.l.b16 %v386
      %v462 = vunpack.c.l.b16 %v387
      %v463 = vunpack.c.l.b16 %v388
      %v464 = vunpack.c.l.b16 %v389
      %v465 = vunpack.c.l.b16 %v390
      %v466 = vpack.c.b16 %v435, %v434
      %v467 = vpack.c.b16 %v437, %v436
      %v468 = vpack.c.b16 %v439, %v438
      %v469 = vpack.c.b16 %v441, %v440
      %v470 = vpack.c.b16 %v443, %v442
      %v471 = vpack.c.b16 %v445, %v444
      %v472 = vpack.c.b16 %v447, %v446
      %v473 = vpack.c.b16 %v449, %v448
      %v474 = vpack.c.b16 %v451, %v450
      %v475 = vpack.c.b16 %v453, %v452
      %v476 = vpack.c.b16 %v455, %v454
      %v477 = vpack.c.b16 %v457, %v456
      %v478 = vpack.c.b16 %v459, %v458
      %v479 = vpack.c.b16 %v461, %v460
      %v480 = vpack.c.b16 %v463, %v462
      %v481 = vpack.c.b16 %v465, %v464
      %v486 = vunpack.c.l.b16 %v391
      %v487 = vunpack.c.l.b16 %v392
      %v488 = vunpack.c.l.b16 %v393
      %v489 = vunpack.c.l.b16 %v394
      %v490 = vpack.c.b16 %v487, %v486
      %v491 = vpack.c.b16 %v489, %v488
      %vm494 = vcmask 261120
      %v496 = vsel %vm494, %v466, 0
      %v499 = vsel %vm494, %v467, 0
      %v502 = vsel %vm494, %v468, 0
      %v505 = vsel %vm494, %v469, 0
      %v508 = vsel %vm494, %v470, 0
      %v511 = vsel %vm494, %v471, 0
      %v514 = vsel %vm494, %v472, 0
      %v517 = vsel %vm494, %v473, 0
      %v520 = vsel %vm494, %v474, 0
      %v523 = vsel %vm494, %v475, 0
      %v526 = vsel %vm494, %v476, 0
      %v529 = vsel %vm494, %v477, 0
      %v532 = vsel %vm494, %v478, 0
      %v535 = vsel %vm494, %v479, 0
      %v538 = vsel %vm494, %v480, 0
      %v541 = vsel %vm494, %v481, 0
      %543 = vmatprep.subr.bf16.mxu0 0
      %544 = vmatpush1.bf16.msra.mxu0 %v490
      %545 = vmatprep.subr.bf16.mxu0 0
      %546 = vmatpush1.bf16.msra.mxu0 %v491
      %547 = vmatprep.subr.bf16.mxu0 0
      %548 = vmatpush1.bf16.msra.mxu0 0
      %549 = vmatprep.subr.bf16.mxu0 0
      %550 = vmatpush1.bf16.msra.mxu0 0
      %551 = vmatprep.subr.bf16.mxu0 0
      %552 = vmatpush1.bf16.msra.mxu0 0
      %553 = vmatprep.subr.bf16.mxu0 0
      %554 = vmatpush1.bf16.msra.mxu0 0
      %555 = vmatprep.subr.bf16.mxu0 0
      %556 = vmatpush1.bf16.msra.mxu0 0
      %557 = vmatprep.subr.bf16.mxu0 0
      %558 = vmatpush1.bf16.msra.mxu0 0
      %559 = vmatprep.subr.bf16.mxu0 0
      %560 = vmatpush1.bf16.msra.mxu0 0
      %561 = vmatprep.subr.bf16.mxu0 0
      %562 = vmatpush1.bf16.msra.mxu0 0
      %563 = vmatprep.subr.bf16.mxu0 0
      %564 = vmatpush1.bf16.msra.mxu0 0
      %565 = vmatprep.subr.bf16.mxu0 0
      %566 = vmatpush1.bf16.msra.mxu0 0
      %567 = vmatprep.subr.bf16.mxu0 0
      %568 = vmatpush1.bf16.msra.mxu0 0
      %569 = vmatprep.subr.bf16.mxu0 0
      %570 = vmatpush1.bf16.msra.mxu0 0
      %571 = vmatprep.subr.bf16.mxu0 0
      %572 = vmatpush1.bf16.msra.mxu0 0
      %573 = vmatprep.subr.bf16.mxu0 0
      %574 = vmatpush1.bf16.msra.mxu0 0
      %575 = vmatprep.mubr.bf16.mxu0 0
      %576 = vmatmul.mubr.bf16.gmra.mrb[0].mxu0 %v496
      %v577 = vpop.f32.mrb[0].mxu0
      %v578 = vadd.f32 %v400, %v577
      %v579 = vpop.f32.mrb[0].mxu0
      %v580 = vpop.f32.mrb[0].mxu0
      %v581 = vadd.f32 %v400, %v580
      %v582 = vpop.f32.mrb[0].mxu0
      %583 = vmatprep.mubr.bf16.mxu0 0
      %584 = vmatmul.mubr.bf16.gmra.mrb[0].mxu0 %v499
      %v585 = vpop.f32.mrb[0].mxu0
      %v586 = vadd.f32 %v400, %v585
      %v587 = vpop.f32.mrb[0].mxu0
      %v588 = vpop.f32.mrb[0].mxu0
      %v589 = vadd.f32 %v400, %v588
      %v590 = vpop.f32.mrb[0].mxu0
      %591 = vmatprep.mubr.bf16.mxu0 0
      %592 = vmatmul.mubr.bf16.gmra.mrb[0].mxu0 %v502
      %v593 = vpop.f32.mrb[0].mxu0
      %v594 = vadd.f32 %v400, %v593
      %v595 = vpop.f32.mrb[0].mxu0
      %v596 = vpop.f32.mrb[0].mxu0
      %v597 = vadd.f32 %v400, %v596
      %v598 = vpop.f32.mrb[0].mxu0
      %599 = vmatprep.mubr.bf16.mxu0 0
      %600 = vmatmul.mubr.bf16.gmra.mrb[0].mxu0 %v505
      %v601 = vpop.f32.mrb[0].mxu0
      %v602 = vadd.f32 %v400, %v601
      %v603 = vpop.f32.mrb[0].mxu0
      %v604 = vpop.f32.mrb[0].mxu0
      %v605 = vadd.f32 %v400, %v604
      %v606 = vpop.f32.mrb[0].mxu0
      %607 = vmatprep.mubr.bf16.mxu0 0
      %608 = vmatmul.mubr.bf16.gmra.mrb[0].mxu0 %v508
      %v609 = vpop.f32.mrb[0].mxu0
      %v610 = vadd.f32 %v400, %v609
      %v611 = vpop.f32.mrb[0].mxu0
      %v612 = vpop.f32.mrb[0].mxu0
      %v613 = vadd.f32 %v400, %v612
      %v614 = vpop.f32.mrb[0].mxu0
      %615 = vmatprep.mubr.bf16.mxu0 0
      %616 = vmatmul.mubr.bf16.gmra.mrb[0].mxu0 %v511
      %v617 = vpop.f32.mrb[0].mxu0
      %v618 = vadd.f32 %v400, %v617
      %v619 = vpop.f32.mrb[0].mxu0
      %v620 = vpop.f32.mrb[0].mxu0
      %v621 = vadd.f32 %v400, %v620
      %v622 = vpop.f32.mrb[0].mxu0
      %623 = vmatprep.mubr.bf16.mxu0 0
      %624 = vmatmul.mubr.bf16.gmra.mrb[0].mxu0 %v514
      %v625 = vpop.f32.mrb[0].mxu0
      %v626 = vadd.f32 %v400, %v625
      %v627 = vpop.f32.mrb[0].mxu0
      %v628 = vpop.f32.mrb[0].mxu0
      %v629 = vadd.f32 %v400, %v628
      %v630 = vpop.f32.mrb[0].mxu0
      %631 = vmatprep.mubr.bf16.mxu0 0
      %632 = vmatmul.mubr.bf16.gmra.mrb[0].mxu0 %v517
      %v633 = vpop.f32.mrb[0].mxu0
      %v634 = vadd.f32 %v400, %v633
      %v635 = vpop.f32.mrb[0].mxu0
      %v636 = vpop.f32.mrb[0].mxu0
      %v637 = vadd.f32 %v400, %v636
      %v638 = vpop.f32.mrb[0].mxu0
      %639 = vmatprep.mubr.bf16.mxu0 0
      %640 = vmatmul.mubr.bf16.gmra.mrb[0].mxu0 %v520
      %v641 = vpop.f32.mrb[0].mxu0
      %v642 = vadd.f32 %v400, %v641
      %v643 = vpop.f32.mrb[0].mxu0
      %v644 = vpop.f32.mrb[0].mxu0
      %v645 = vadd.f32 %v400, %v644
      %v646 = vpop.f32.mrb[0].mxu0
      %647 = vmatprep.mubr.bf16.mxu0 0
      %648 = vmatmul.mubr.bf16.gmra.mrb[0].mxu0 %v523
      %v649 = vpop.f32.mrb[0].mxu0
      %v650 = vadd.f32 %v400, %v649
      %v651 = vpop.f32.mrb[0].mxu0
      %v652 = vpop.f32.mrb[0].mxu0
      %v653 = vadd.f32 %v400, %v652
      %v654 = vpop.f32.mrb[0].mxu0
      %655 = vmatprep.mubr.bf16.mxu0 0
      %656 = vmatmul.mubr.bf16.gmra.mrb[0].mxu0 %v526
      %v657 = vpop.f32.mrb[0].mxu0
      %v658 = vadd.f32 %v400, %v657
      %v659 = vpop.f32.mrb[0].mxu0
      %v660 = vpop.f32.mrb[0].mxu0
      %v661 = vadd.f32 %v400, %v660
      %v662 = vpop.f32.mrb[0].mxu0
      %663 = vmatprep.mubr.bf16.mxu0 0
      %664 = vmatmul.mubr.bf16.gmra.mrb[0].mxu0 %v529
      %v665 = vpop.f32.mrb[0].mxu0
      %v666 = vadd.f32 %v400, %v665
      %v667 = vpop.f32.mrb[0].mxu0
      %v668 = vpop.f32.mrb[0].mxu0
      %v669 = vadd.f32 %v400, %v668
      %v670 = vpop.f32.mrb[0].mxu0
      %671 = vmatprep.mubr.bf16.mxu0 0
      %672 = vmatmul.mubr.bf16.gmra.mrb[0].mxu0 %v532
      %v673 = vpop.f32.mrb[0].mxu0
      %v674 = vadd.f32 %v400, %v673
      %v675 = vpop.f32.mrb[0].mxu0
      %v676 = vpop.f32.mrb[0].mxu0
      %v677 = vadd.f32 %v400, %v676
      %v678 = vpop.f32.mrb[0].mxu0
      %679 = vmatprep.mubr.bf16.mxu0 0
      %680 = vmatmul.mubr.bf16.gmra.mrb[0].mxu0 %v535
      %v681 = vpop.f32.mrb[0].mxu0
      %v682 = vadd.f32 %v400, %v681
      %v683 = vpop.f32.mrb[0].mxu0
      %v684 = vpop.f32.mrb[0].mxu0
      %v685 = vadd.f32 %v400, %v684
      %v686 = vpop.f32.mrb[0].mxu0
      %687 = vmatprep.mubr.bf16.mxu0 0
      %688 = vmatmul.mubr.bf16.gmra.mrb[0].mxu0 %v538
      %v689 = vpop.f32.mrb[0].mxu0
      %v690 = vadd.f32 %v400, %v689
      %v691 = vpop.f32.mrb[0].mxu0
      %v692 = vpop.f32.mrb[0].mxu0
      %v693 = vadd.f32 %v400, %v692
      %v694 = vpop.f32.mrb[0].mxu0
      %695 = vmatprep.mubr.bf16.mxu0 0
      %696 = vmatmul.mubr.bf16.gmra.mrb[0].mxu0 %v541
      %v697 = vpop.f32.mrb[0].mxu0
      %v698 = vadd.f32 %v400, %v697
      %v699 = vpop.f32.mrb[0].mxu0
      %v700 = vpop.f32.mrb[0].mxu0
      %v701 = vadd.f32 %v400, %v700
      %v702 = vpop.f32.mrb[0].mxu0
      %703 = vdwg.mxu0
      %v704 = vxor.u32 %v578, 2147483648
      %v705 = vxor.u32 %v581, 2147483648
      %v706 = vxor.u32 %v586, 2147483648
      %v707 = vxor.u32 %v589, 2147483648
      %v708 = vxor.u32 %v594, 2147483648
      %v709 = vxor.u32 %v597, 2147483648
      %v710 = vxor.u32 %v602, 2147483648
      %v711 = vxor.u32 %v605, 2147483648
      %v712 = vxor.u32 %v610, 2147483648
      %v713 = vxor.u32 %v613, 2147483648
      %v714 = vxor.u32 %v618, 2147483648
      %v715 = vxor.u32 %v621, 2147483648
      %v716 = vxor.u32 %v626, 2147483648
      %v717 = vxor.u32 %v629, 2147483648
      %v718 = vxor.u32 %v634, 2147483648
      %v719 = vxor.u32 %v637, 2147483648
      %v720 = vxor.u32 %v642, 2147483648
      %v721 = vxor.u32 %v645, 2147483648
      %v722 = vxor.u32 %v650, 2147483648
      %v723 = vxor.u32 %v653, 2147483648
      %v724 = vxor.u32 %v658, 2147483648
      %v725 = vxor.u32 %v661, 2147483648
      %v726 = vxor.u32 %v666, 2147483648
      %v727 = vxor.u32 %v669, 2147483648
      %v728 = vxor.u32 %v674, 2147483648
      %v729 = vxor.u32 %v677, 2147483648
      %v730 = vxor.u32 %v682, 2147483648
      %v731 = vxor.u32 %v685, 2147483648
      %v732 = vxor.u32 %v690, 2147483648
      %v733 = vxor.u32 %v693, 2147483648
      %v734 = vxor.u32 %v698, 2147483648
      %v735 = vxor.u32 %v701, 2147483648
      %v736 = vmul.f32 %v704, 1.442695
      %v737 = vpow.pop %v736
      %v738 = vmul.f32 %v705, 1.442695
      %v739 = vpow.pop %v738
      %v740 = vmul.f32 %v706, 1.442695
      %v741 = vpow.pop %v740
      %v742 = vmul.f32 %v707, 1.442695
      %v743 = vpow.pop %v742
      %v744 = vmul.f32 %v708, 1.442695
      %v745 = vpow.pop %v744
      %v746 = vmul.f32 %v709, 1.442695
      %v747 = vpow.pop %v746
      %v748 = vmul.f32 %v710, 1.442695
      %v749 = vpow.pop %v748
      %v750 = vmul.f32 %v711, 1.442695
      %v751 = vpow.pop %v750
      %v752 = vmul.f32 %v712, 1.442695
      %v753 = vpow.pop %v752
      %v754 = vmul.f32 %v713, 1.442695
      %v755 = vpow.pop %v754
      %v756 = vmul.f32 %v714, 1.442695
      %v757 = vpow.pop %v756
      %v758 = vmul.f32 %v715, 1.442695
      %v759 = vpow.pop %v758
      %v760 = vmul.f32 %v716, 1.442695
      %v761 = vpow.pop %v760
      %v762 = vmul.f32 %v717, 1.442695
      %v763 = vpow.pop %v762
      %v764 = vmul.f32 %v718, 1.442695
      %v765 = vpow.pop %v764
      %v766 = vmul.f32 %v719, 1.442695
      %v767 = vpow.pop %v766
      %v768 = vmul.f32 %v720, 1.442695
      %v769 = vpow.pop %v768
      %v770 = vmul.f32 %v721, 1.442695
      %v771 = vpow.pop %v770
      %v772 = vmul.f32 %v722, 1.442695
      %v773 = vpow.pop %v772
      %v774 = vmul.f32 %v723, 1.442695
      %v775 = vpow.pop %v774
      %v776 = vmul.f32 %v724, 1.442695
      %v777 = vpow.pop %v776
      %v778 = vmul.f32 %v725, 1.442695
      %v779 = vpow.pop %v778
      %v780 = vmul.f32 %v726, 1.442695
      %v781 = vpow.pop %v780
      %v782 = vmul.f32 %v727, 1.442695
      %v783 = vpow.pop %v782
      %v784 = vmul.f32 %v728, 1.442695
      %v785 = vpow.pop %v784
      %v786 = vmul.f32 %v729, 1.442695
      %v787 = vpow.pop %v786
      %v788 = vmul.f32 %v730, 1.442695
      %v789 = vpow.pop %v788
      %v790 = vmul.f32 %v731, 1.442695
      %v791 = vpow.pop %v790
      %v792 = vmul.f32 %v732, 1.442695
      %v793 = vpow.pop %v792
      %v794 = vmul.f32 %v733, 1.442695
      %v795 = vpow.pop %v794
      %v796 = vmul.f32 %v734, 1.442695
      %v797 = vpow.pop %v796
      %v798 = vmul.f32 %v735, 1.442695
      %v799 = vpow.pop %v798
      %v800 = vadd.f32 %v737, 1.0
      %v801 = vadd.f32 %v739, 1.0
      %v802 = vadd.f32 %v741, 1.0
      %v803 = vadd.f32 %v743, 1.0
      %v804 = vadd.f32 %v745, 1.0
      %v805 = vadd.f32 %v747, 1.0
      %v806 = vadd.f32 %v749, 1.0
      %v807 = vadd.f32 %v751, 1.0
      %v808 = vadd.f32 %v753, 1.0
      %v809 = vadd.f32 %v755, 1.0
      %v810 = vadd.f32 %v757, 1.0
      %v811 = vadd.f32 %v759, 1.0
      %v812 = vadd.f32 %v761, 1.0
      %v813 = vadd.f32 %v763, 1.0
      %v814 = vadd.f32 %v765, 1.0
      %v815 = vadd.f32 %v767, 1.0
      %v816 = vadd.f32 %v769, 1.0
      %v817 = vadd.f32 %v771, 1.0
      %v818 = vadd.f32 %v773, 1.0
      %v819 = vadd.f32 %v775, 1.0
      %v820 = vadd.f32 %v777, 1.0
      %v821 = vadd.f32 %v779, 1.0
      %v822 = vadd.f32 %v781, 1.0
      %v823 = vadd.f32 %v783, 1.0
      %v824 = vadd.f32 %v785, 1.0
      %v825 = vadd.f32 %v787, 1.0
      %v826 = vadd.f32 %v789, 1.0
      %v827 = vadd.f32 %v791, 1.0
      %v828 = vadd.f32 %v793, 1.0
      %v829 = vadd.f32 %v795, 1.0
      %v830 = vadd.f32 %v797, 1.0
      %v831 = vadd.f32 %v799, 1.0
      %v832 = vrcp.pop %v800
      %v833 = vmul.f32 1.0, %v832
      %v834 = vrcp.pop %v801
      %v835 = vmul.f32 1.0, %v834
      %v836 = vrcp.pop %v802
      %v837 = vmul.f32 1.0, %v836
      %v838 = vrcp.pop %v803
      %v839 = vmul.f32 1.0, %v838
      %v840 = vrcp.pop %v804
      %v841 = vmul.f32 1.0, %v840
      %v842 = vrcp.pop %v805
      %v843 = vmul.f32 1.0, %v842
      %v844 = vrcp.pop %v806
      %v845 = vmul.f32 1.0, %v844
      %v846 = vrcp.pop %v807
      %v847 = vmul.f32 1.0, %v846
      %v848 = vrcp.pop %v808
      %v849 = vmul.f32 1.0, %v848
      %v850 = vrcp.pop %v809
      %v851 = vmul.f32 1.0, %v850
      %v852 = vrcp.pop %v810
      %v853 = vmul.f32 1.0, %v852
      %v854 = vrcp.pop %v811
      %v855 = vmul.f32 1.0, %v854
      %v856 = vrcp.pop %v812
      %v857 = vmul.f32 1.0, %v856
      %v858 = vrcp.pop %v813
      %v859 = vmul.f32 1.0, %v858
      %v860 = vrcp.pop %v814
      %v861 = vmul.f32 1.0, %v860
      %v862 = vrcp.pop %v815
      %v863 = vmul.f32 1.0, %v862
      %v864 = vrcp.pop %v816
      %v865 = vmul.f32 1.0, %v864
      %v866 = vrcp.pop %v817
      %v867 = vmul.f32 1.0, %v866
      %v868 = vrcp.pop %v818
      %v869 = vmul.f32 1.0, %v868
      %v870 = vrcp.pop %v819
      %v871 = vmul.f32 1.0, %v870
      %v872 = vrcp.pop %v820
      %v873 = vmul.f32 1.0, %v872
      %v874 = vrcp.pop %v821
      %v875 = vmul.f32 1.0, %v874
      %v876 = vrcp.pop %v822
      %v877 = vmul.f32 1.0, %v876
      %v878 = vrcp.pop %v823
      %v879 = vmul.f32 1.0, %v878
      %v880 = vrcp.pop %v824
      %v881 = vmul.f32 1.0, %v880
      %v882 = vrcp.pop %v825
      %v883 = vmul.f32 1.0, %v882
      %v884 = vrcp.pop %v826
      %v885 = vmul.f32 1.0, %v884
      %v886 = vrcp.pop %v827
      %v887 = vmul.f32 1.0, %v886
      %v888 = vrcp.pop %v828
      %v889 = vmul.f32 1.0, %v888
      %v890 = vrcp.pop %v829
      %v891 = vmul.f32 1.0, %v890
      %v892 = vrcp.pop %v830
      %v893 = vmul.f32 1.0, %v892
      %v894 = vrcp.pop %v831
      %v895 = vmul.f32 1.0, %v894
      %v896 = vmul.f32 %v578, %v833
      %v897 = vmul.f32 %v581, %v835
      %v898 = vmul.f32 %v586, %v837
      %v899 = vmul.f32 %v589, %v839
      %v900 = vmul.f32 %v594, %v841
      %v901 = vmul.f32 %v597, %v843
      %v902 = vmul.f32 %v602, %v845
      %v903 = vmul.f32 %v605, %v847
      %v904 = vmul.f32 %v610, %v849
      %v905 = vmul.f32 %v613, %v851
      %v906 = vmul.f32 %v618, %v853
      %v907 = vmul.f32 %v621, %v855
      %v908 = vmul.f32 %v626, %v857
      %v909 = vmul.f32 %v629, %v859
      %v910 = vmul.f32 %v634, %v861
      %v911 = vmul.f32 %v637, %v863
      %v912 = vmul.f32 %v642, %v865
      %v913 = vmul.f32 %v645, %v867
      %v914 = vmul.f32 %v650, %v869
      %v915 = vmul.f32 %v653, %v871
      %v916 = vmul.f32 %v658, %v873
      %v917 = vmul.f32 %v661, %v875
      %v918 = vmul.f32 %v666, %v877
      %v919 = vmul.f32 %v669, %v879
      %v920 = vmul.f32 %v674, %v881
      %v921 = vmul.f32 %v677, %v883
      %v922 = vmul.f32 %v682, %v885
      %v923 = vmul.f32 %v685, %v887
      %v924 = vmul.f32 %v690, %v889
      %v925 = vmul.f32 %v693, %v891
      %v926 = vmul.f32 %v698, %v893
      %v927 = vmul.f32 %v701, %v895
      %v928 = vpack.c.bf16 %v897, %v896
      %v929 = vpack.c.bf16 %v899, %v898
      %v930 = vpack.c.bf16 %v901, %v900
      %v931 = vpack.c.bf16 %v903, %v902
      %v932 = vpack.c.bf16 %v905, %v904
      %v933 = vpack.c.bf16 %v907, %v906
      %v934 = vpack.c.bf16 %v909, %v908
      %v935 = vpack.c.bf16 %v911, %v910
      %v936 = vpack.c.bf16 %v913, %v912
      %v937 = vpack.c.bf16 %v915, %v914
      %v938 = vpack.c.bf16 %v917, %v916
      %v939 = vpack.c.bf16 %v919, %v918
      %v940 = vpack.c.bf16 %v921, %v920
      %v941 = vpack.c.bf16 %v923, %v922
      %v942 = vpack.c.bf16 %v925, %v924
      %v943 = vpack.c.bf16 %v927, %v926
      %v944 = vld [vmem:[%s4] sm:$0xf]
      %v945 = vld [vmem:[%s4 + $0x4] sm:$0xf]
      %v946 = vld [vmem:[%s4 + $0x8] sm:$0xf]
      %v947 = vld [vmem:[%s4 + $0xc] sm:$0xf]
      %v948 = vld [vmem:[%s5] sm:$0x1]
      %v950 = vlaneseq
      %v951 = vshrl.u32 %v950, 7
      %v952 = vsub.s32 0, %v951
      %v953 = vrot.slane %v948, %v952
      %v959 = vunpack.c.l.b16 %v944
      %v960 = vunpack.c.l.b16 %v945
      %v961 = vunpack.c.l.b16 %v946
      %v962 = vunpack.c.l.b16 %v947
      %v963 = vpack.c.b16 %v960, %v959
      %v964 = vpack.c.b16 %v962, %v961
      %v968 = vsel %vm494, %v928, 0
      %v971 = vsel %vm494, %v929, 0
      %v974 = vsel %vm494, %v930, 0
      %v977 = vsel %vm494, %v931, 0
      %v980 = vsel %vm494, %v932, 0
      %v983 = vsel %vm494, %v933, 0
      %v986 = vsel %vm494, %v934, 0
      %v989 = vsel %vm494, %v935, 0
      %v992 = vsel %vm494, %v936, 0
      %v995 = vsel %vm494, %v937, 0
      %v998 = vsel %vm494, %v938, 0
      %v1001 = vsel %vm494, %v939, 0
      %v1004 = vsel %vm494, %v940, 0
      %v1007 = vsel %vm494, %v941, 0
      %v1010 = vsel %vm494, %v942, 0
      %v1013 = vsel %vm494, %v943, 0
      %1015 = vmatprep.subr.bf16.mxu0 0
      %1016 = vmatpush1.bf16.msra.mxu0 %v963
      %1017 = vmatprep.subr.bf16.mxu0 0
      %1018 = vmatpush1.bf16.msra.mxu0 %v964
      %1019 = vmatprep.subr.bf16.mxu0 0
      %1020 = vmatpush1.bf16.msra.mxu0 0
      %1021 = vmatprep.subr.bf16.mxu0 0
      %1022 = vmatpush1.bf16.msra.mxu0 0
      %1023 = vmatprep.subr.bf16.mxu0 0
      %1024 = vmatpush1.bf16.msra.mxu0 0
      %1025 = vmatprep.subr.bf16.mxu0 0
      %1026 = vmatpush1.bf16.msra.mxu0 0
      %1027 = vmatprep.subr.bf16.mxu0 0
      %1028 = vmatpush1.bf16.msra.mxu0 0
      %1029 = vmatprep.subr.bf16.mxu0 0
      %1030 = vmatpush1.bf16.msra.mxu0 0
      %1031 = vmatprep.subr.bf16.mxu0 0
      %1032 = vmatpush1.bf16.msra.mxu0 0
      %1033 = vmatprep.subr.bf16.mxu0 0
      %1034 = vmatpush1.bf16.msra.mxu0 0
      %1035 = vmatprep.subr.bf16.mxu0 0
      %1036 = vmatpush1.bf16.msra.mxu0 0
      %1037 = vmatprep.subr.bf16.mxu0 0
      %1038 = vmatpush1.bf16.msra.mxu0 0
      %1039 = vmatprep.subr.bf16.mxu0 0
      %1040 = vmatpush1.bf16.msra.mxu0 0
      %1041 = vmatprep.subr.bf16.mxu0 0
      %1042 = vmatpush1.bf16.msra.mxu0 0
      %1043 = vmatprep.subr.bf16.mxu0 0
      %1044 = vmatpush1.bf16.msra.mxu0 0
      %1045 = vmatprep.subr.bf16.mxu0 0
      %1046 = vmatpush1.bf16.msra.mxu0 0
      %1047 = vmatprep.mubr.bf16.mxu0 0
      %1048 = vmatmul.mubr.bf16.gmra.mrb[0].mxu0 %v968
      %v1049 = vpop.f32.mrb[0].mxu0
      %v1050 = vadd.f32 %v953, %v1049
      %v1051 = vpop.f32.mrb[0].mxu0
      %v1052 = vpop.f32.mrb[0].mxu0
      %v1053 = vadd.f32 %v953, %v1052
      %v1054 = vpop.f32.mrb[0].mxu0
      %1055 = vmatprep.mubr.bf16.mxu0 0
      %1056 = vmatmul.mubr.bf16.gmra.mrb[0].mxu0 %v971
      %v1057 = vpop.f32.mrb[0].mxu0
      %v1058 = vadd.f32 %v953, %v1057
      %v1059 = vpop.f32.mrb[0].mxu0
      %v1060 = vpop.f32.mrb[0].mxu0
      %v1061 = vadd.f32 %v953, %v1060
      %v1062 = vpop.f32.mrb[0].mxu0
      %1063 = vmatprep.mubr.bf16.mxu0 0
      %1064 = vmatmul.mubr.bf16.gmra.mrb[0].mxu0 %v974
      %v1065 = vpop.f32.mrb[0].mxu0
      %v1066 = vadd.f32 %v953, %v1065
      %v1067 = vpop.f32.mrb[0].mxu0
      %v1068 = vpop.f32.mrb[0].mxu0
      %v1069 = vadd.f32 %v953, %v1068
      %v1070 = vpop.f32.mrb[0].mxu0
      %1071 = vmatprep.mubr.bf16.mxu0 0
      %1072 = vmatmul.mubr.bf16.gmra.mrb[0].mxu0 %v977
      %v1073 = vpop.f32.mrb[0].mxu0
      %v1074 = vadd.f32 %v953, %v1073
      %v1075 = vpop.f32.mrb[0].mxu0
      %v1076 = vpop.f32.mrb[0].mxu0
      %v1077 = vadd.f32 %v953, %v1076
      %v1078 = vpop.f32.mrb[0].mxu0
      %1079 = vmatprep.mubr.bf16.mxu0 0
      %1080 = vmatmul.mubr.bf16.gmra.mrb[0].mxu0 %v980
      %v1081 = vpop.f32.mrb[0].mxu0
      %v1082 = vadd.f32 %v953, %v1081
      %v1083 = vpop.f32.mrb[0].mxu0
      %v1084 = vpop.f32.mrb[0].mxu0
      %v1085 = vadd.f32 %v953, %v1084
      %v1086 = vpop.f32.mrb[0].mxu0
      %1087 = vmatprep.mubr.bf16.mxu0 0
      %1088 = vmatmul.mubr.bf16.gmra.mrb[0].mxu0 %v983
      %v1089 = vpop.f32.mrb[0].mxu0
      %v1090 = vadd.f32 %v953, %v1089
      %v1091 = vpop.f32.mrb[0].mxu0
      %v1092 = vpop.f32.mrb[0].mxu0
      %v1093 = vadd.f32 %v953, %v1092
      %v1094 = vpop.f32.mrb[0].mxu0
      %1095 = vmatprep.mubr.bf16.mxu0 0
      %1096 = vmatmul.mubr.bf16.gmra.mrb[0].mxu0 %v986
      %v1097 = vpop.f32.mrb[0].mxu0
      %v1098 = vadd.f32 %v953, %v1097
      %v1099 = vpop.f32.mrb[0].mxu0
      %v1100 = vpop.f32.mrb[0].mxu0
      %v1101 = vadd.f32 %v953, %v1100
      %v1102 = vpop.f32.mrb[0].mxu0
      %1103 = vmatprep.mubr.bf16.mxu0 0
      %1104 = vmatmul.mubr.bf16.gmra.mrb[0].mxu0 %v989
      %v1105 = vpop.f32.mrb[0].mxu0
      %v1106 = vadd.f32 %v953, %v1105
      %v1107 = vpop.f32.mrb[0].mxu0
      %v1108 = vpop.f32.mrb[0].mxu0
      %v1109 = vadd.f32 %v953, %v1108
      %v1110 = vpop.f32.mrb[0].mxu0
      %1111 = vmatprep.mubr.bf16.mxu0 0
      %1112 = vmatmul.mubr.bf16.gmra.mrb[0].mxu0 %v992
      %v1113 = vpop.f32.mrb[0].mxu0
      %v1114 = vadd.f32 %v953, %v1113
      %v1115 = vpop.f32.mrb[0].mxu0
      %v1116 = vpop.f32.mrb[0].mxu0
      %v1117 = vadd.f32 %v953, %v1116
      %v1118 = vpop.f32.mrb[0].mxu0
      %1119 = vmatprep.mubr.bf16.mxu0 0
      %1120 = vmatmul.mubr.bf16.gmra.mrb[0].mxu0 %v995
      %v1121 = vpop.f32.mrb[0].mxu0
      %v1122 = vadd.f32 %v953, %v1121
      %v1123 = vpop.f32.mrb[0].mxu0
      %v1124 = vpop.f32.mrb[0].mxu0
      %v1125 = vadd.f32 %v953, %v1124
      %v1126 = vpop.f32.mrb[0].mxu0
      %1127 = vmatprep.mubr.bf16.mxu0 0
      %1128 = vmatmul.mubr.bf16.gmra.mrb[0].mxu0 %v998
      %v1129 = vpop.f32.mrb[0].mxu0
      %v1130 = vadd.f32 %v953, %v1129
      %v1131 = vpop.f32.mrb[0].mxu0
      %v1132 = vpop.f32.mrb[0].mxu0
      %v1133 = vadd.f32 %v953, %v1132
      %v1134 = vpop.f32.mrb[0].mxu0
      %1135 = vmatprep.mubr.bf16.mxu0 0
      %1136 = vmatmul.mubr.bf16.gmra.mrb[0].mxu0 %v1001
      %v1137 = vpop.f32.mrb[0].mxu0
      %v1138 = vadd.f32 %v953, %v1137
      %v1139 = vpop.f32.mrb[0].mxu0
      %v1140 = vpop.f32.mrb[0].mxu0
      %v1141 = vadd.f32 %v953, %v1140
      %v1142 = vpop.f32.mrb[0].mxu0
      %1143 = vmatprep.mubr.bf16.mxu0 0
      %1144 = vmatmul.mubr.bf16.gmra.mrb[0].mxu0 %v1004
      %v1145 = vpop.f32.mrb[0].mxu0
      %v1146 = vadd.f32 %v953, %v1145
      %v1147 = vpop.f32.mrb[0].mxu0
      %v1148 = vpop.f32.mrb[0].mxu0
      %v1149 = vadd.f32 %v953, %v1148
      %v1150 = vpop.f32.mrb[0].mxu0
      %1151 = vmatprep.mubr.bf16.mxu0 0
      %1152 = vmatmul.mubr.bf16.gmra.mrb[0].mxu0 %v1007
      %v1153 = vpop.f32.mrb[0].mxu0
      %v1154 = vadd.f32 %v953, %v1153
      %v1155 = vpop.f32.mrb[0].mxu0
      %v1156 = vpop.f32.mrb[0].mxu0
      %v1157 = vadd.f32 %v953, %v1156
      %v1158 = vpop.f32.mrb[0].mxu0
      %1159 = vmatprep.mubr.bf16.mxu0 0
      %1160 = vmatmul.mubr.bf16.gmra.mrb[0].mxu0 %v1010
      %v1161 = vpop.f32.mrb[0].mxu0
      %v1162 = vadd.f32 %v953, %v1161
      %v1163 = vpop.f32.mrb[0].mxu0
      %v1164 = vpop.f32.mrb[0].mxu0
      %v1165 = vadd.f32 %v953, %v1164
      %v1166 = vpop.f32.mrb[0].mxu0
      %1167 = vmatprep.mubr.bf16.mxu0 0
      %1168 = vmatmul.mubr.bf16.gmra.mrb[0].mxu0 %v1013
      %v1169 = vpop.f32.mrb[0].mxu0
      %v1170 = vadd.f32 %v953, %v1169
      %v1171 = vpop.f32.mrb[0].mxu0
      %v1172 = vpop.f32.mrb[0].mxu0
      %v1173 = vadd.f32 %v953, %v1172
      %v1174 = vpop.f32.mrb[0].mxu0
      %1175 = vdwg.mxu0
      %v1176 = vld [vmem:[%s350] sm:$0xff]
      %v1177 = vld [vmem:[%s350 + $0x8] sm:$0xff]
      %v1178 = vld [vmem:[%s350 + $0x10] sm:$0xff]
      %v1179 = vld [vmem:[%s350 + $0x18] sm:$0xff]
      %v1180 = vld [vmem:[%s350 + $0x20] sm:$0xff]
      %v1181 = vld [vmem:[%s350 + $0x28] sm:$0xff]
      %v1182 = vld [vmem:[%s350 + $0x30] sm:$0xff]
      %v1183 = vld [vmem:[%s350 + $0x38] sm:$0xff]
      %v1184 = vld [vmem:[%s350 + $0x40] sm:$0xff]
      %v1185 = vld [vmem:[%s350 + $0x48] sm:$0xff]
      %v1186 = vld [vmem:[%s350 + $0x50] sm:$0xff]
      %v1187 = vld [vmem:[%s350 + $0x58] sm:$0xff]
      %v1188 = vld [vmem:[%s350 + $0x60] sm:$0xff]
      %v1189 = vld [vmem:[%s350 + $0x68] sm:$0xff]
      %v1190 = vld [vmem:[%s350 + $0x70] sm:$0xff]
      %v1191 = vld [vmem:[%s350 + $0x78] sm:$0xff]
      %v1192 = vld [vmem:[%s350 + $0x80] sm:$0xff]
      %v1193 = vld [vmem:[%s350 + $0x88] sm:$0xff]
      %v1194 = vld [vmem:[%s350 + $0x90] sm:$0xff]
      %v1195 = vld [vmem:[%s350 + $0x98] sm:$0xff]
      %v1196 = vld [vmem:[%s350 + $0xa0] sm:$0xff]
      %v1197 = vld [vmem:[%s350 + $0xa8] sm:$0xff]
      %v1198 = vld [vmem:[%s350 + $0xb0] sm:$0xff]
      %v1199 = vld [vmem:[%s350 + $0xb8] sm:$0xff]
      %v1200 = vld [vmem:[%s350 + $0xc0] sm:$0xff]
      %v1201 = vld [vmem:[%s350 + $0xc8] sm:$0xff]
      %v1202 = vld [vmem:[%s350 + $0xd0] sm:$0xff]
      %v1203 = vld [vmem:[%s350 + $0xd8] sm:$0xff]
      %v1204 = vld [vmem:[%s350 + $0xe0] sm:$0xff]
      %v1205 = vld [vmem:[%s350 + $0xe8] sm:$0xff]
      %v1206 = vld [vmem:[%s350 + $0xf0] sm:$0xff]
      %v1207 = vld [vmem:[%s350 + $0xf8] sm:$0xff]
      %v1208 = vld [vmem:[%s6] sm:$0x1]
      %1210 = vset.pattern.permute.xlu0 0
      %1211 = vperm.xlu0 %1210, %v1176
      %v1212 = vpop.permute.xlu0 %1211
      %1215 = vset.pattern.permute.xlu0 0
      %1216 = vperm.xlu0 %1215, %v1177
      %v1217 = vpop.permute.xlu0 %1216
      %1220 = vset.pattern.permute.xlu0 0
      %1221 = vperm.xlu0 %1220, %v1178
      %v1222 = vpop.permute.xlu0 %1221
      %1225 = vset.pattern.permute.xlu0 0
      %1226 = vperm.xlu0 %1225, %v1179
      %v1227 = vpop.permute.xlu0 %1226
      %1230 = vset.pattern.permute.xlu0 0
      %1231 = vperm.xlu0 %1230, %v1180
      %v1232 = vpop.permute.xlu0 %1231
      %1235 = vset.pattern.permute.xlu0 0
      %1236 = vperm.xlu0 %1235, %v1181
      %v1237 = vpop.permute.xlu0 %1236
      %1240 = vset.pattern.permute.xlu0 0
      %1241 = vperm.xlu0 %1240, %v1182
      %v1242 = vpop.permute.xlu0 %1241
      %1245 = vset.pattern.permute.xlu0 0
      %1246 = vperm.xlu0 %1245, %v1183
      %v1247 = vpop.permute.xlu0 %1246
      %1250 = vset.pattern.permute.xlu0 0
      %1251 = vperm.xlu0 %1250, %v1184
      %v1252 = vpop.permute.xlu0 %1251
      %1255 = vset.pattern.permute.xlu0 0
      %1256 = vperm.xlu0 %1255, %v1185
      %v1257 = vpop.permute.xlu0 %1256
      %1260 = vset.pattern.permute.xlu0 0
      %1261 = vperm.xlu0 %1260, %v1186
      %v1262 = vpop.permute.xlu0 %1261
      %1265 = vset.pattern.permute.xlu0 0
      %1266 = vperm.xlu0 %1265, %v1187
      %v1267 = vpop.permute.xlu0 %1266
      %1270 = vset.pattern.permute.xlu0 0
      %1271 = vperm.xlu0 %1270, %v1188
      %v1272 = vpop.permute.xlu0 %1271
      %1275 = vset.pattern.permute.xlu0 0
      %1276 = vperm.xlu0 %1275, %v1189
      %v1277 = vpop.permute.xlu0 %1276
      %1280 = vset.pattern.permute.xlu0 0
      %1281 = vperm.xlu0 %1280, %v1190
      %v1282 = vpop.permute.xlu0 %1281
      %1285 = vset.pattern.permute.xlu0 0
      %1286 = vperm.xlu0 %1285, %v1191
      %v1287 = vpop.permute.xlu0 %1286
      %1290 = vset.pattern.permute.xlu0 0
      %1291 = vperm.xlu0 %1290, %v1192
      %v1292 = vpop.permute.xlu0 %1291
      %1295 = vset.pattern.permute.xlu0 0
      %1296 = vperm.xlu0 %1295, %v1193
      %v1297 = vpop.permute.xlu0 %1296
      %1300 = vset.pattern.permute.xlu0 0
      %1301 = vperm.xlu0 %1300, %v1194
      %v1302 = vpop.permute.xlu0 %1301
      %1305 = vset.pattern.permute.xlu0 0
      %1306 = vperm.xlu0 %1305, %v1195
      %v1307 = vpop.permute.xlu0 %1306
      %1310 = vset.pattern.permute.xlu0 0
      %1311 = vperm.xlu0 %1310, %v1196
      %v1312 = vpop.permute.xlu0 %1311
      %1315 = vset.pattern.permute.xlu0 0
      %1316 = vperm.xlu0 %1315, %v1197
      %v1317 = vpop.permute.xlu0 %1316
      %1320 = vset.pattern.permute.xlu0 0
      %1321 = vperm.xlu0 %1320, %v1198
      %v1322 = vpop.permute.xlu0 %1321
      %1325 = vset.pattern.permute.xlu0 0
      %1326 = vperm.xlu0 %1325, %v1199
      %v1327 = vpop.permute.xlu0 %1326
      %1330 = vset.pattern.permute.xlu0 0
      %1331 = vperm.xlu0 %1330, %v1200
      %v1332 = vpop.permute.xlu0 %1331
      %1335 = vset.pattern.permute.xlu0 0
      %1336 = vperm.xlu0 %1335, %v1201
      %v1337 = vpop.permute.xlu0 %1336
      %1340 = vset.pattern.permute.xlu0 0
      %1341 = vperm.xlu0 %1340, %v1202
      %v1342 = vpop.permute.xlu0 %1341
      %1345 = vset.pattern.permute.xlu0 0
      %1346 = vperm.xlu0 %1345, %v1203
      %v1347 = vpop.permute.xlu0 %1346
      %1350 = vset.pattern.permute.xlu0 0
      %1351 = vperm.xlu0 %1350, %v1204
      %v1352 = vpop.permute.xlu0 %1351
      %1355 = vset.pattern.permute.xlu0 0
      %1356 = vperm.xlu0 %1355, %v1205
      %v1357 = vpop.permute.xlu0 %1356
      %1360 = vset.pattern.permute.xlu0 0
      %1361 = vperm.xlu0 %1360, %v1206
      %v1362 = vpop.permute.xlu0 %1361
      %1365 = vset.pattern.permute.xlu0 0
      %1366 = vperm.xlu0 %1365, %v1207
      %v1367 = vpop.permute.xlu0 %1366
      %v1370 = vlaneseq
      %v1371 = vshrl.u32 %v1370, 7
      %v1372 = vsub.s32 0, %v1371
      %v1373 = vrot.slane %v1208, %v1372
      %v1375 = vmul.f32 %v1212, %v1373
      %v1376 = vmul.f32 %v1217, %v1373
      %v1377 = vmul.f32 %v1222, %v1373
      %v1378 = vmul.f32 %v1227, %v1373
      %v1379 = vmul.f32 %v1232, %v1373
      %v1380 = vmul.f32 %v1237, %v1373
      %v1381 = vmul.f32 %v1242, %v1373
      %v1382 = vmul.f32 %v1247, %v1373
      %v1383 = vmul.f32 %v1252, %v1373
      %v1384 = vmul.f32 %v1257, %v1373
      %v1385 = vmul.f32 %v1262, %v1373
      %v1386 = vmul.f32 %v1267, %v1373
      %v1387 = vmul.f32 %v1272, %v1373
      %v1388 = vmul.f32 %v1277, %v1373
      %v1389 = vmul.f32 %v1282, %v1373
      %v1390 = vmul.f32 %v1287, %v1373
      %v1391 = vmul.f32 %v1292, %v1373
      %v1392 = vmul.f32 %v1297, %v1373
      %v1393 = vmul.f32 %v1302, %v1373
      %v1394 = vmul.f32 %v1307, %v1373
      %v1395 = vmul.f32 %v1312, %v1373
      %v1396 = vmul.f32 %v1317, %v1373
      %v1397 = vmul.f32 %v1322, %v1373
      %v1398 = vmul.f32 %v1327, %v1373
      %v1399 = vmul.f32 %v1332, %v1373
      %v1400 = vmul.f32 %v1337, %v1373
      %v1401 = vmul.f32 %v1342, %v1373
      %v1402 = vmul.f32 %v1347, %v1373
      %v1403 = vmul.f32 %v1352, %v1373
      %v1404 = vmul.f32 %v1357, %v1373
      %v1405 = vmul.f32 %v1362, %v1373
      %v1406 = vmul.f32 %v1367, %v1373
      %v1407 = vld [vmem:[%s7] sm:$0x1]
      %v1409 = vlaneseq
      %v1410 = vshrl.u32 %v1409, 7
      %v1411 = vsub.s32 0, %v1410
      %v1412 = vrot.slane %v1407, %v1411
      %v1414 = vadd.f32 %v1375, %v1412
      %v1415 = vadd.f32 %v1376, %v1412
      %v1416 = vadd.f32 %v1377, %v1412
      %v1417 = vadd.f32 %v1378, %v1412
      %v1418 = vadd.f32 %v1379, %v1412
      %v1419 = vadd.f32 %v1380, %v1412
      %v1420 = vadd.f32 %v1381, %v1412
      %v1421 = vadd.f32 %v1382, %v1412
      %v1422 = vadd.f32 %v1383, %v1412
      %v1423 = vadd.f32 %v1384, %v1412
      %v1424 = vadd.f32 %v1385, %v1412
      %v1425 = vadd.f32 %v1386, %v1412
      %v1426 = vadd.f32 %v1387, %v1412
      %v1427 = vadd.f32 %v1388, %v1412
      %v1428 = vadd.f32 %v1389, %v1412
      %v1429 = vadd.f32 %v1390, %v1412
      %v1430 = vadd.f32 %v1391, %v1412
      %v1431 = vadd.f32 %v1392, %v1412
      %v1432 = vadd.f32 %v1393, %v1412
      %v1433 = vadd.f32 %v1394, %v1412
      %v1434 = vadd.f32 %v1395, %v1412
      %v1435 = vadd.f32 %v1396, %v1412
      %v1436 = vadd.f32 %v1397, %v1412
      %v1437 = vadd.f32 %v1398, %v1412
      %v1438 = vadd.f32 %v1399, %v1412
      %v1439 = vadd.f32 %v1400, %v1412
      %v1440 = vadd.f32 %v1401, %v1412
      %v1441 = vadd.f32 %v1402, %v1412
      %v1442 = vadd.f32 %v1403, %v1412
      %v1443 = vadd.f32 %v1404, %v1412
      %v1444 = vadd.f32 %v1405, %v1412
      %v1445 = vadd.f32 %v1406, %v1412
      %v1446 = vand.u32 2147483647, %v1414
      %vm1447 = vcmp.le.f32.partialorder %v1446, 0.7853982
      %vm1448 = vcmp.lt.s32.totalorder %v1414, 0
      %v1449 = vand.u32 %v1414, 2139095040
      %v1450 = vshrl.u32 %v1449, 23
      %v1451 = vsub.s32 %v1450, 127
      %v1452 = vand.u32 2147483647, %v1414
      %v1453 = vand.u32 %v1452, 8388607
      %v1454 = vor.u32 %v1453, 8388608
      %v1455 = vsub.s32 0, %v1454
      %v1456 = vadd.s32 %v1451, 1
      %vm1457 = vcmp.gt.s32.totalorder %v1456, 0
      %v1458 = vsel %vm1457, %v1456, 0
      %v1459 = vshrl.u32 %v1458, 5
      %v1460 = vand.u32 %v1458, 31
      %v1461 = vsub.s32 32, %v1460
      %v1462 = vshrl.u32 683565275, %v1461
      %v1463 = vshll.u32 683565275, %v1460
      %v1464 = vshrl.u32 2475754826, %v1461
      %v1465 = vor.u32 %v1463, %v1464
      %v1466 = vshll.u32 2475754826, %v1460
      %v1467 = vshrl.u32 2131351028, %v1461
      %v1468 = vor.u32 %v1466, %v1467
      %v1469 = vshll.u32 2131351028, %v1460
      %v1470 = vshrl.u32 2102212464, %v1461
      %v1471 = vor.u32 %v1469, %v1470
      %v1472 = vshll.u32 2102212464, %v1460
      %v1473 = vshrl.u32 920167782, %v1461
      %v1474 = vor.u32 %v1472, %v1473
      %v1475 = vshll.u32 920167782, %v1460
      %v1476 = vshrl.u32 1326507024, %v1461
      %v1477 = vor.u32 %v1475, %v1476
      %vm1478 = vcmp.lt.s32.totalorder %v1459, 1
      %vm1479 = vcmp.lt.s32.totalorder %v1459, 2
      %vm1480 = vcmp.lt.s32.totalorder %v1459, 3
      %vm1481 = vcmp.lt.s32.totalorder %v1459, 4
      %v1482 = vsel %vm1478, %v1462, %v1465
      %v1483 = vsel %vm1481, %v1471, 2102212464
      %v1484 = vsel %vm1480, %v1468, %v1483
      %v1485 = vsel %vm1479, %v1482, %v1484
      %v1486 = vsel %vm1478, %v1465, %v1468
      %v1487 = vsel %vm1481, %v1474, 920167782
      %v1488 = vsel %vm1480, %v1471, %v1487
      %v1489 = vsel %vm1479, %v1486, %v1488
      %v1490 = vsel %vm1478, %v1468, %v1471
      %v1491 = vsel %vm1481, %v1477, 1326507024
      %v1492 = vsel %vm1480, %v1474, %v1491
      %v1493 = vsel %vm1479, %v1490, %v1492
      %v1494 = vshll.u32 %v1454, 8
      %v1495 = vmul.u32.u64.compose %v1494, %v1493
      %v1496 = vextract.low.u32 %v1495
      %v1497 = vextract.high.u32 %v1495
      %v1498 = vmul.u32.u64.compose %v1494, %v1489
      %v1499 = vextract.low.u32 %v1498
      %v1500 = vextract.high.u32 %v1498
      %v1501 = vmul.u32 %v1494, %v1485
      %v1502 = vadd.s32 %v1497, %v1499
      %vm1503 = vc.u32 %v1497, %v1499
      %v1504 = vadd.s32 %v1500, 1
      %v1505 = vsel %vm1503, %v1504, %v1500
      %v1506 = vadd.s32 %v1501, %v1505
      %v1507 = vadd.s32 %v1506, 536870912
      %v1508 = vshrl.u32 %v1507, 30
      %v1509 = vshll.u32 %v1508, 30
      %v1510 = vsub.s32 %v1506, %v1509
      %vm1511 = vcmp.lt.s32.totalorder %v1510, 0
      %v1512 = vsub.s32 0, %v1510
      %v1513 = vsel %vm1511, %v1512, %v1510
      %v1514 = vclz %v1513
      %v1515 = vsub.s32 %v1514, 2
      %vm1516 = vcmp.gt.s32.totalorder 0, %v1515
      %v1517 = vsel %vm1516, 0, %v1515
      %v1518 = vsub.s32 32, %v1517
      %v1519 = vshll.u32 %v1510, %v1517
      %v1520 = vshrl.u32 %v1502, %v1518
      %v1521 = vor.u32 %v1519, %v1520
      %v1522 = vsub.s32 4294967266, %v1517
      %v1523 = vadd.s32 %v1522, 127
      %v1524 = vshll.u32 %v1523, 23
      %v1525 = vor.u32 4788187, %v1524
      %v1526 = vand.u32 2147483647, %v1525
      %v1528 = vcvt.s32.f32 %v1521
      %v1529 = vmul.f32 %v1528, %v1526
      %v1530 = vxor.u32 %v1529, 2147483648
      %v1531 = vsel %vm1448, %v1530, %v1529
      %v1532 = vsub.s32 4, %v1508
      %v1533 = vsel %vm1448, %v1532, %v1508
      %v1534 = vsel %vm1447, %v1414, %v1531
      %v1535 = vsel %vm1447, 0, %v1533
      %v1536 = vcosq.f32.pop %v1534
      %v1537 = vsinq.f32.pop %v1534
      %vm1538 = vweird.f32 %v1414
      %v1539 = vadd.s32 %v1535, 3
      %v1540 = vand.u32 %v1539, 3
      %vm1541 = vcmp.lt.s32.totalorder %v1540, 2
      %vm1542 = vcmp.eq.s32.totalorder %v1540, 0
      %v1543 = vxor.u32 %v1537, 2147483648
      %v1544 = vsel %vm1542, %v1536, %v1543
      %vm1545 = vcmp.eq.s32.totalorder %v1540, 2
      %v1546 = vxor.u32 %v1536, 2147483648
      %v1547 = vsel %vm1545, %v1546, %v1537
      %v1548 = vsel %vm1541, %v1544, %v1547
      %v1549 = vsel %vm1538, nan, %v1548
      %v1550 = vand.u32 2147483647, %v1415
      %vm1551 = vcmp.le.f32.partialorder %v1550, 0.7853982
      %vm1552 = vcmp.lt.s32.totalorder %v1415, 0
      %v1553 = vand.u32 %v1415, 2139095040
      %v1554 = vshrl.u32 %v1553, 23
      %v1555 = vsub.s32 %v1554, 127
      %v1556 = vand.u32 2147483647, %v1415
      %v1557 = vand.u32 %v1556, 8388607
      %v1558 = vor.u32 %v1557, 8388608
      %v1559 = vsub.s32 0, %v1558
      %v1560 = vadd.s32 %v1555, 1
      %vm1561 = vcmp.gt.s32.totalorder %v1560, 0
      %v1562 = vsel %vm1561, %v1560, 0
      %v1563 = vshrl.u32 %v1562, 5
      %v1564 = vand.u32 %v1562, 31
      %v1565 = vsub.s32 32, %v1564
      %v1566 = vshrl.u32 683565275, %v1565
      %v1567 = vshll.u32 683565275, %v1564
      %v1568 = vshrl.u32 2475754826, %v1565
      %v1569 = vor.u32 %v1567, %v1568
      %v1570 = vshll.u32 2475754826, %v1564
      %v1571 = vshrl.u32 2131351028, %v1565
      %v1572 = vor.u32 %v1570, %v1571
      %v1573 = vshll.u32 2131351028, %v1564
      %v1574 = vshrl.u32 2102212464, %v1565
      %v1575 = vor.u32 %v1573, %v1574
      %v1576 = vshll.u32 2102212464, %v1564
      %v1577 = vshrl.u32 920167782, %v1565
      %v1578 = vor.u32 %v1576, %v1577
      %v1579 = vshll.u32 920167782, %v1564
      %v1580 = vshrl.u32 1326507024, %v1565
      %v1581 = vor.u32 %v1579, %v1580
      %vm1582 = vcmp.lt.s32.totalorder %v1563, 1
      %vm1583 = vcmp.lt.s32.totalorder %v1563, 2
      %vm1584 = vcmp.lt.s32.totalorder %v1563, 3
      %vm1585 = vcmp.lt.s32.totalorder %v1563, 4
      %v1586 = vsel %vm1582, %v1566, %v1569
      %v1587 = vsel %vm1585, %v1575, 2102212464
      %v1588 = vsel %vm1584, %v1572, %v1587
      %v1589 = vsel %vm1583, %v1586, %v1588
      %v1590 = vsel %vm1582, %v1569, %v1572
      %v1591 = vsel %vm1585, %v1578, 920167782
      %v1592 = vsel %vm1584, %v1575, %v1591
      %v1593 = vsel %vm1583, %v1590, %v1592
      %v1594 = vsel %vm1582, %v1572, %v1575
      %v1595 = vsel %vm1585, %v1581, 1326507024
      %v1596 = vsel %vm1584, %v1578, %v1595
      %v1597 = vsel %vm1583, %v1594, %v1596
      %v1598 = vshll.u32 %v1558, 8
      %v1599 = vmul.u32.u64.compose %v1598, %v1597
      %v1600 = vextract.low.u32 %v1599
      %v1601 = vextract.high.u32 %v1599
      %v1602 = vmul.u32.u64.compose %v1598, %v1593
      %v1603 = vextract.low.u32 %v1602
      %v1604 = vextract.high.u32 %v1602
      %v1605 = vmul.u32 %v1598, %v1589
      %v1606 = vadd.s32 %v1601, %v1603
      %vm1607 = vc.u32 %v1601, %v1603
      %v1608 = vadd.s32 %v1604, 1
      %v1609 = vsel %vm1607, %v1608, %v1604
      %v1610 = vadd.s32 %v1605, %v1609
      %v1611 = vadd.s32 %v1610, 536870912
      %v1612 = vshrl.u32 %v1611, 30
      %v1613 = vshll.u32 %v1612, 30
      %v1614 = vsub.s32 %v1610, %v1613
      %vm1615 = vcmp.lt.s32.totalorder %v1614, 0
      %v1616 = vsub.s32 0, %v1614
      %v1617 = vsel %vm1615, %v1616, %v1614
      %v1618 = vclz %v1617
      %v1619 = vsub.s32 %v1618, 2
      %vm1620 = vcmp.gt.s32.totalorder 0, %v1619
      %v1621 = vsel %vm1620, 0, %v1619
      %v1622 = vsub.s32 32, %v1621
      %v1623 = vshll.u32 %v1614, %v1621
      %v1624 = vshrl.u32 %v1606, %v1622
      %v1625 = vor.u32 %v1623, %v1624
      %v1626 = vsub.s32 4294967266, %v1621
      %v1627 = vadd.s32 %v1626, 127
      %v1628 = vshll.u32 %v1627, 23
      %v1629 = vor.u32 4788187, %v1628
      %v1630 = vand.u32 2147483647, %v1629
      %v1632 = vcvt.s32.f32 %v1625
      %v1633 = vmul.f32 %v1632, %v1630
      %v1634 = vxor.u32 %v1633, 2147483648
      %v1635 = vsel %vm1552, %v1634, %v1633
      %v1636 = vsub.s32 4, %v1612
      %v1637 = vsel %vm1552, %v1636, %v1612
      %v1638 = vsel %vm1551, %v1415, %v1635
      %v1639 = vsel %vm1551, 0, %v1637
      %v1640 = vcosq.f32.pop %v1638
      %v1641 = vsinq.f32.pop %v1638
      %vm1642 = vweird.f32 %v1415
      %v1643 = vadd.s32 %v1639, 3
      %v1644 = vand.u32 %v1643, 3
      %vm1645 = vcmp.lt.s32.totalorder %v1644, 2
      %vm1646 = vcmp.eq.s32.totalorder %v1644, 0
      %v1647 = vxor.u32 %v1641, 2147483648
      %v1648 = vsel %vm1646, %v1640, %v1647
      %vm1649 = vcmp.eq.s32.totalorder %v1644, 2
      %v1650 = vxor.u32 %v1640, 2147483648
      %v1651 = vsel %vm1649, %v1650, %v1641
      %v1652 = vsel %vm1645, %v1648, %v1651
      %v1653 = vsel %vm1642, nan, %v1652
      %v1654 = vand.u32 2147483647, %v1416
      %vm1655 = vcmp.le.f32.partialorder %v1654, 0.7853982
      %vm1656 = vcmp.lt.s32.totalorder %v1416, 0
      %v1657 = vand.u32 %v1416, 2139095040
      %v1658 = vshrl.u32 %v1657, 23
      %v1659 = vsub.s32 %v1658, 127
      %v1660 = vand.u32 2147483647, %v1416
      %v1661 = vand.u32 %v1660, 8388607
      %v1662 = vor.u32 %v1661, 8388608
      %v1663 = vsub.s32 0, %v1662
      %v1664 = vadd.s32 %v1659, 1
      %vm1665 = vcmp.gt.s32.totalorder %v1664, 0
      %v1666 = vsel %vm1665, %v1664, 0
      %v1667 = vshrl.u32 %v1666, 5
      %v1668 = vand.u32 %v1666, 31
      %v1669 = vsub.s32 32, %v1668
      %v1670 = vshrl.u32 683565275, %v1669
      %v1671 = vshll.u32 683565275, %v1668
      %v1672 = vshrl.u32 2475754826, %v1669
      %v1673 = vor.u32 %v1671, %v1672
      %v1674 = vshll.u32 2475754826, %v1668
      %v1675 = vshrl.u32 2131351028, %v1669
      %v1676 = vor.u32 %v1674, %v1675
      %v1677 = vshll.u32 2131351028, %v1668
      %v1678 = vshrl.u32 2102212464, %v1669
      %v1679 = vor.u32 %v1677, %v1678
      %v1680 = vshll.u32 2102212464, %v1668
      %v1681 = vshrl.u32 920167782, %v1669
      %v1682 = vor.u32 %v1680, %v1681
      %v1683 = vshll.u32 920167782, %v1668
      %v1684 = vshrl.u32 1326507024, %v1669
      %v1685 = vor.u32 %v1683, %v1684
      %vm1686 = vcmp.lt.s32.totalorder %v1667, 1
      %vm1687 = vcmp.lt.s32.totalorder %v1667, 2
      %vm1688 = vcmp.lt.s32.totalorder %v1667, 3
      %vm1689 = vcmp.lt.s32.totalorder %v1667, 4
      %v1690 = vsel %vm1686, %v1670, %v1673
      %v1691 = vsel %vm1689, %v1679, 2102212464
      %v1692 = vsel %vm1688, %v1676, %v1691
      %v1693 = vsel %vm1687, %v1690, %v1692
      %v1694 = vsel %vm1686, %v1673, %v1676
      %v1695 = vsel %vm1689, %v1682, 920167782
      %v1696 = vsel %vm1688, %v1679, %v1695
      %v1697 = vsel %vm1687, %v1694, %v1696
      %v1698 = vsel %vm1686, %v1676, %v1679
      %v1699 = vsel %vm1689, %v1685, 1326507024
      %v1700 = vsel %vm1688, %v1682, %v1699
      %v1701 = vsel %vm1687, %v1698, %v1700
      %v1702 = vshll.u32 %v1662, 8
      %v1703 = vmul.u32.u64.compose %v1702, %v1701
      %v1704 = vextract.low.u32 %v1703
      %v1705 = vextract.high.u32 %v1703
      %v1706 = vmul.u32.u64.compose %v1702, %v1697
      %v1707 = vextract.low.u32 %v1706
      %v1708 = vextract.high.u32 %v1706
      %v1709 = vmul.u32 %v1702, %v1693
      %v1710 = vadd.s32 %v1705, %v1707
      %vm1711 = vc.u32 %v1705, %v1707
      %v1712 = vadd.s32 %v1708, 1
      %v1713 = vsel %vm1711, %v1712, %v1708
      %v1714 = vadd.s32 %v1709, %v1713
      %v1715 = vadd.s32 %v1714, 536870912
      %v1716 = vshrl.u32 %v1715, 30
      %v1717 = vshll.u32 %v1716, 30
      %v1718 = vsub.s32 %v1714, %v1717
      %vm1719 = vcmp.lt.s32.totalorder %v1718, 0
      %v1720 = vsub.s32 0, %v1718
      %v1721 = vsel %vm1719, %v1720, %v1718
      %v1722 = vclz %v1721
      %v1723 = vsub.s32 %v1722, 2
      %vm1724 = vcmp.gt.s32.totalorder 0, %v1723
      %v1725 = vsel %vm1724, 0, %v1723
      %v1726 = vsub.s32 32, %v1725
      %v1727 = vshll.u32 %v1718, %v1725
      %v1728 = vshrl.u32 %v1710, %v1726
      %v1729 = vor.u32 %v1727, %v1728
      %v1730 = vsub.s32 4294967266, %v1725
      %v1731 = vadd.s32 %v1730, 127
      %v1732 = vshll.u32 %v1731, 23
      %v1733 = vor.u32 4788187, %v1732
      %v1734 = vand.u32 2147483647, %v1733
      %v1736 = vcvt.s32.f32 %v1729
      %v1737 = vmul.f32 %v1736, %v1734
      %v1738 = vxor.u32 %v1737, 2147483648
      %v1739 = vsel %vm1656, %v1738, %v1737
      %v1740 = vsub.s32 4, %v1716
      %v1741 = vsel %vm1656, %v1740, %v1716
      %v1742 = vsel %vm1655, %v1416, %v1739
      %v1743 = vsel %vm1655, 0, %v1741
      %v1744 = vcosq.f32.pop %v1742
      %v1745 = vsinq.f32.pop %v1742
      %vm1746 = vweird.f32 %v1416
      %v1747 = vadd.s32 %v1743, 3
      %v1748 = vand.u32 %v1747, 3
      %vm1749 = vcmp.lt.s32.totalorder %v1748, 2
      %vm1750 = vcmp.eq.s32.totalorder %v1748, 0
      %v1751 = vxor.u32 %v1745, 2147483648
      %v1752 = vsel %vm1750, %v1744, %v1751
      %vm1753 = vcmp.eq.s32.totalorder %v1748, 2
      %v1754 = vxor.u32 %v1744, 2147483648
      %v1755 = vsel %vm1753, %v1754, %v1745
      %v1756 = vsel %vm1749, %v1752, %v1755
      %v1757 = vsel %vm1746, nan, %v1756
      %v1758 = vand.u32 2147483647, %v1417
      %vm1759 = vcmp.le.f32.partialorder %v1758, 0.7853982
      %vm1760 = vcmp.lt.s32.totalorder %v1417, 0
      %v1761 = vand.u32 %v1417, 2139095040
      %v1762 = vshrl.u32 %v1761, 23
      %v1763 = vsub.s32 %v1762, 127
      %v1764 = vand.u32 2147483647, %v1417
      %v1765 = vand.u32 %v1764, 8388607
      %v1766 = vor.u32 %v1765, 8388608
      %v1767 = vsub.s32 0, %v1766
      %v1768 = vadd.s32 %v1763, 1
      %vm1769 = vcmp.gt.s32.totalorder %v1768, 0
      %v1770 = vsel %vm1769, %v1768, 0
      %v1771 = vshrl.u32 %v1770, 5
      %v1772 = vand.u32 %v1770, 31
      %v1773 = vsub.s32 32, %v1772
      %v1774 = vshrl.u32 683565275, %v1773
      %v1775 = vshll.u32 683565275, %v1772
      %v1776 = vshrl.u32 2475754826, %v1773
      %v1777 = vor.u32 %v1775, %v1776
      %v1778 = vshll.u32 2475754826, %v1772
      %v1779 = vshrl.u32 2131351028, %v1773
      %v1780 = vor.u32 %v1778, %v1779
      %v1781 = vshll.u32 2131351028, %v1772
      %v1782 = vshrl.u32 2102212464, %v1773
      %v1783 = vor.u32 %v1781, %v1782
      %v1784 = vshll.u32 2102212464, %v1772
      %v1785 = vshrl.u32 920167782, %v1773
      %v1786 = vor.u32 %v1784, %v1785
      %v1787 = vshll.u32 920167782, %v1772
      %v1788 = vshrl.u32 1326507024, %v1773
      %v1789 = vor.u32 %v1787, %v1788
      %vm1790 = vcmp.lt.s32.totalorder %v1771, 1
      %vm1791 = vcmp.lt.s32.totalorder %v1771, 2
      %vm1792 = vcmp.lt.s32.totalorder %v1771, 3
      %vm1793 = vcmp.lt.s32.totalorder %v1771, 4
      %v1794 = vsel %vm1790, %v1774, %v1777
      %v1795 = vsel %vm1793, %v1783, 2102212464
      %v1796 = vsel %vm1792, %v1780, %v1795
      %v1797 = vsel %vm1791, %v1794, %v1796
      %v1798 = vsel %vm1790, %v1777, %v1780
      %v1799 = vsel %vm1793, %v1786, 920167782
      %v1800 = vsel %vm1792, %v1783, %v1799
      %v1801 = vsel %vm1791, %v1798, %v1800
      %v1802 = vsel %vm1790, %v1780, %v1783
      %v1803 = vsel %vm1793, %v1789, 1326507024
      %v1804 = vsel %vm1792, %v1786, %v1803
      %v1805 = vsel %vm1791, %v1802, %v1804
      %v1806 = vshll.u32 %v1766, 8
      %v1807 = vmul.u32.u64.compose %v1806, %v1805
      %v1808 = vextract.low.u32 %v1807
      %v1809 = vextract.high.u32 %v1807
      %v1810 = vmul.u32.u64.compose %v1806, %v1801
      %v1811 = vextract.low.u32 %v1810
      %v1812 = vextract.high.u32 %v1810
      %v1813 = vmul.u32 %v1806, %v1797
      %v1814 = vadd.s32 %v1809, %v1811
      %vm1815 = vc.u32 %v1809, %v1811
      %v1816 = vadd.s32 %v1812, 1
      %v1817 = vsel %vm1815, %v1816, %v1812
      %v1818 = vadd.s32 %v1813, %v1817
      %v1819 = vadd.s32 %v1818, 536870912
      %v1820 = vshrl.u32 %v1819, 30
      %v1821 = vshll.u32 %v1820, 30
      %v1822 = vsub.s32 %v1818, %v1821
      %vm1823 = vcmp.lt.s32.totalorder %v1822, 0
      %v1824 = vsub.s32 0, %v1822
      %v1825 = vsel %vm1823, %v1824, %v1822
      %v1826 = vclz %v1825
      %v1827 = vsub.s32 %v1826, 2
      %vm1828 = vcmp.gt.s32.totalorder 0, %v1827
      %v1829 = vsel %vm1828, 0, %v1827
      %v1830 = vsub.s32 32, %v1829
      %v1831 = vshll.u32 %v1822, %v1829
      %v1832 = vshrl.u32 %v1814, %v1830
      %v1833 = vor.u32 %v1831, %v1832
      %v1834 = vsub.s32 4294967266, %v1829
      %v1835 = vadd.s32 %v1834, 127
      %v1836 = vshll.u32 %v1835, 23
      %v1837 = vor.u32 4788187, %v1836
      %v1838 = vand.u32 2147483647, %v1837
      %v1840 = vcvt.s32.f32 %v1833
      %v1841 = vmul.f32 %v1840, %v1838
      %v1842 = vxor.u32 %v1841, 2147483648
      %v1843 = vsel %vm1760, %v1842, %v1841
      %v1844 = vsub.s32 4, %v1820
      %v1845 = vsel %vm1760, %v1844, %v1820
      %v1846 = vsel %vm1759, %v1417, %v1843
      %v1847 = vsel %vm1759, 0, %v1845
      %v1848 = vcosq.f32.pop %v1846
      %v1849 = vsinq.f32.pop %v1846
      %vm1850 = vweird.f32 %v1417
      %v1851 = vadd.s32 %v1847, 3
      %v1852 = vand.u32 %v1851, 3
      %vm1853 = vcmp.lt.s32.totalorder %v1852, 2
      %vm1854 = vcmp.eq.s32.totalorder %v1852, 0
      %v1855 = vxor.u32 %v1849, 2147483648
      %v1856 = vsel %vm1854, %v1848, %v1855
      %vm1857 = vcmp.eq.s32.totalorder %v1852, 2
      %v1858 = vxor.u32 %v1848, 2147483648
      %v1859 = vsel %vm1857, %v1858, %v1849
      %v1860 = vsel %vm1853, %v1856, %v1859
      %v1861 = vsel %vm1850, nan, %v1860
      %v1862 = vand.u32 2147483647, %v1418
      %vm1863 = vcmp.le.f32.partialorder %v1862, 0.7853982
      %vm1864 = vcmp.lt.s32.totalorder %v1418, 0
      %v1865 = vand.u32 %v1418, 2139095040
      %v1866 = vshrl.u32 %v1865, 23
      %v1867 = vsub.s32 %v1866, 127
      %v1868 = vand.u32 2147483647, %v1418
      %v1869 = vand.u32 %v1868, 8388607
      %v1870 = vor.u32 %v1869, 8388608
      %v1871 = vsub.s32 0, %v1870
      %v1872 = vadd.s32 %v1867, 1
      %vm1873 = vcmp.gt.s32.totalorder %v1872, 0
      %v1874 = vsel %vm1873, %v1872, 0
      %v1875 = vshrl.u32 %v1874, 5
      %v1876 = vand.u32 %v1874, 31
      %v1877 = vsub.s32 32, %v1876
      %v1878 = vshrl.u32 683565275, %v1877
      %v1879 = vshll.u32 683565275, %v1876
      %v1880 = vshrl.u32 2475754826, %v1877
      %v1881 = vor.u32 %v1879, %v1880
      %v1882 = vshll.u32 2475754826, %v1876
      %v1883 = vshrl.u32 2131351028, %v1877
      %v1884 = vor.u32 %v1882, %v1883
      %v1885 = vshll.u32 2131351028, %v1876
      %v1886 = vshrl.u32 2102212464, %v1877
      %v1887 = vor.u32 %v1885, %v1886
      %v1888 = vshll.u32 2102212464, %v1876
      %v1889 = vshrl.u32 920167782, %v1877
      %v1890 = vor.u32 %v1888, %v1889
      %v1891 = vshll.u32 920167782, %v1876
      %v1892 = vshrl.u32 1326507024, %v1877
      %v1893 = vor.u32 %v1891, %v1892
      %vm1894 = vcmp.lt.s32.totalorder %v1875, 1
      %vm1895 = vcmp.lt.s32.totalorder %v1875, 2
      %vm1896 = vcmp.lt.s32.totalorder %v1875, 3
      %vm1897 = vcmp.lt.s32.totalorder %v1875, 4
      %v1898 = vsel %vm1894, %v1878, %v1881
      %v1899 = vsel %vm1897, %v1887, 2102212464
      %v1900 = vsel %vm1896, %v1884, %v1899
      %v1901 = vsel %vm1895, %v1898, %v1900
      %v1902 = vsel %vm1894, %v1881, %v1884
      %v1903 = vsel %vm1897, %v1890, 920167782
      %v1904 = vsel %vm1896, %v1887, %v1903
      %v1905 = vsel %vm1895, %v1902, %v1904
      %v1906 = vsel %vm1894, %v1884, %v1887
      %v1907 = vsel %vm1897, %v1893, 1326507024
      %v1908 = vsel %vm1896, %v1890, %v1907
      %v1909 = vsel %vm1895, %v1906, %v1908
      %v1910 = vshll.u32 %v1870, 8
      %v1911 = vmul.u32.u64.compose %v1910, %v1909
      %v1912 = vextract.low.u32 %v1911
      %v1913 = vextract.high.u32 %v1911
      %v1914 = vmul.u32.u64.compose %v1910, %v1905
      %v1915 = vextract.low.u32 %v1914
      %v1916 = vextract.high.u32 %v1914
      %v1917 = vmul.u32 %v1910, %v1901
      %v1918 = vadd.s32 %v1913, %v1915
      %vm1919 = vc.u32 %v1913, %v1915
      %v1920 = vadd.s32 %v1916, 1
      %v1921 = vsel %vm1919, %v1920, %v1916
      %v1922 = vadd.s32 %v1917, %v1921
      %v1923 = vadd.s32 %v1922, 536870912
      %v1924 = vshrl.u32 %v1923, 30
      %v1925 = vshll.u32 %v1924, 30
      %v1926 = vsub.s32 %v1922, %v1925
      %vm1927 = vcmp.lt.s32.totalorder %v1926, 0
      %v1928 = vsub.s32 0, %v1926
      %v1929 = vsel %vm1927, %v1928, %v1926
      %v1930 = vclz %v1929
      %v1931 = vsub.s32 %v1930, 2
      %vm1932 = vcmp.gt.s32.totalorder 0, %v1931
      %v1933 = vsel %vm1932, 0, %v1931
      %v1934 = vsub.s32 32, %v1933
      %v1935 = vshll.u32 %v1926, %v1933
      %v1936 = vshrl.u32 %v1918, %v1934
      %v1937 = vor.u32 %v1935, %v1936
      %v1938 = vsub.s32 4294967266, %v1933
      %v1939 = vadd.s32 %v1938, 127
      %v1940 = vshll.u32 %v1939, 23
      %v1941 = vor.u32 4788187, %v1940
      %v1942 = vand.u32 2147483647, %v1941
      %v1944 = vcvt.s32.f32 %v1937
      %v1945 = vmul.f32 %v1944, %v1942
      %v1946 = vxor.u32 %v1945, 2147483648
      %v1947 = vsel %vm1864, %v1946, %v1945
      %v1948 = vsub.s32 4, %v1924
      %v1949 = vsel %vm1864, %v1948, %v1924
      %v1950 = vsel %vm1863, %v1418, %v1947
      %v1951 = vsel %vm1863, 0, %v1949
      %v1952 = vcosq.f32.pop %v1950
      %v1953 = vsinq.f32.pop %v1950
      %vm1954 = vweird.f32 %v1418
      %v1955 = vadd.s32 %v1951, 3
      %v1956 = vand.u32 %v1955, 3
      %vm1957 = vcmp.lt.s32.totalorder %v1956, 2
      %vm1958 = vcmp.eq.s32.totalorder %v1956, 0
      %v1959 = vxor.u32 %v1953, 2147483648
      %v1960 = vsel %vm1958, %v1952, %v1959
      %vm1961 = vcmp.eq.s32.totalorder %v1956, 2
      %v1962 = vxor.u32 %v1952, 2147483648
      %v1963 = vsel %vm1961, %v1962, %v1953
      %v1964 = vsel %vm1957, %v1960, %v1963
      %v1965 = vsel %vm1954, nan, %v1964
      %v1966 = vand.u32 2147483647, %v1419
      %vm1967 = vcmp.le.f32.partialorder %v1966, 0.7853982
      %vm1968 = vcmp.lt.s32.totalorder %v1419, 0
      %v1969 = vand.u32 %v1419, 2139095040
      %v1970 = vshrl.u32 %v1969, 23
      %v1971 = vsub.s32 %v1970, 127
      %v1972 = vand.u32 2147483647, %v1419
      %v1973 = vand.u32 %v1972, 8388607
      %v1974 = vor.u32 %v1973, 8388608
      %v1975 = vsub.s32 0, %v1974
      %v1976 = vadd.s32 %v1971, 1
      %vm1977 = vcmp.gt.s32.totalorder %v1976, 0
      %v1978 = vsel %vm1977, %v1976, 0
      %v1979 = vshrl.u32 %v1978, 5
      %v1980 = vand.u32 %v1978, 31
      %v1981 = vsub.s32 32, %v1980
      %v1982 = vshrl.u32 683565275, %v1981
      %v1983 = vshll.u32 683565275, %v1980
      %v1984 = vshrl.u32 2475754826, %v1981
      %v1985 = vor.u32 %v1983, %v1984
      %v1986 = vshll.u32 2475754826, %v1980
      %v1987 = vshrl.u32 2131351028, %v1981
      %v1988 = vor.u32 %v1986, %v1987
      %v1989 = vshll.u32 2131351028, %v1980
      %v1990 = vshrl.u32 2102212464, %v1981
      %v1991 = vor.u32 %v1989, %v1990
      %v1992 = vshll.u32 2102212464, %v1980
      %v1993 = vshrl.u32 920167782, %v1981
      %v1994 = vor.u32 %v1992, %v1993
      %v1995 = vshll.u32 920167782, %v1980
      %v1996 = vshrl.u32 1326507024, %v1981
      %v1997 = vor.u32 %v1995, %v1996
      %vm1998 = vcmp.lt.s32.totalorder %v1979, 1
      %vm1999 = vcmp.lt.s32.totalorder %v1979, 2
      %vm2000 = vcmp.lt.s32.totalorder %v1979, 3
      %vm2001 = vcmp.lt.s32.totalorder %v1979, 4
      %v2002 = vsel %vm1998, %v1982, %v1985
      %v2003 = vsel %vm2001, %v1991, 2102212464
      %v2004 = vsel %vm2000, %v1988, %v2003
      %v2005 = vsel %vm1999, %v2002, %v2004
      %v2006 = vsel %vm1998, %v1985, %v1988
      %v2007 = vsel %vm2001, %v1994, 920167782
      %v2008 = vsel %vm2000, %v1991, %v2007
      %v2009 = vsel %vm1999, %v2006, %v2008
      %v2010 = vsel %vm1998, %v1988, %v1991
      %v2011 = vsel %vm2001, %v1997, 1326507024
      %v2012 = vsel %vm2000, %v1994, %v2011
      %v2013 = vsel %vm1999, %v2010, %v2012
      %v2014 = vshll.u32 %v1974, 8
      %v2015 = vmul.u32.u64.compose %v2014, %v2013
      %v2016 = vextract.low.u32 %v2015
      %v2017 = vextract.high.u32 %v2015
      %v2018 = vmul.u32.u64.compose %v2014, %v2009
      %v2019 = vextract.low.u32 %v2018
      %v2020 = vextract.high.u32 %v2018
      %v2021 = vmul.u32 %v2014, %v2005
      %v2022 = vadd.s32 %v2017, %v2019
      %vm2023 = vc.u32 %v2017, %v2019
      %v2024 = vadd.s32 %v2020, 1
      %v2025 = vsel %vm2023, %v2024, %v2020
      %v2026 = vadd.s32 %v2021, %v2025
      %v2027 = vadd.s32 %v2026, 536870912
      %v2028 = vshrl.u32 %v2027, 30
      %v2029 = vshll.u32 %v2028, 30
      %v2030 = vsub.s32 %v2026, %v2029
      %vm2031 = vcmp.lt.s32.totalorder %v2030, 0
      %v2032 = vsub.s32 0, %v2030
      %v2033 = vsel %vm2031, %v2032, %v2030
      %v2034 = vclz %v2033
      %v2035 = vsub.s32 %v2034, 2
      %vm2036 = vcmp.gt.s32.totalorder 0, %v2035
      %v2037 = vsel %vm2036, 0, %v2035
      %v2038 = vsub.s32 32, %v2037
      %v2039 = vshll.u32 %v2030, %v2037
      %v2040 = vshrl.u32 %v2022, %v2038
      %v2041 = vor.u32 %v2039, %v2040
      %v2042 = vsub.s32 4294967266, %v2037
      %v2043 = vadd.s32 %v2042, 127
      %v2044 = vshll.u32 %v2043, 23
      %v2045 = vor.u32 4788187, %v2044
      %v2046 = vand.u32 2147483647, %v2045
      %v2048 = vcvt.s32.f32 %v2041
      %v2049 = vmul.f32 %v2048, %v2046
      %v2050 = vxor.u32 %v2049, 2147483648
      %v2051 = vsel %vm1968, %v2050, %v2049
      %v2052 = vsub.s32 4, %v2028
      %v2053 = vsel %vm1968, %v2052, %v2028
      %v2054 = vsel %vm1967, %v1419, %v2051
      %v2055 = vsel %vm1967, 0, %v2053
      %v2056 = vcosq.f32.pop %v2054
      %v2057 = vsinq.f32.pop %v2054
      %vm2058 = vweird.f32 %v1419
      %v2059 = vadd.s32 %v2055, 3
      %v2060 = vand.u32 %v2059, 3
      %vm2061 = vcmp.lt.s32.totalorder %v2060, 2
      %vm2062 = vcmp.eq.s32.totalorder %v2060, 0
      %v2063 = vxor.u32 %v2057, 2147483648
      %v2064 = vsel %vm2062, %v2056, %v2063
      %vm2065 = vcmp.eq.s32.totalorder %v2060, 2
      %v2066 = vxor.u32 %v2056, 2147483648
      %v2067 = vsel %vm2065, %v2066, %v2057
      %v2068 = vsel %vm2061, %v2064, %v2067
      %v2069 = vsel %vm2058, nan, %v2068
      %v2070 = vand.u32 2147483647, %v1420
      %vm2071 = vcmp.le.f32.partialorder %v2070, 0.7853982
      %vm2072 = vcmp.lt.s32.totalorder %v1420, 0
      %v2073 = vand.u32 %v1420, 2139095040
      %v2074 = vshrl.u32 %v2073, 23
      %v2075 = vsub.s32 %v2074, 127
      %v2076 = vand.u32 2147483647, %v1420
      %v2077 = vand.u32 %v2076, 8388607
      %v2078 = vor.u32 %v2077, 8388608
      %v2079 = vsub.s32 0, %v2078
      %v2080 = vadd.s32 %v2075, 1
      %vm2081 = vcmp.gt.s32.totalorder %v2080, 0
      %v2082 = vsel %vm2081, %v2080, 0
      %v2083 = vshrl.u32 %v2082, 5
      %v2084 = vand.u32 %v2082, 31
      %v2085 = vsub.s32 32, %v2084
      %v2086 = vshrl.u32 683565275, %v2085
      %v2087 = vshll.u32 683565275, %v2084
      %v2088 = vshrl.u32 2475754826, %v2085
      %v2089 = vor.u32 %v2087, %v2088
      %v2090 = vshll.u32 2475754826, %v2084
      %v2091 = vshrl.u32 2131351028, %v2085
      %v2092 = vor.u32 %v2090, %v2091
      %v2093 = vshll.u32 2131351028, %v2084
      %v2094 = vshrl.u32 2102212464, %v2085
      %v2095 = vor.u32 %v2093, %v2094
      %v2096 = vshll.u32 2102212464, %v2084
      %v2097 = vshrl.u32 920167782, %v2085
      %v2098 = vor.u32 %v2096, %v2097
      %v2099 = vshll.u32 920167782, %v2084
      %v2100 = vshrl.u32 1326507024, %v2085
      %v2101 = vor.u32 %v2099, %v2100
      %vm2102 = vcmp.lt.s32.totalorder %v2083, 1
      %vm2103 = vcmp.lt.s32.totalorder %v2083, 2
      %vm2104 = vcmp.lt.s32.totalorder %v2083, 3
      %vm2105 = vcmp.lt.s32.totalorder %v2083, 4
      %v2106 = vsel %vm2102, %v2086, %v2089
      %v2107 = vsel %vm2105, %v2095, 2102212464
      %v2108 = vsel %vm2104, %v2092, %v2107
      %v2109 = vsel %vm2103, %v2106, %v2108
      %v2110 = vsel %vm2102, %v2089, %v2092
      %v2111 = vsel %vm2105, %v2098, 920167782
      %v2112 = vsel %vm2104, %v2095, %v2111
      %v2113 = vsel %vm2103, %v2110, %v2112
      %v2114 = vsel %vm2102, %v2092, %v2095
      %v2115 = vsel %vm2105, %v2101, 1326507024
      %v2116 = vsel %vm2104, %v2098, %v2115
      %v2117 = vsel %vm2103, %v2114, %v2116
      %v2118 = vshll.u32 %v2078, 8
      %v2119 = vmul.u32.u64.compose %v2118, %v2117
      %v2120 = vextract.low.u32 %v2119
      %v2121 = vextract.high.u32 %v2119
      %v2122 = vmul.u32.u64.compose %v2118, %v2113
      %v2123 = vextract.low.u32 %v2122
      %v2124 = vextract.high.u32 %v2122
      %v2125 = vmul.u32 %v2118, %v2109
      %v2126 = vadd.s32 %v2121, %v2123
      %vm2127 = vc.u32 %v2121, %v2123
      %v2128 = vadd.s32 %v2124, 1
      %v2129 = vsel %vm2127, %v2128, %v2124
      %v2130 = vadd.s32 %v2125, %v2129
      %v2131 = vadd.s32 %v2130, 536870912
      %v2132 = vshrl.u32 %v2131, 30
      %v2133 = vshll.u32 %v2132, 30
      %v2134 = vsub.s32 %v2130, %v2133
      %vm2135 = vcmp.lt.s32.totalorder %v2134, 0
      %v2136 = vsub.s32 0, %v2134
      %v2137 = vsel %vm2135, %v2136, %v2134
      %v2138 = vclz %v2137
      %v2139 = vsub.s32 %v2138, 2
      %vm2140 = vcmp.gt.s32.totalorder 0, %v2139
      %v2141 = vsel %vm2140, 0, %v2139
      %v2142 = vsub.s32 32, %v2141
      %v2143 = vshll.u32 %v2134, %v2141
      %v2144 = vshrl.u32 %v2126, %v2142
      %v2145 = vor.u32 %v2143, %v2144
      %v2146 = vsub.s32 4294967266, %v2141
      %v2147 = vadd.s32 %v2146, 127
      %v2148 = vshll.u32 %v2147, 23
      %v2149 = vor.u32 4788187, %v2148
      %v2150 = vand.u32 2147483647, %v2149
      %v2152 = vcvt.s32.f32 %v2145
      %v2153 = vmul.f32 %v2152, %v2150
      %v2154 = vxor.u32 %v2153, 2147483648
      %v2155 = vsel %vm2072, %v2154, %v2153
      %v2156 = vsub.s32 4, %v2132
      %v2157 = vsel %vm2072, %v2156, %v2132
      %v2158 = vsel %vm2071, %v1420, %v2155
      %v2159 = vsel %vm2071, 0, %v2157
      %v2160 = vcosq.f32.pop %v2158
      %v2161 = vsinq.f32.pop %v2158
      %vm2162 = vweird.f32 %v1420
      %v2163 = vadd.s32 %v2159, 3
      %v2164 = vand.u32 %v2163, 3
      %vm2165 = vcmp.lt.s32.totalorder %v2164, 2
      %vm2166 = vcmp.eq.s32.totalorder %v2164, 0
      %v2167 = vxor.u32 %v2161, 2147483648
      %v2168 = vsel %vm2166, %v2160, %v2167
      %vm2169 = vcmp.eq.s32.totalorder %v2164, 2
      %v2170 = vxor.u32 %v2160, 2147483648
      %v2171 = vsel %vm2169, %v2170, %v2161
      %v2172 = vsel %vm2165, %v2168, %v2171
      %v2173 = vsel %vm2162, nan, %v2172
      %v2174 = vand.u32 2147483647, %v1421
      %vm2175 = vcmp.le.f32.partialorder %v2174, 0.7853982
      %vm2176 = vcmp.lt.s32.totalorder %v1421, 0
      %v2177 = vand.u32 %v1421, 2139095040
      %v2178 = vshrl.u32 %v2177, 23
      %v2179 = vsub.s32 %v2178, 127
      %v2180 = vand.u32 2147483647, %v1421
      %v2181 = vand.u32 %v2180, 8388607
      %v2182 = vor.u32 %v2181, 8388608
      %v2183 = vsub.s32 0, %v2182
      %v2184 = vadd.s32 %v2179, 1
      %vm2185 = vcmp.gt.s32.totalorder %v2184, 0
      %v2186 = vsel %vm2185, %v2184, 0
      %v2187 = vshrl.u32 %v2186, 5
      %v2188 = vand.u32 %v2186, 31
      %v2189 = vsub.s32 32, %v2188
      %v2190 = vshrl.u32 683565275, %v2189
      %v2191 = vshll.u32 683565275, %v2188
      %v2192 = vshrl.u32 2475754826, %v2189
      %v2193 = vor.u32 %v2191, %v2192
      %v2194 = vshll.u32 2475754826, %v2188
      %v2195 = vshrl.u32 2131351028, %v2189
      %v2196 = vor.u32 %v2194, %v2195
      %v2197 = vshll.u32 2131351028, %v2188
      %v2198 = vshrl.u32 2102212464, %v2189
      %v2199 = vor.u32 %v2197, %v2198
      %v2200 = vshll.u32 2102212464, %v2188
      %v2201 = vshrl.u32 920167782, %v2189
      %v2202 = vor.u32 %v2200, %v2201
      %v2203 = vshll.u32 920167782, %v2188
      %v2204 = vshrl.u32 1326507024, %v2189
      %v2205 = vor.u32 %v2203, %v2204
      %vm2206 = vcmp.lt.s32.totalorder %v2187, 1
      %vm2207 = vcmp.lt.s32.totalorder %v2187, 2
      %vm2208 = vcmp.lt.s32.totalorder %v2187, 3
      %vm2209 = vcmp.lt.s32.totalorder %v2187, 4
      %v2210 = vsel %vm2206, %v2190, %v2193
      %v2211 = vsel %vm2209, %v2199, 2102212464
      %v2212 = vsel %vm2208, %v2196, %v2211
      %v2213 = vsel %vm2207, %v2210, %v2212
      %v2214 = vsel %vm2206, %v2193, %v2196
      %v2215 = vsel %vm2209, %v2202, 920167782
      %v2216 = vsel %vm2208, %v2199, %v2215
      %v2217 = vsel %vm2207, %v2214, %v2216
      %v2218 = vsel %vm2206, %v2196, %v2199
      %v2219 = vsel %vm2209, %v2205, 1326507024
      %v2220 = vsel %vm2208, %v2202, %v2219
      %v2221 = vsel %vm2207, %v2218, %v2220
      %v2222 = vshll.u32 %v2182, 8
      %v2223 = vmul.u32.u64.compose %v2222, %v2221
      %v2224 = vextract.low.u32 %v2223
      %v2225 = vextract.high.u32 %v2223
      %v2226 = vmul.u32.u64.compose %v2222, %v2217
      %v2227 = vextract.low.u32 %v2226
      %v2228 = vextract.high.u32 %v2226
      %v2229 = vmul.u32 %v2222, %v2213
      %v2230 = vadd.s32 %v2225, %v2227
      %vm2231 = vc.u32 %v2225, %v2227
      %v2232 = vadd.s32 %v2228, 1
      %v2233 = vsel %vm2231, %v2232, %v2228
      %v2234 = vadd.s32 %v2229, %v2233
      %v2235 = vadd.s32 %v2234, 536870912
      %v2236 = vshrl.u32 %v2235, 30
      %v2237 = vshll.u32 %v2236, 30
      %v2238 = vsub.s32 %v2234, %v2237
      %vm2239 = vcmp.lt.s32.totalorder %v2238, 0
      %v2240 = vsub.s32 0, %v2238
      %v2241 = vsel %vm2239, %v2240, %v2238
      %v2242 = vclz %v2241
      %v2243 = vsub.s32 %v2242, 2
      %vm2244 = vcmp.gt.s32.totalorder 0, %v2243
      %v2245 = vsel %vm2244, 0, %v2243
      %v2246 = vsub.s32 32, %v2245
      %v2247 = vshll.u32 %v2238, %v2245
      %v2248 = vshrl.u32 %v2230, %v2246
      %v2249 = vor.u32 %v2247, %v2248
      %v2250 = vsub.s32 4294967266, %v2245
      %v2251 = vadd.s32 %v2250, 127
      %v2252 = vshll.u32 %v2251, 23
      %v2253 = vor.u32 4788187, %v2252
      %v2254 = vand.u32 2147483647, %v2253
      %v2256 = vcvt.s32.f32 %v2249
      %v2257 = vmul.f32 %v2256, %v2254
      %v2258 = vxor.u32 %v2257, 2147483648
      %v2259 = vsel %vm2176, %v2258, %v2257
      %v2260 = vsub.s32 4, %v2236
      %v2261 = vsel %vm2176, %v2260, %v2236
      %v2262 = vsel %vm2175, %v1421, %v2259
      %v2263 = vsel %vm2175, 0, %v2261
      %v2264 = vcosq.f32.pop %v2262
      %v2265 = vsinq.f32.pop %v2262
      %vm2266 = vweird.f32 %v1421
      %v2267 = vadd.s32 %v2263, 3
      %v2268 = vand.u32 %v2267, 3
      %vm2269 = vcmp.lt.s32.totalorder %v2268, 2
      %vm2270 = vcmp.eq.s32.totalorder %v2268, 0
      %v2271 = vxor.u32 %v2265, 2147483648
      %v2272 = vsel %vm2270, %v2264, %v2271
      %vm2273 = vcmp.eq.s32.totalorder %v2268, 2
      %v2274 = vxor.u32 %v2264, 2147483648
      %v2275 = vsel %vm2273, %v2274, %v2265
      %v2276 = vsel %vm2269, %v2272, %v2275
      %v2277 = vsel %vm2266, nan, %v2276
      %v2278 = vand.u32 2147483647, %v1422
      %vm2279 = vcmp.le.f32.partialorder %v2278, 0.7853982
      %vm2280 = vcmp.lt.s32.totalorder %v1422, 0
      %v2281 = vand.u32 %v1422, 2139095040
      %v2282 = vshrl.u32 %v2281, 23
      %v2283 = vsub.s32 %v2282, 127
      %v2284 = vand.u32 2147483647, %v1422
      %v2285 = vand.u32 %v2284, 8388607
      %v2286 = vor.u32 %v2285, 8388608
      %v2287 = vsub.s32 0, %v2286
      %v2288 = vadd.s32 %v2283, 1
      %vm2289 = vcmp.gt.s32.totalorder %v2288, 0
      %v2290 = vsel %vm2289, %v2288, 0
      %v2291 = vshrl.u32 %v2290, 5
      %v2292 = vand.u32 %v2290, 31
      %v2293 = vsub.s32 32, %v2292
      %v2294 = vshrl.u32 683565275, %v2293
      %v2295 = vshll.u32 683565275, %v2292
      %v2296 = vshrl.u32 2475754826, %v2293
      %v2297 = vor.u32 %v2295, %v2296
      %v2298 = vshll.u32 2475754826, %v2292
      %v2299 = vshrl.u32 2131351028, %v2293
      %v2300 = vor.u32 %v2298, %v2299
      %v2301 = vshll.u32 2131351028, %v2292
      %v2302 = vshrl.u32 2102212464, %v2293
      %v2303 = vor.u32 %v2301, %v2302
      %v2304 = vshll.u32 2102212464, %v2292
      %v2305 = vshrl.u32 920167782, %v2293
      %v2306 = vor.u32 %v2304, %v2305
      %v2307 = vshll.u32 920167782, %v2292
      %v2308 = vshrl.u32 1326507024, %v2293
      %v2309 = vor.u32 %v2307, %v2308
      %vm2310 = vcmp.lt.s32.totalorder %v2291, 1
      %vm2311 = vcmp.lt.s32.totalorder %v2291, 2
      %vm2312 = vcmp.lt.s32.totalorder %v2291, 3
      %vm2313 = vcmp.lt.s32.totalorder %v2291, 4
      %v2314 = vsel %vm2310, %v2294, %v2297
      %v2315 = vsel %vm2313, %v2303, 2102212464
      %v2316 = vsel %vm2312, %v2300, %v2315
      %v2317 = vsel %vm2311, %v2314, %v2316
      %v2318 = vsel %vm2310, %v2297, %v2300
      %v2319 = vsel %vm2313, %v2306, 920167782
      %v2320 = vsel %vm2312, %v2303, %v2319
      %v2321 = vsel %vm2311, %v2318, %v2320
      %v2322 = vsel %vm2310, %v2300, %v2303
      %v2323 = vsel %vm2313, %v2309, 1326507024
      %v2324 = vsel %vm2312, %v2306, %v2323
      %v2325 = vsel %vm2311, %v2322, %v2324
      %v2326 = vshll.u32 %v2286, 8
      %v2327 = vmul.u32.u64.compose %v2326, %v2325
      %v2328 = vextract.low.u32 %v2327
      %v2329 = vextract.high.u32 %v2327
      %v2330 = vmul.u32.u64.compose %v2326, %v2321
      %v2331 = vextract.low.u32 %v2330
      %v2332 = vextract.high.u32 %v2330
      %v2333 = vmul.u32 %v2326, %v2317
      %v2334 = vadd.s32 %v2329, %v2331
      %vm2335 = vc.u32 %v2329, %v2331
      %v2336 = vadd.s32 %v2332, 1
      %v2337 = vsel %vm2335, %v2336, %v2332
      %v2338 = vadd.s32 %v2333, %v2337
      %v2339 = vadd.s32 %v2338, 536870912
      %v2340 = vshrl.u32 %v2339, 30
      %v2341 = vshll.u32 %v2340, 30
      %v2342 = vsub.s32 %v2338, %v2341
      %vm2343 = vcmp.lt.s32.totalorder %v2342, 0
      %v2344 = vsub.s32 0, %v2342
      %v2345 = vsel %vm2343, %v2344, %v2342
      %v2346 = vclz %v2345
      %v2347 = vsub.s32 %v2346, 2
      %vm2348 = vcmp.gt.s32.totalorder 0, %v2347
      %v2349 = vsel %vm2348, 0, %v2347
      %v2350 = vsub.s32 32, %v2349
      %v2351 = vshll.u32 %v2342, %v2349
      %v2352 = vshrl.u32 %v2334, %v2350
      %v2353 = vor.u32 %v2351, %v2352
      %v2354 = vsub.s32 4294967266, %v2349
      %v2355 = vadd.s32 %v2354, 127
      %v2356 = vshll.u32 %v2355, 23
      %v2357 = vor.u32 4788187, %v2356
      %v2358 = vand.u32 2147483647, %v2357
      %v2360 = vcvt.s32.f32 %v2353
      %v2361 = vmul.f32 %v2360, %v2358
      %v2362 = vxor.u32 %v2361, 2147483648
      %v2363 = vsel %vm2280, %v2362, %v2361
      %v2364 = vsub.s32 4, %v2340
      %v2365 = vsel %vm2280, %v2364, %v2340
      %v2366 = vsel %vm2279, %v1422, %v2363
      %v2367 = vsel %vm2279, 0, %v2365
      %v2368 = vcosq.f32.pop %v2366
      %v2369 = vsinq.f32.pop %v2366
      %vm2370 = vweird.f32 %v1422
      %v2371 = vadd.s32 %v2367, 3
      %v2372 = vand.u32 %v2371, 3
      %vm2373 = vcmp.lt.s32.totalorder %v2372, 2
      %vm2374 = vcmp.eq.s32.totalorder %v2372, 0
      %v2375 = vxor.u32 %v2369, 2147483648
      %v2376 = vsel %vm2374, %v2368, %v2375
      %vm2377 = vcmp.eq.s32.totalorder %v2372, 2
      %v2378 = vxor.u32 %v2368, 2147483648
      %v2379 = vsel %vm2377, %v2378, %v2369
      %v2380 = vsel %vm2373, %v2376, %v2379
      %v2381 = vsel %vm2370, nan, %v2380
      %v2382 = vand.u32 2147483647, %v1423
      %vm2383 = vcmp.le.f32.partialorder %v2382, 0.7853982
      %vm2384 = vcmp.lt.s32.totalorder %v1423, 0
      %v2385 = vand.u32 %v1423, 2139095040
      %v2386 = vshrl.u32 %v2385, 23
      %v2387 = vsub.s32 %v2386, 127
      %v2388 = vand.u32 2147483647, %v1423
      %v2389 = vand.u32 %v2388, 8388607
      %v2390 = vor.u32 %v2389, 8388608
      %v2391 = vsub.s32 0, %v2390
      %v2392 = vadd.s32 %v2387, 1
      %vm2393 = vcmp.gt.s32.totalorder %v2392, 0
      %v2394 = vsel %vm2393, %v2392, 0
      %v2395 = vshrl.u32 %v2394, 5
      %v2396 = vand.u32 %v2394, 31
      %v2397 = vsub.s32 32, %v2396
      %v2398 = vshrl.u32 683565275, %v2397
      %v2399 = vshll.u32 683565275, %v2396
      %v2400 = vshrl.u32 2475754826, %v2397
      %v2401 = vor.u32 %v2399, %v2400
      %v2402 = vshll.u32 2475754826, %v2396
      %v2403 = vshrl.u32 2131351028, %v2397
      %v2404 = vor.u32 %v2402, %v2403
      %v2405 = vshll.u32 2131351028, %v2396
      %v2406 = vshrl.u32 2102212464, %v2397
      %v2407 = vor.u32 %v2405, %v2406
      %v2408 = vshll.u32 2102212464, %v2396
      %v2409 = vshrl.u32 920167782, %v2397
      %v2410 = vor.u32 %v2408, %v2409
      %v2411 = vshll.u32 920167782, %v2396
      %v2412 = vshrl.u32 1326507024, %v2397
      %v2413 = vor.u32 %v2411, %v2412
      %vm2414 = vcmp.lt.s32.totalorder %v2395, 1
      %vm2415 = vcmp.lt.s32.totalorder %v2395, 2
      %vm2416 = vcmp.lt.s32.totalorder %v2395, 3
      %vm2417 = vcmp.lt.s32.totalorder %v2395, 4
      %v2418 = vsel %vm2414, %v2398, %v2401
      %v2419 = vsel %vm2417, %v2407, 2102212464
      %v2420 = vsel %vm2416, %v2404, %v2419
      %v2421 = vsel %vm2415, %v2418, %v2420
      %v2422 = vsel %vm2414, %v2401, %v2404
      %v2423 = vsel %vm2417, %v2410, 920167782
      %v2424 = vsel %vm2416, %v2407, %v2423
      %v2425 = vsel %vm2415, %v2422, %v2424
      %v2426 = vsel %vm2414, %v2404, %v2407
      %v2427 = vsel %vm2417, %v2413, 1326507024
      %v2428 = vsel %vm2416, %v2410, %v2427
      %v2429 = vsel %vm2415, %v2426, %v2428
      %v2430 = vshll.u32 %v2390, 8
      %v2431 = vmul.u32.u64.compose %v2430, %v2429
      %v2432 = vextract.low.u32 %v2431
      %v2433 = vextract.high.u32 %v2431
      %v2434 = vmul.u32.u64.compose %v2430, %v2425
      %v2435 = vextract.low.u32 %v2434
      %v2436 = vextract.high.u32 %v2434
      %v2437 = vmul.u32 %v2430, %v2421
      %v2438 = vadd.s32 %v2433, %v2435
      %vm2439 = vc.u32 %v2433, %v2435
      %v2440 = vadd.s32 %v2436, 1
      %v2441 = vsel %vm2439, %v2440, %v2436
      %v2442 = vadd.s32 %v2437, %v2441
      %v2443 = vadd.s32 %v2442, 536870912
      %v2444 = vshrl.u32 %v2443, 30
      %v2445 = vshll.u32 %v2444, 30
      %v2446 = vsub.s32 %v2442, %v2445
      %vm2447 = vcmp.lt.s32.totalorder %v2446, 0
      %v2448 = vsub.s32 0, %v2446
      %v2449 = vsel %vm2447, %v2448, %v2446
      %v2450 = vclz %v2449
      %v2451 = vsub.s32 %v2450, 2
      %vm2452 = vcmp.gt.s32.totalorder 0, %v2451
      %v2453 = vsel %vm2452, 0, %v2451
      %v2454 = vsub.s32 32, %v2453
      %v2455 = vshll.u32 %v2446, %v2453
      %v2456 = vshrl.u32 %v2438, %v2454
      %v2457 = vor.u32 %v2455, %v2456
      %v2458 = vsub.s32 4294967266, %v2453
      %v2459 = vadd.s32 %v2458, 127
      %v2460 = vshll.u32 %v2459, 23
      %v2461 = vor.u32 4788187, %v2460
      %v2462 = vand.u32 2147483647, %v2461
      %v2464 = vcvt.s32.f32 %v2457
      %v2465 = vmul.f32 %v2464, %v2462
      %v2466 = vxor.u32 %v2465, 2147483648
      %v2467 = vsel %vm2384, %v2466, %v2465
      %v2468 = vsub.s32 4, %v2444
      %v2469 = vsel %vm2384, %v2468, %v2444
      %v2470 = vsel %vm2383, %v1423, %v2467
      %v2471 = vsel %vm2383, 0, %v2469
      %v2472 = vcosq.f32.pop %v2470
      %v2473 = vsinq.f32.pop %v2470
      %vm2474 = vweird.f32 %v1423
      %v2475 = vadd.s32 %v2471, 3
      %v2476 = vand.u32 %v2475, 3
      %vm2477 = vcmp.lt.s32.totalorder %v2476, 2
      %vm2478 = vcmp.eq.s32.totalorder %v2476, 0
      %v2479 = vxor.u32 %v2473, 2147483648
      %v2480 = vsel %vm2478, %v2472, %v2479
      %vm2481 = vcmp.eq.s32.totalorder %v2476, 2
      %v2482 = vxor.u32 %v2472, 2147483648
      %v2483 = vsel %vm2481, %v2482, %v2473
      %v2484 = vsel %vm2477, %v2480, %v2483
      %v2485 = vsel %vm2474, nan, %v2484
      %v2486 = vand.u32 2147483647, %v1424
      %vm2487 = vcmp.le.f32.partialorder %v2486, 0.7853982
      %vm2488 = vcmp.lt.s32.totalorder %v1424, 0
      %v2489 = vand.u32 %v1424, 2139095040
      %v2490 = vshrl.u32 %v2489, 23
      %v2491 = vsub.s32 %v2490, 127
      %v2492 = vand.u32 2147483647, %v1424
      %v2493 = vand.u32 %v2492, 8388607
      %v2494 = vor.u32 %v2493, 8388608
      %v2495 = vsub.s32 0, %v2494
      %v2496 = vadd.s32 %v2491, 1
      %vm2497 = vcmp.gt.s32.totalorder %v2496, 0
      %v2498 = vsel %vm2497, %v2496, 0
      %v2499 = vshrl.u32 %v2498, 5
      %v2500 = vand.u32 %v2498, 31
      %v2501 = vsub.s32 32, %v2500
      %v2502 = vshrl.u32 683565275, %v2501
      %v2503 = vshll.u32 683565275, %v2500
      %v2504 = vshrl.u32 2475754826, %v2501
      %v2505 = vor.u32 %v2503, %v2504
      %v2506 = vshll.u32 2475754826, %v2500
      %v2507 = vshrl.u32 2131351028, %v2501
      %v2508 = vor.u32 %v2506, %v2507
      %v2509 = vshll.u32 2131351028, %v2500
      %v2510 = vshrl.u32 2102212464, %v2501
      %v2511 = vor.u32 %v2509, %v2510
      %v2512 = vshll.u32 2102212464, %v2500
      %v2513 = vshrl.u32 920167782, %v2501
      %v2514 = vor.u32 %v2512, %v2513
      %v2515 = vshll.u32 920167782, %v2500
      %v2516 = vshrl.u32 1326507024, %v2501
      %v2517 = vor.u32 %v2515, %v2516
      %vm2518 = vcmp.lt.s32.totalorder %v2499, 1
      %vm2519 = vcmp.lt.s32.totalorder %v2499, 2
      %vm2520 = vcmp.lt.s32.totalorder %v2499, 3
      %vm2521 = vcmp.lt.s32.totalorder %v2499, 4
      %v2522 = vsel %vm2518, %v2502, %v2505
      %v2523 = vsel %vm2521, %v2511, 2102212464
      %v2524 = vsel %vm2520, %v2508, %v2523
      %v2525 = vsel %vm2519, %v2522, %v2524
      %v2526 = vsel %vm2518, %v2505, %v2508
      %v2527 = vsel %vm2521, %v2514, 920167782
      %v2528 = vsel %vm2520, %v2511, %v2527
      %v2529 = vsel %vm2519, %v2526, %v2528
      %v2530 = vsel %vm2518, %v2508, %v2511
      %v2531 = vsel %vm2521, %v2517, 1326507024
      %v2532 = vsel %vm2520, %v2514, %v2531
      %v2533 = vsel %vm2519, %v2530, %v2532
      %v2534 = vshll.u32 %v2494, 8
      %v2535 = vmul.u32.u64.compose %v2534, %v2533
      %v2536 = vextract.low.u32 %v2535
      %v2537 = vextract.high.u32 %v2535
      %v2538 = vmul.u32.u64.compose %v2534, %v2529
      %v2539 = vextract.low.u32 %v2538
      %v2540 = vextract.high.u32 %v2538
      %v2541 = vmul.u32 %v2534, %v2525
      %v2542 = vadd.s32 %v2537, %v2539
      %vm2543 = vc.u32 %v2537, %v2539
      %v2544 = vadd.s32 %v2540, 1
      %v2545 = vsel %vm2543, %v2544, %v2540
      %v2546 = vadd.s32 %v2541, %v2545
      %v2547 = vadd.s32 %v2546, 536870912
      %v2548 = vshrl.u32 %v2547, 30
      %v2549 = vshll.u32 %v2548, 30
      %v2550 = vsub.s32 %v2546, %v2549
      %vm2551 = vcmp.lt.s32.totalorder %v2550, 0
      %v2552 = vsub.s32 0, %v2550
      %v2553 = vsel %vm2551, %v2552, %v2550
      %v2554 = vclz %v2553
      %v2555 = vsub.s32 %v2554, 2
      %vm2556 = vcmp.gt.s32.totalorder 0, %v2555
      %v2557 = vsel %vm2556, 0, %v2555
      %v2558 = vsub.s32 32, %v2557
      %v2559 = vshll.u32 %v2550, %v2557
      %v2560 = vshrl.u32 %v2542, %v2558
      %v2561 = vor.u32 %v2559, %v2560
      %v2562 = vsub.s32 4294967266, %v2557
      %v2563 = vadd.s32 %v2562, 127
      %v2564 = vshll.u32 %v2563, 23
      %v2565 = vor.u32 4788187, %v2564
      %v2566 = vand.u32 2147483647, %v2565
      %v2568 = vcvt.s32.f32 %v2561
      %v2569 = vmul.f32 %v2568, %v2566
      %v2570 = vxor.u32 %v2569, 2147483648
      %v2571 = vsel %vm2488, %v2570, %v2569
      %v2572 = vsub.s32 4, %v2548
      %v2573 = vsel %vm2488, %v2572, %v2548
      %v2574 = vsel %vm2487, %v1424, %v2571
      %v2575 = vsel %vm2487, 0, %v2573
      %v2576 = vcosq.f32.pop %v2574
      %v2577 = vsinq.f32.pop %v2574
      %vm2578 = vweird.f32 %v1424
      %v2579 = vadd.s32 %v2575, 3
      %v2580 = vand.u32 %v2579, 3
      %vm2581 = vcmp.lt.s32.totalorder %v2580, 2
      %vm2582 = vcmp.eq.s32.totalorder %v2580, 0
      %v2583 = vxor.u32 %v2577, 2147483648
      %v2584 = vsel %vm2582, %v2576, %v2583
      %vm2585 = vcmp.eq.s32.totalorder %v2580, 2
      %v2586 = vxor.u32 %v2576, 2147483648
      %v2587 = vsel %vm2585, %v2586, %v2577
      %v2588 = vsel %vm2581, %v2584, %v2587
      %v2589 = vsel %vm2578, nan, %v2588
      %v2590 = vand.u32 2147483647, %v1425
      %vm2591 = vcmp.le.f32.partialorder %v2590, 0.7853982
      %vm2592 = vcmp.lt.s32.totalorder %v1425, 0
      %v2593 = vand.u32 %v1425, 2139095040
      %v2594 = vshrl.u32 %v2593, 23
      %v2595 = vsub.s32 %v2594, 127
      %v2596 = vand.u32 2147483647, %v1425
      %v2597 = vand.u32 %v2596, 8388607
      %v2598 = vor.u32 %v2597, 8388608
      %v2599 = vsub.s32 0, %v2598
      %v2600 = vadd.s32 %v2595, 1
      %vm2601 = vcmp.gt.s32.totalorder %v2600, 0
      %v2602 = vsel %vm2601, %v2600, 0
      %v2603 = vshrl.u32 %v2602, 5
      %v2604 = vand.u32 %v2602, 31
      %v2605 = vsub.s32 32, %v2604
      %v2606 = vshrl.u32 683565275, %v2605
      %v2607 = vshll.u32 683565275, %v2604
      %v2608 = vshrl.u32 2475754826, %v2605
      %v2609 = vor.u32 %v2607, %v2608
      %v2610 = vshll.u32 2475754826, %v2604
      %v2611 = vshrl.u32 2131351028, %v2605
      %v2612 = vor.u32 %v2610, %v2611
      %v2613 = vshll.u32 2131351028, %v2604
      %v2614 = vshrl.u32 2102212464, %v2605
      %v2615 = vor.u32 %v2613, %v2614
      %v2616 = vshll.u32 2102212464, %v2604
      %v2617 = vshrl.u32 920167782, %v2605
      %v2618 = vor.u32 %v2616, %v2617
      %v2619 = vshll.u32 920167782, %v2604
      %v2620 = vshrl.u32 1326507024, %v2605
      %v2621 = vor.u32 %v2619, %v2620
      %vm2622 = vcmp.lt.s32.totalorder %v2603, 1
      %vm2623 = vcmp.lt.s32.totalorder %v2603, 2
      %vm2624 = vcmp.lt.s32.totalorder %v2603, 3
      %vm2625 = vcmp.lt.s32.totalorder %v2603, 4
      %v2626 = vsel %vm2622, %v2606, %v2609
      %v2627 = vsel %vm2625, %v2615, 2102212464
      %v2628 = vsel %vm2624, %v2612, %v2627
      %v2629 = vsel %vm2623, %v2626, %v2628
      %v2630 = vsel %vm2622, %v2609, %v2612
      %v2631 = vsel %vm2625, %v2618, 920167782
      %v2632 = vsel %vm2624, %v2615, %v2631
      %v2633 = vsel %vm2623, %v2630, %v2632
      %v2634 = vsel %vm2622, %v2612, %v2615
      %v2635 = vsel %vm2625, %v2621, 1326507024
      %v2636 = vsel %vm2624, %v2618, %v2635
      %v2637 = vsel %vm2623, %v2634, %v2636
      %v2638 = vshll.u32 %v2598, 8
      %v2639 = vmul.u32.u64.compose %v2638, %v2637
      %v2640 = vextract.low.u32 %v2639
      %v2641 = vextract.high.u32 %v2639
      %v2642 = vmul.u32.u64.compose %v2638, %v2633
      %v2643 = vextract.low.u32 %v2642
      %v2644 = vextract.high.u32 %v2642
      %v2645 = vmul.u32 %v2638, %v2629
      %v2646 = vadd.s32 %v2641, %v2643
      %vm2647 = vc.u32 %v2641, %v2643
      %v2648 = vadd.s32 %v2644, 1
      %v2649 = vsel %vm2647, %v2648, %v2644
      %v2650 = vadd.s32 %v2645, %v2649
      %v2651 = vadd.s32 %v2650, 536870912
      %v2652 = vshrl.u32 %v2651, 30
      %v2653 = vshll.u32 %v2652, 30
      %v2654 = vsub.s32 %v2650, %v2653
      %vm2655 = vcmp.lt.s32.totalorder %v2654, 0
      %v2656 = vsub.s32 0, %v2654
      %v2657 = vsel %vm2655, %v2656, %v2654
      %v2658 = vclz %v2657
      %v2659 = vsub.s32 %v2658, 2
      %vm2660 = vcmp.gt.s32.totalorder 0, %v2659
      %v2661 = vsel %vm2660, 0, %v2659
      %v2662 = vsub.s32 32, %v2661
      %v2663 = vshll.u32 %v2654, %v2661
      %v2664 = vshrl.u32 %v2646, %v2662
      %v2665 = vor.u32 %v2663, %v2664
      %v2666 = vsub.s32 4294967266, %v2661
      %v2667 = vadd.s32 %v2666, 127
      %v2668 = vshll.u32 %v2667, 23
      %v2669 = vor.u32 4788187, %v2668
      %v2670 = vand.u32 2147483647, %v2669
      %v2672 = vcvt.s32.f32 %v2665
      %v2673 = vmul.f32 %v2672, %v2670
      %v2674 = vxor.u32 %v2673, 2147483648
      %v2675 = vsel %vm2592, %v2674, %v2673
      %v2676 = vsub.s32 4, %v2652
      %v2677 = vsel %vm2592, %v2676, %v2652
      %v2678 = vsel %vm2591, %v1425, %v2675
      %v2679 = vsel %vm2591, 0, %v2677
      %v2680 = vcosq.f32.pop %v2678
      %v2681 = vsinq.f32.pop %v2678
      %vm2682 = vweird.f32 %v1425
      %v2683 = vadd.s32 %v2679, 3
      %v2684 = vand.u32 %v2683, 3
      %vm2685 = vcmp.lt.s32.totalorder %v2684, 2
      %vm2686 = vcmp.eq.s32.totalorder %v2684, 0
      %v2687 = vxor.u32 %v2681, 2147483648
      %v2688 = vsel %vm2686, %v2680, %v2687
      %vm2689 = vcmp.eq.s32.totalorder %v2684, 2
      %v2690 = vxor.u32 %v2680, 2147483648
      %v2691 = vsel %vm2689, %v2690, %v2681
      %v2692 = vsel %vm2685, %v2688, %v2691
      %v2693 = vsel %vm2682, nan, %v2692
      %v2694 = vand.u32 2147483647, %v1426
      %vm2695 = vcmp.le.f32.partialorder %v2694, 0.7853982
      %vm2696 = vcmp.lt.s32.totalorder %v1426, 0
      %v2697 = vand.u32 %v1426, 2139095040
      %v2698 = vshrl.u32 %v2697, 23
      %v2699 = vsub.s32 %v2698, 127
      %v2700 = vand.u32 2147483647, %v1426
      %v2701 = vand.u32 %v2700, 8388607
      %v2702 = vor.u32 %v2701, 8388608
      %v2703 = vsub.s32 0, %v2702
      %v2704 = vadd.s32 %v2699, 1
      %vm2705 = vcmp.gt.s32.totalorder %v2704, 0
      %v2706 = vsel %vm2705, %v2704, 0
      %v2707 = vshrl.u32 %v2706, 5
      %v2708 = vand.u32 %v2706, 31
      %v2709 = vsub.s32 32, %v2708
      %v2710 = vshrl.u32 683565275, %v2709
      %v2711 = vshll.u32 683565275, %v2708
      %v2712 = vshrl.u32 2475754826, %v2709
      %v2713 = vor.u32 %v2711, %v2712
      %v2714 = vshll.u32 2475754826, %v2708
      %v2715 = vshrl.u32 2131351028, %v2709
      %v2716 = vor.u32 %v2714, %v2715
      %v2717 = vshll.u32 2131351028, %v2708
      %v2718 = vshrl.u32 2102212464, %v2709
      %v2719 = vor.u32 %v2717, %v2718
      %v2720 = vshll.u32 2102212464, %v2708
      %v2721 = vshrl.u32 920167782, %v2709
      %v2722 = vor.u32 %v2720, %v2721
      %v2723 = vshll.u32 920167782, %v2708
      %v2724 = vshrl.u32 1326507024, %v2709
      %v2725 = vor.u32 %v2723, %v2724
      %vm2726 = vcmp.lt.s32.totalorder %v2707, 1
      %vm2727 = vcmp.lt.s32.totalorder %v2707, 2
      %vm2728 = vcmp.lt.s32.totalorder %v2707, 3
      %vm2729 = vcmp.lt.s32.totalorder %v2707, 4
      %v2730 = vsel %vm2726, %v2710, %v2713
      %v2731 = vsel %vm2729, %v2719, 2102212464
      %v2732 = vsel %vm2728, %v2716, %v2731
      %v2733 = vsel %vm2727, %v2730, %v2732
      %v2734 = vsel %vm2726, %v2713, %v2716
      %v2735 = vsel %vm2729, %v2722, 920167782
      %v2736 = vsel %vm2728, %v2719, %v2735
      %v2737 = vsel %vm2727, %v2734, %v2736
      %v2738 = vsel %vm2726, %v2716, %v2719
      %v2739 = vsel %vm2729, %v2725, 1326507024
      %v2740 = vsel %vm2728, %v2722, %v2739
      %v2741 = vsel %vm2727, %v2738, %v2740
      %v2742 = vshll.u32 %v2702, 8
      %v2743 = vmul.u32.u64.compose %v2742, %v2741
      %v2744 = vextract.low.u32 %v2743
      %v2745 = vextract.high.u32 %v2743
      %v2746 = vmul.u32.u64.compose %v2742, %v2737
      %v2747 = vextract.low.u32 %v2746
      %v2748 = vextract.high.u32 %v2746
      %v2749 = vmul.u32 %v2742, %v2733
      %v2750 = vadd.s32 %v2745, %v2747
      %vm2751 = vc.u32 %v2745, %v2747
      %v2752 = vadd.s32 %v2748, 1
      %v2753 = vsel %vm2751, %v2752, %v2748
      %v2754 = vadd.s32 %v2749, %v2753
      %v2755 = vadd.s32 %v2754, 536870912
      %v2756 = vshrl.u32 %v2755, 30
      %v2757 = vshll.u32 %v2756, 30
      %v2758 = vsub.s32 %v2754, %v2757
      %vm2759 = vcmp.lt.s32.totalorder %v2758, 0
      %v2760 = vsub.s32 0, %v2758
      %v2761 = vsel %vm2759, %v2760, %v2758
      %v2762 = vclz %v2761
      %v2763 = vsub.s32 %v2762, 2
      %vm2764 = vcmp.gt.s32.totalorder 0, %v2763
      %v2765 = vsel %vm2764, 0, %v2763
      %v2766 = vsub.s32 32, %v2765
      %v2767 = vshll.u32 %v2758, %v2765
      %v2768 = vshrl.u32 %v2750, %v2766
      %v2769 = vor.u32 %v2767, %v2768
      %v2770 = vsub.s32 4294967266, %v2765
      %v2771 = vadd.s32 %v2770, 127
      %v2772 = vshll.u32 %v2771, 23
      %v2773 = vor.u32 4788187, %v2772
      %v2774 = vand.u32 2147483647, %v2773
      %v2776 = vcvt.s32.f32 %v2769
      %v2777 = vmul.f32 %v2776, %v2774
      %v2778 = vxor.u32 %v2777, 2147483648
      %v2779 = vsel %vm2696, %v2778, %v2777
      %v2780 = vsub.s32 4, %v2756
      %v2781 = vsel %vm2696, %v2780, %v2756
      %v2782 = vsel %vm2695, %v1426, %v2779
      %v2783 = vsel %vm2695, 0, %v2781
      %v2784 = vcosq.f32.pop %v2782
      %v2785 = vsinq.f32.pop %v2782
      %vm2786 = vweird.f32 %v1426
      %v2787 = vadd.s32 %v2783, 3
      %v2788 = vand.u32 %v2787, 3
      %vm2789 = vcmp.lt.s32.totalorder %v2788, 2
      %vm2790 = vcmp.eq.s32.totalorder %v2788, 0
      %v2791 = vxor.u32 %v2785, 2147483648
      %v2792 = vsel %vm2790, %v2784, %v2791
      %vm2793 = vcmp.eq.s32.totalorder %v2788, 2
      %v2794 = vxor.u32 %v2784, 2147483648
      %v2795 = vsel %vm2793, %v2794, %v2785
      %v2796 = vsel %vm2789, %v2792, %v2795
      %v2797 = vsel %vm2786, nan, %v2796
      %v2798 = vand.u32 2147483647, %v1427
      %vm2799 = vcmp.le.f32.partialorder %v2798, 0.7853982
      %vm2800 = vcmp.lt.s32.totalorder %v1427, 0
      %v2801 = vand.u32 %v1427, 2139095040
      %v2802 = vshrl.u32 %v2801, 23
      %v2803 = vsub.s32 %v2802, 127
      %v2804 = vand.u32 2147483647, %v1427
      %v2805 = vand.u32 %v2804, 8388607
      %v2806 = vor.u32 %v2805, 8388608
      %v2807 = vsub.s32 0, %v2806
      %v2808 = vadd.s32 %v2803, 1
      %vm2809 = vcmp.gt.s32.totalorder %v2808, 0
      %v2810 = vsel %vm2809, %v2808, 0
      %v2811 = vshrl.u32 %v2810, 5
      %v2812 = vand.u32 %v2810, 31
      %v2813 = vsub.s32 32, %v2812
      %v2814 = vshrl.u32 683565275, %v2813
      %v2815 = vshll.u32 683565275, %v2812
      %v2816 = vshrl.u32 2475754826, %v2813
      %v2817 = vor.u32 %v2815, %v2816
      %v2818 = vshll.u32 2475754826, %v2812
      %v2819 = vshrl.u32 2131351028, %v2813
      %v2820 = vor.u32 %v2818, %v2819
      %v2821 = vshll.u32 2131351028, %v2812
      %v2822 = vshrl.u32 2102212464, %v2813
      %v2823 = vor.u32 %v2821, %v2822
      %v2824 = vshll.u32 2102212464, %v2812
      %v2825 = vshrl.u32 920167782, %v2813
      %v2826 = vor.u32 %v2824, %v2825
      %v2827 = vshll.u32 920167782, %v2812
      %v2828 = vshrl.u32 1326507024, %v2813
      %v2829 = vor.u32 %v2827, %v2828
      %vm2830 = vcmp.lt.s32.totalorder %v2811, 1
      %vm2831 = vcmp.lt.s32.totalorder %v2811, 2
      %vm2832 = vcmp.lt.s32.totalorder %v2811, 3
      %vm2833 = vcmp.lt.s32.totalorder %v2811, 4
      %v2834 = vsel %vm2830, %v2814, %v2817
      %v2835 = vsel %vm2833, %v2823, 2102212464
      %v2836 = vsel %vm2832, %v2820, %v2835
      %v2837 = vsel %vm2831, %v2834, %v2836
      %v2838 = vsel %vm2830, %v2817, %v2820
      %v2839 = vsel %vm2833, %v2826, 920167782
      %v2840 = vsel %vm2832, %v2823, %v2839
      %v2841 = vsel %vm2831, %v2838, %v2840
      %v2842 = vsel %vm2830, %v2820, %v2823
      %v2843 = vsel %vm2833, %v2829, 1326507024
      %v2844 = vsel %vm2832, %v2826, %v2843
      %v2845 = vsel %vm2831, %v2842, %v2844
      %v2846 = vshll.u32 %v2806, 8
      %v2847 = vmul.u32.u64.compose %v2846, %v2845
      %v2848 = vextract.low.u32 %v2847
      %v2849 = vextract.high.u32 %v2847
      %v2850 = vmul.u32.u64.compose %v2846, %v2841
      %v2851 = vextract.low.u32 %v2850
      %v2852 = vextract.high.u32 %v2850
      %v2853 = vmul.u32 %v2846, %v2837
      %v2854 = vadd.s32 %v2849, %v2851
      %vm2855 = vc.u32 %v2849, %v2851
      %v2856 = vadd.s32 %v2852, 1
      %v2857 = vsel %vm2855, %v2856, %v2852
      %v2858 = vadd.s32 %v2853, %v2857
      %v2859 = vadd.s32 %v2858, 536870912
      %v2860 = vshrl.u32 %v2859, 30
      %v2861 = vshll.u32 %v2860, 30
      %v2862 = vsub.s32 %v2858, %v2861
      %vm2863 = vcmp.lt.s32.totalorder %v2862, 0
      %v2864 = vsub.s32 0, %v2862
      %v2865 = vsel %vm2863, %v2864, %v2862
      %v2866 = vclz %v2865
      %v2867 = vsub.s32 %v2866, 2
      %vm2868 = vcmp.gt.s32.totalorder 0, %v2867
      %v2869 = vsel %vm2868, 0, %v2867
      %v2870 = vsub.s32 32, %v2869
      %v2871 = vshll.u32 %v2862, %v2869
      %v2872 = vshrl.u32 %v2854, %v2870
      %v2873 = vor.u32 %v2871, %v2872
      %v2874 = vsub.s32 4294967266, %v2869
      %v2875 = vadd.s32 %v2874, 127
      %v2876 = vshll.u32 %v2875, 23
      %v2877 = vor.u32 4788187, %v2876
      %v2878 = vand.u32 2147483647, %v2877
      %v2880 = vcvt.s32.f32 %v2873
      %v2881 = vmul.f32 %v2880, %v2878
      %v2882 = vxor.u32 %v2881, 2147483648
      %v2883 = vsel %vm2800, %v2882, %v2881
      %v2884 = vsub.s32 4, %v2860
      %v2885 = vsel %vm2800, %v2884, %v2860
      %v2886 = vsel %vm2799, %v1427, %v2883
      %v2887 = vsel %vm2799, 0, %v2885
      %v2888 = vcosq.f32.pop %v2886
      %v2889 = vsinq.f32.pop %v2886
      %vm2890 = vweird.f32 %v1427
      %v2891 = vadd.s32 %v2887, 3
      %v2892 = vand.u32 %v2891, 3
      %vm2893 = vcmp.lt.s32.totalorder %v2892, 2
      %vm2894 = vcmp.eq.s32.totalorder %v2892, 0
      %v2895 = vxor.u32 %v2889, 2147483648
      %v2896 = vsel %vm2894, %v2888, %v2895
      %vm2897 = vcmp.eq.s32.totalorder %v2892, 2
      %v2898 = vxor.u32 %v2888, 2147483648
      %v2899 = vsel %vm2897, %v2898, %v2889
      %v2900 = vsel %vm2893, %v2896, %v2899
      %v2901 = vsel %vm2890, nan, %v2900
      %v2902 = vand.u32 2147483647, %v1428
      %vm2903 = vcmp.le.f32.partialorder %v2902, 0.7853982
      %vm2904 = vcmp.lt.s32.totalorder %v1428, 0
      %v2905 = vand.u32 %v1428, 2139095040
      %v2906 = vshrl.u32 %v2905, 23
      %v2907 = vsub.s32 %v2906, 127
      %v2908 = vand.u32 2147483647, %v1428
      %v2909 = vand.u32 %v2908, 8388607
      %v2910 = vor.u32 %v2909, 8388608
      %v2911 = vsub.s32 0, %v2910
      %v2912 = vadd.s32 %v2907, 1
      %vm2913 = vcmp.gt.s32.totalorder %v2912, 0
      %v2914 = vsel %vm2913, %v2912, 0
      %v2915 = vshrl.u32 %v2914, 5
      %v2916 = vand.u32 %v2914, 31
      %v2917 = vsub.s32 32, %v2916
      %v2918 = vshrl.u32 683565275, %v2917
      %v2919 = vshll.u32 683565275, %v2916
      %v2920 = vshrl.u32 2475754826, %v2917
      %v2921 = vor.u32 %v2919, %v2920
      %v2922 = vshll.u32 2475754826, %v2916
      %v2923 = vshrl.u32 2131351028, %v2917
      %v2924 = vor.u32 %v2922, %v2923
      %v2925 = vshll.u32 2131351028, %v2916
      %v2926 = vshrl.u32 2102212464, %v2917
      %v2927 = vor.u32 %v2925, %v2926
      %v2928 = vshll.u32 2102212464, %v2916
      %v2929 = vshrl.u32 920167782, %v2917
      %v2930 = vor.u32 %v2928, %v2929
      %v2931 = vshll.u32 920167782, %v2916
      %v2932 = vshrl.u32 1326507024, %v2917
      %v2933 = vor.u32 %v2931, %v2932
      %vm2934 = vcmp.lt.s32.totalorder %v2915, 1
      %vm2935 = vcmp.lt.s32.totalorder %v2915, 2
      %vm2936 = vcmp.lt.s32.totalorder %v2915, 3
      %vm2937 = vcmp.lt.s32.totalorder %v2915, 4
      %v2938 = vsel %vm2934, %v2918, %v2921
      %v2939 = vsel %vm2937, %v2927, 2102212464
      %v2940 = vsel %vm2936, %v2924, %v2939
      %v2941 = vsel %vm2935, %v2938, %v2940
      %v2942 = vsel %vm2934, %v2921, %v2924
      %v2943 = vsel %vm2937, %v2930, 920167782
      %v2944 = vsel %vm2936, %v2927, %v2943
      %v2945 = vsel %vm2935, %v2942, %v2944
      %v2946 = vsel %vm2934, %v2924, %v2927
      %v2947 = vsel %vm2937, %v2933, 1326507024
      %v2948 = vsel %vm2936, %v2930, %v2947
      %v2949 = vsel %vm2935, %v2946, %v2948
      %v2950 = vshll.u32 %v2910, 8
      %v2951 = vmul.u32.u64.compose %v2950, %v2949
      %v2952 = vextract.low.u32 %v2951
      %v2953 = vextract.high.u32 %v2951
      %v2954 = vmul.u32.u64.compose %v2950, %v2945
      %v2955 = vextract.low.u32 %v2954
      %v2956 = vextract.high.u32 %v2954
      %v2957 = vmul.u32 %v2950, %v2941
      %v2958 = vadd.s32 %v2953, %v2955
      %vm2959 = vc.u32 %v2953, %v2955
      %v2960 = vadd.s32 %v2956, 1
      %v2961 = vsel %vm2959, %v2960, %v2956
      %v2962 = vadd.s32 %v2957, %v2961
      %v2963 = vadd.s32 %v2962, 536870912
      %v2964 = vshrl.u32 %v2963, 30
      %v2965 = vshll.u32 %v2964, 30
      %v2966 = vsub.s32 %v2962, %v2965
      %vm2967 = vcmp.lt.s32.totalorder %v2966, 0
      %v2968 = vsub.s32 0, %v2966
      %v2969 = vsel %vm2967, %v2968, %v2966
      %v2970 = vclz %v2969
      %v2971 = vsub.s32 %v2970, 2
      %vm2972 = vcmp.gt.s32.totalorder 0, %v2971
      %v2973 = vsel %vm2972, 0, %v2971
      %v2974 = vsub.s32 32, %v2973
      %v2975 = vshll.u32 %v2966, %v2973
      %v2976 = vshrl.u32 %v2958, %v2974
      %v2977 = vor.u32 %v2975, %v2976
      %v2978 = vsub.s32 4294967266, %v2973
      %v2979 = vadd.s32 %v2978, 127
      %v2980 = vshll.u32 %v2979, 23
      %v2981 = vor.u32 4788187, %v2980
      %v2982 = vand.u32 2147483647, %v2981
      %v2984 = vcvt.s32.f32 %v2977
      %v2985 = vmul.f32 %v2984, %v2982
      %v2986 = vxor.u32 %v2985, 2147483648
      %v2987 = vsel %vm2904, %v2986, %v2985
      %v2988 = vsub.s32 4, %v2964
      %v2989 = vsel %vm2904, %v2988, %v2964
      %v2990 = vsel %vm2903, %v1428, %v2987
      %v2991 = vsel %vm2903, 0, %v2989
      %v2992 = vcosq.f32.pop %v2990
      %v2993 = vsinq.f32.pop %v2990
      %vm2994 = vweird.f32 %v1428
      %v2995 = vadd.s32 %v2991, 3
      %v2996 = vand.u32 %v2995, 3
      %vm2997 = vcmp.lt.s32.totalorder %v2996, 2
      %vm2998 = vcmp.eq.s32.totalorder %v2996, 0
      %v2999 = vxor.u32 %v2993, 2147483648
      %v3000 = vsel %vm2998, %v2992, %v2999
      %vm3001 = vcmp.eq.s32.totalorder %v2996, 2
      %v3002 = vxor.u32 %v2992, 2147483648
      %v3003 = vsel %vm3001, %v3002, %v2993
      %v3004 = vsel %vm2997, %v3000, %v3003
      %v3005 = vsel %vm2994, nan, %v3004
      %v3006 = vand.u32 2147483647, %v1429
      %vm3007 = vcmp.le.f32.partialorder %v3006, 0.7853982
      %vm3008 = vcmp.lt.s32.totalorder %v1429, 0
      %v3009 = vand.u32 %v1429, 2139095040
      %v3010 = vshrl.u32 %v3009, 23
      %v3011 = vsub.s32 %v3010, 127
      %v3012 = vand.u32 2147483647, %v1429
      %v3013 = vand.u32 %v3012, 8388607
      %v3014 = vor.u32 %v3013, 8388608
      %v3015 = vsub.s32 0, %v3014
      %v3016 = vadd.s32 %v3011, 1
      %vm3017 = vcmp.gt.s32.totalorder %v3016, 0
      %v3018 = vsel %vm3017, %v3016, 0
      %v3019 = vshrl.u32 %v3018, 5
      %v3020 = vand.u32 %v3018, 31
      %v3021 = vsub.s32 32, %v3020
      %v3022 = vshrl.u32 683565275, %v3021
      %v3023 = vshll.u32 683565275, %v3020
      %v3024 = vshrl.u32 2475754826, %v3021
      %v3025 = vor.u32 %v3023, %v3024
      %v3026 = vshll.u32 2475754826, %v3020
      %v3027 = vshrl.u32 2131351028, %v3021
      %v3028 = vor.u32 %v3026, %v3027
      %v3029 = vshll.u32 2131351028, %v3020
      %v3030 = vshrl.u32 2102212464, %v3021
      %v3031 = vor.u32 %v3029, %v3030
      %v3032 = vshll.u32 2102212464, %v3020
      %v3033 = vshrl.u32 920167782, %v3021
      %v3034 = vor.u32 %v3032, %v3033
      %v3035 = vshll.u32 920167782, %v3020
      %v3036 = vshrl.u32 1326507024, %v3021
      %v3037 = vor.u32 %v3035, %v3036
      %vm3038 = vcmp.lt.s32.totalorder %v3019, 1
      %vm3039 = vcmp.lt.s32.totalorder %v3019, 2
      %vm3040 = vcmp.lt.s32.totalorder %v3019, 3
      %vm3041 = vcmp.lt.s32.totalorder %v3019, 4
      %v3042 = vsel %vm3038, %v3022, %v3025
      %v3043 = vsel %vm3041, %v3031, 2102212464
      %v3044 = vsel %vm3040, %v3028, %v3043
      %v3045 = vsel %vm3039, %v3042, %v3044
      %v3046 = vsel %vm3038, %v3025, %v3028
      %v3047 = vsel %vm3041, %v3034, 920167782
      %v3048 = vsel %vm3040, %v3031, %v3047
      %v3049 = vsel %vm3039, %v3046, %v3048
      %v3050 = vsel %vm3038, %v3028, %v3031
      %v3051 = vsel %vm3041, %v3037, 1326507024
      %v3052 = vsel %vm3040, %v3034, %v3051
      %v3053 = vsel %vm3039, %v3050, %v3052
      %v3054 = vshll.u32 %v3014, 8
      %v3055 = vmul.u32.u64.compose %v3054, %v3053
      %v3056 = vextract.low.u32 %v3055
      %v3057 = vextract.high.u32 %v3055
      %v3058 = vmul.u32.u64.compose %v3054, %v3049
      %v3059 = vextract.low.u32 %v3058
      %v3060 = vextract.high.u32 %v3058
      %v3061 = vmul.u32 %v3054, %v3045
      %v3062 = vadd.s32 %v3057, %v3059
      %vm3063 = vc.u32 %v3057, %v3059
      %v3064 = vadd.s32 %v3060, 1
      %v3065 = vsel %vm3063, %v3064, %v3060
      %v3066 = vadd.s32 %v3061, %v3065
      %v3067 = vadd.s32 %v3066, 536870912
      %v3068 = vshrl.u32 %v3067, 30
      %v3069 = vshll.u32 %v3068, 30
      %v3070 = vsub.s32 %v3066, %v3069
      %vm3071 = vcmp.lt.s32.totalorder %v3070, 0
      %v3072 = vsub.s32 0, %v3070
      %v3073 = vsel %vm3071, %v3072, %v3070
      %v3074 = vclz %v3073
      %v3075 = vsub.s32 %v3074, 2
      %vm3076 = vcmp.gt.s32.totalorder 0, %v3075
      %v3077 = vsel %vm3076, 0, %v3075
      %v3078 = vsub.s32 32, %v3077
      %v3079 = vshll.u32 %v3070, %v3077
      %v3080 = vshrl.u32 %v3062, %v3078
      %v3081 = vor.u32 %v3079, %v3080
      %v3082 = vsub.s32 4294967266, %v3077
      %v3083 = vadd.s32 %v3082, 127
      %v3084 = vshll.u32 %v3083, 23
      %v3085 = vor.u32 4788187, %v3084
      %v3086 = vand.u32 2147483647, %v3085
      %v3088 = vcvt.s32.f32 %v3081
      %v3089 = vmul.f32 %v3088, %v3086
      %v3090 = vxor.u32 %v3089, 2147483648
      %v3091 = vsel %vm3008, %v3090, %v3089
      %v3092 = vsub.s32 4, %v3068
      %v3093 = vsel %vm3008, %v3092, %v3068
      %v3094 = vsel %vm3007, %v1429, %v3091
      %v3095 = vsel %vm3007, 0, %v3093
      %v3096 = vcosq.f32.pop %v3094
      %v3097 = vsinq.f32.pop %v3094
      %vm3098 = vweird.f32 %v1429
      %v3099 = vadd.s32 %v3095, 3
      %v3100 = vand.u32 %v3099, 3
      %vm3101 = vcmp.lt.s32.totalorder %v3100, 2
      %vm3102 = vcmp.eq.s32.totalorder %v3100, 0
      %v3103 = vxor.u32 %v3097, 2147483648
      %v3104 = vsel %vm3102, %v3096, %v3103
      %vm3105 = vcmp.eq.s32.totalorder %v3100, 2
      %v3106 = vxor.u32 %v3096, 2147483648
      %v3107 = vsel %vm3105, %v3106, %v3097
      %v3108 = vsel %vm3101, %v3104, %v3107
      %v3109 = vsel %vm3098, nan, %v3108
      %v3110 = vand.u32 2147483647, %v1430
      %vm3111 = vcmp.le.f32.partialorder %v3110, 0.7853982
      %vm3112 = vcmp.lt.s32.totalorder %v1430, 0
      %v3113 = vand.u32 %v1430, 2139095040
      %v3114 = vshrl.u32 %v3113, 23
      %v3115 = vsub.s32 %v3114, 127
      %v3116 = vand.u32 2147483647, %v1430
      %v3117 = vand.u32 %v3116, 8388607
      %v3118 = vor.u32 %v3117, 8388608
      %v3119 = vsub.s32 0, %v3118
      %v3120 = vadd.s32 %v3115, 1
      %vm3121 = vcmp.gt.s32.totalorder %v3120, 0
      %v3122 = vsel %vm3121, %v3120, 0
      %v3123 = vshrl.u32 %v3122, 5
      %v3124 = vand.u32 %v3122, 31
      %v3125 = vsub.s32 32, %v3124
      %v3126 = vshrl.u32 683565275, %v3125
      %v3127 = vshll.u32 683565275, %v3124
      %v3128 = vshrl.u32 2475754826, %v3125
      %v3129 = vor.u32 %v3127, %v3128
      %v3130 = vshll.u32 2475754826, %v3124
      %v3131 = vshrl.u32 2131351028, %v3125
      %v3132 = vor.u32 %v3130, %v3131
      %v3133 = vshll.u32 2131351028, %v3124
      %v3134 = vshrl.u32 2102212464, %v3125
      %v3135 = vor.u32 %v3133, %v3134
      %v3136 = vshll.u32 2102212464, %v3124
      %v3137 = vshrl.u32 920167782, %v3125
      %v3138 = vor.u32 %v3136, %v3137
      %v3139 = vshll.u32 920167782, %v3124
      %v3140 = vshrl.u32 1326507024, %v3125
      %v3141 = vor.u32 %v3139, %v3140
      %vm3142 = vcmp.lt.s32.totalorder %v3123, 1
      %vm3143 = vcmp.lt.s32.totalorder %v3123, 2
      %vm3144 = vcmp.lt.s32.totalorder %v3123, 3
      %vm3145 = vcmp.lt.s32.totalorder %v3123, 4
      %v3146 = vsel %vm3142, %v3126, %v3129
      %v3147 = vsel %vm3145, %v3135, 2102212464
      %v3148 = vsel %vm3144, %v3132, %v3147
      %v3149 = vsel %vm3143, %v3146, %v3148
      %v3150 = vsel %vm3142, %v3129, %v3132
      %v3151 = vsel %vm3145, %v3138, 920167782
      %v3152 = vsel %vm3144, %v3135, %v3151
      %v3153 = vsel %vm3143, %v3150, %v3152
      %v3154 = vsel %vm3142, %v3132, %v3135
      %v3155 = vsel %vm3145, %v3141, 1326507024
      %v3156 = vsel %vm3144, %v3138, %v3155
      %v3157 = vsel %vm3143, %v3154, %v3156
      %v3158 = vshll.u32 %v3118, 8
      %v3159 = vmul.u32.u64.compose %v3158, %v3157
      %v3160 = vextract.low.u32 %v3159
      %v3161 = vextract.high.u32 %v3159
      %v3162 = vmul.u32.u64.compose %v3158, %v3153
      %v3163 = vextract.low.u32 %v3162
      %v3164 = vextract.high.u32 %v3162
      %v3165 = vmul.u32 %v3158, %v3149
      %v3166 = vadd.s32 %v3161, %v3163
      %vm3167 = vc.u32 %v3161, %v3163
      %v3168 = vadd.s32 %v3164, 1
      %v3169 = vsel %vm3167, %v3168, %v3164
      %v3170 = vadd.s32 %v3165, %v3169
      %v3171 = vadd.s32 %v3170, 536870912
      %v3172 = vshrl.u32 %v3171, 30
      %v3173 = vshll.u32 %v3172, 30
      %v3174 = vsub.s32 %v3170, %v3173
      %vm3175 = vcmp.lt.s32.totalorder %v3174, 0
      %v3176 = vsub.s32 0, %v3174
      %v3177 = vsel %vm3175, %v3176, %v3174
      %v3178 = vclz %v3177
      %v3179 = vsub.s32 %v3178, 2
      %vm3180 = vcmp.gt.s32.totalorder 0, %v3179
      %v3181 = vsel %vm3180, 0, %v3179
      %v3182 = vsub.s32 32, %v3181
      %v3183 = vshll.u32 %v3174, %v3181
      %v3184 = vshrl.u32 %v3166, %v3182
      %v3185 = vor.u32 %v3183, %v3184
      %v3186 = vsub.s32 4294967266, %v3181
      %v3187 = vadd.s32 %v3186, 127
      %v3188 = vshll.u32 %v3187, 23
      %v3189 = vor.u32 4788187, %v3188
      %v3190 = vand.u32 2147483647, %v3189
      %v3192 = vcvt.s32.f32 %v3185
      %v3193 = vmul.f32 %v3192, %v3190
      %v3194 = vxor.u32 %v3193, 2147483648
      %v3195 = vsel %vm3112, %v3194, %v3193
      %v3196 = vsub.s32 4, %v3172
      %v3197 = vsel %vm3112, %v3196, %v3172
      %v3198 = vsel %vm3111, %v1430, %v3195
      %v3199 = vsel %vm3111, 0, %v3197
      %v3200 = vcosq.f32.pop %v3198
      %v3201 = vsinq.f32.pop %v3198
      %vm3202 = vweird.f32 %v1430
      %v3203 = vadd.s32 %v3199, 3
      %v3204 = vand.u32 %v3203, 3
      %vm3205 = vcmp.lt.s32.totalorder %v3204, 2
      %vm3206 = vcmp.eq.s32.totalorder %v3204, 0
      %v3207 = vxor.u32 %v3201, 2147483648
      %v3208 = vsel %vm3206, %v3200, %v3207
      %vm3209 = vcmp.eq.s32.totalorder %v3204, 2
      %v3210 = vxor.u32 %v3200, 2147483648
      %v3211 = vsel %vm3209, %v3210, %v3201
      %v3212 = vsel %vm3205, %v3208, %v3211
      %v3213 = vsel %vm3202, nan, %v3212
      %v3214 = vand.u32 2147483647, %v1431
      %vm3215 = vcmp.le.f32.partialorder %v3214, 0.7853982
      %vm3216 = vcmp.lt.s32.totalorder %v1431, 0
      %v3217 = vand.u32 %v1431, 2139095040
      %v3218 = vshrl.u32 %v3217, 23
      %v3219 = vsub.s32 %v3218, 127
      %v3220 = vand.u32 2147483647, %v1431
      %v3221 = vand.u32 %v3220, 8388607
      %v3222 = vor.u32 %v3221, 8388608
      %v3223 = vsub.s32 0, %v3222
      %v3224 = vadd.s32 %v3219, 1
      %vm3225 = vcmp.gt.s32.totalorder %v3224, 0
      %v3226 = vsel %vm3225, %v3224, 0
      %v3227 = vshrl.u32 %v3226, 5
      %v3228 = vand.u32 %v3226, 31
      %v3229 = vsub.s32 32, %v3228
      %v3230 = vshrl.u32 683565275, %v3229
      %v3231 = vshll.u32 683565275, %v3228
      %v3232 = vshrl.u32 2475754826, %v3229
      %v3233 = vor.u32 %v3231, %v3232
      %v3234 = vshll.u32 2475754826, %v3228
      %v3235 = vshrl.u32 2131351028, %v3229
      %v3236 = vor.u32 %v3234, %v3235
      %v3237 = vshll.u32 2131351028, %v3228
      %v3238 = vshrl.u32 2102212464, %v3229
      %v3239 = vor.u32 %v3237, %v3238
      %v3240 = vshll.u32 2102212464, %v3228
      %v3241 = vshrl.u32 920167782, %v3229
      %v3242 = vor.u32 %v3240, %v3241
      %v3243 = vshll.u32 920167782, %v3228
      %v3244 = vshrl.u32 1326507024, %v3229
      %v3245 = vor.u32 %v3243, %v3244
      %vm3246 = vcmp.lt.s32.totalorder %v3227, 1
      %vm3247 = vcmp.lt.s32.totalorder %v3227, 2
      %vm3248 = vcmp.lt.s32.totalorder %v3227, 3
      %vm3249 = vcmp.lt.s32.totalorder %v3227, 4
      %v3250 = vsel %vm3246, %v3230, %v3233
      %v3251 = vsel %vm3249, %v3239, 2102212464
      %v3252 = vsel %vm3248, %v3236, %v3251
      %v3253 = vsel %vm3247, %v3250, %v3252
      %v3254 = vsel %vm3246, %v3233, %v3236
      %v3255 = vsel %vm3249, %v3242, 920167782
      %v3256 = vsel %vm3248, %v3239, %v3255
      %v3257 = vsel %vm3247, %v3254, %v3256
      %v3258 = vsel %vm3246, %v3236, %v3239
      %v3259 = vsel %vm3249, %v3245, 1326507024
      %v3260 = vsel %vm3248, %v3242, %v3259
      %v3261 = vsel %vm3247, %v3258, %v3260
      %v3262 = vshll.u32 %v3222, 8
      %v3263 = vmul.u32.u64.compose %v3262, %v3261
      %v3264 = vextract.low.u32 %v3263
      %v3265 = vextract.high.u32 %v3263
      %v3266 = vmul.u32.u64.compose %v3262, %v3257
      %v3267 = vextract.low.u32 %v3266
      %v3268 = vextract.high.u32 %v3266
      %v3269 = vmul.u32 %v3262, %v3253
      %v3270 = vadd.s32 %v3265, %v3267
      %vm3271 = vc.u32 %v3265, %v3267
      %v3272 = vadd.s32 %v3268, 1
      %v3273 = vsel %vm3271, %v3272, %v3268
      %v3274 = vadd.s32 %v3269, %v3273
      %v3275 = vadd.s32 %v3274, 536870912
      %v3276 = vshrl.u32 %v3275, 30
      %v3277 = vshll.u32 %v3276, 30
      %v3278 = vsub.s32 %v3274, %v3277
      %vm3279 = vcmp.lt.s32.totalorder %v3278, 0
      %v3280 = vsub.s32 0, %v3278
      %v3281 = vsel %vm3279, %v3280, %v3278
      %v3282 = vclz %v3281
      %v3283 = vsub.s32 %v3282, 2
      %vm3284 = vcmp.gt.s32.totalorder 0, %v3283
      %v3285 = vsel %vm3284, 0, %v3283
      %v3286 = vsub.s32 32, %v3285
      %v3287 = vshll.u32 %v3278, %v3285
      %v3288 = vshrl.u32 %v3270, %v3286
      %v3289 = vor.u32 %v3287, %v3288
      %v3290 = vsub.s32 4294967266, %v3285
      %v3291 = vadd.s32 %v3290, 127
      %v3292 = vshll.u32 %v3291, 23
      %v3293 = vor.u32 4788187, %v3292
      %v3294 = vand.u32 2147483647, %v3293
      %v3296 = vcvt.s32.f32 %v3289
      %v3297 = vmul.f32 %v3296, %v3294
      %v3298 = vxor.u32 %v3297, 2147483648
      %v3299 = vsel %vm3216, %v3298, %v3297
      %v3300 = vsub.s32 4, %v3276
      %v3301 = vsel %vm3216, %v3300, %v3276
      %v3302 = vsel %vm3215, %v1431, %v3299
      %v3303 = vsel %vm3215, 0, %v3301
      %v3304 = vcosq.f32.pop %v3302
      %v3305 = vsinq.f32.pop %v3302
      %vm3306 = vweird.f32 %v1431
      %v3307 = vadd.s32 %v3303, 3
      %v3308 = vand.u32 %v3307, 3
      %vm3309 = vcmp.lt.s32.totalorder %v3308, 2
      %vm3310 = vcmp.eq.s32.totalorder %v3308, 0
      %v3311 = vxor.u32 %v3305, 2147483648
      %v3312 = vsel %vm3310, %v3304, %v3311
      %vm3313 = vcmp.eq.s32.totalorder %v3308, 2
      %v3314 = vxor.u32 %v3304, 2147483648
      %v3315 = vsel %vm3313, %v3314, %v3305
      %v3316 = vsel %vm3309, %v3312, %v3315
      %v3317 = vsel %vm3306, nan, %v3316
      %v3318 = vand.u32 2147483647, %v1432
      %vm3319 = vcmp.le.f32.partialorder %v3318, 0.7853982
      %vm3320 = vcmp.lt.s32.totalorder %v1432, 0
      %v3321 = vand.u32 %v1432, 2139095040
      %v3322 = vshrl.u32 %v3321, 23
      %v3323 = vsub.s32 %v3322, 127
      %v3324 = vand.u32 2147483647, %v1432
      %v3325 = vand.u32 %v3324, 8388607
      %v3326 = vor.u32 %v3325, 8388608
      %v3327 = vsub.s32 0, %v3326
      %v3328 = vadd.s32 %v3323, 1
      %vm3329 = vcmp.gt.s32.totalorder %v3328, 0
      %v3330 = vsel %vm3329, %v3328, 0
      %v3331 = vshrl.u32 %v3330, 5
      %v3332 = vand.u32 %v3330, 31
      %v3333 = vsub.s32 32, %v3332
      %v3334 = vshrl.u32 683565275, %v3333
      %v3335 = vshll.u32 683565275, %v3332
      %v3336 = vshrl.u32 2475754826, %v3333
      %v3337 = vor.u32 %v3335, %v3336
      %v3338 = vshll.u32 2475754826, %v3332
      %v3339 = vshrl.u32 2131351028, %v3333
      %v3340 = vor.u32 %v3338, %v3339
      %v3341 = vshll.u32 2131351028, %v3332
      %v3342 = vshrl.u32 2102212464, %v3333
      %v3343 = vor.u32 %v3341, %v3342
      %v3344 = vshll.u32 2102212464, %v3332
      %v3345 = vshrl.u32 920167782, %v3333
      %v3346 = vor.u32 %v3344, %v3345
      %v3347 = vshll.u32 920167782, %v3332
      %v3348 = vshrl.u32 1326507024, %v3333
      %v3349 = vor.u32 %v3347, %v3348
      %vm3350 = vcmp.lt.s32.totalorder %v3331, 1
      %vm3351 = vcmp.lt.s32.totalorder %v3331, 2
      %vm3352 = vcmp.lt.s32.totalorder %v3331, 3
      %vm3353 = vcmp.lt.s32.totalorder %v3331, 4
      %v3354 = vsel %vm3350, %v3334, %v3337
      %v3355 = vsel %vm3353, %v3343, 2102212464
      %v3356 = vsel %vm3352, %v3340, %v3355
      %v3357 = vsel %vm3351, %v3354, %v3356
      %v3358 = vsel %vm3350, %v3337, %v3340
      %v3359 = vsel %vm3353, %v3346, 920167782
      %v3360 = vsel %vm3352, %v3343, %v3359
      %v3361 = vsel %vm3351, %v3358, %v3360
      %v3362 = vsel %vm3350, %v3340, %v3343
      %v3363 = vsel %vm3353, %v3349, 1326507024
      %v3364 = vsel %vm3352, %v3346, %v3363
      %v3365 = vsel %vm3351, %v3362, %v3364
      %v3366 = vshll.u32 %v3326, 8
      %v3367 = vmul.u32.u64.compose %v3366, %v3365
      %v3368 = vextract.low.u32 %v3367
      %v3369 = vextract.high.u32 %v3367
      %v3370 = vmul.u32.u64.compose %v3366, %v3361
      %v3371 = vextract.low.u32 %v3370
      %v3372 = vextract.high.u32 %v3370
      %v3373 = vmul.u32 %v3366, %v3357
      %v3374 = vadd.s32 %v3369, %v3371
      %vm3375 = vc.u32 %v3369, %v3371
      %v3376 = vadd.s32 %v3372, 1
      %v3377 = vsel %vm3375, %v3376, %v3372
      %v3378 = vadd.s32 %v3373, %v3377
      %v3379 = vadd.s32 %v3378, 536870912
      %v3380 = vshrl.u32 %v3379, 30
      %v3381 = vshll.u32 %v3380, 30
      %v3382 = vsub.s32 %v3378, %v3381
      %vm3383 = vcmp.lt.s32.totalorder %v3382, 0
      %v3384 = vsub.s32 0, %v3382
      %v3385 = vsel %vm3383, %v3384, %v3382
      %v3386 = vclz %v3385
      %v3387 = vsub.s32 %v3386, 2
      %vm3388 = vcmp.gt.s32.totalorder 0, %v3387
      %v3389 = vsel %vm3388, 0, %v3387
      %v3390 = vsub.s32 32, %v3389
      %v3391 = vshll.u32 %v3382, %v3389
      %v3392 = vshrl.u32 %v3374, %v3390
      %v3393 = vor.u32 %v3391, %v3392
      %v3394 = vsub.s32 4294967266, %v3389
      %v3395 = vadd.s32 %v3394, 127
      %v3396 = vshll.u32 %v3395, 23
      %v3397 = vor.u32 4788187, %v3396
      %v3398 = vand.u32 2147483647, %v3397
      %v3400 = vcvt.s32.f32 %v3393
      %v3401 = vmul.f32 %v3400, %v3398
      %v3402 = vxor.u32 %v3401, 2147483648
      %v3403 = vsel %vm3320, %v3402, %v3401
      %v3404 = vsub.s32 4, %v3380
      %v3405 = vsel %vm3320, %v3404, %v3380
      %v3406 = vsel %vm3319, %v1432, %v3403
      %v3407 = vsel %vm3319, 0, %v3405
      %v3408 = vcosq.f32.pop %v3406
      %v3409 = vsinq.f32.pop %v3406
      %vm3410 = vweird.f32 %v1432
      %v3411 = vadd.s32 %v3407, 3
      %v3412 = vand.u32 %v3411, 3
      %vm3413 = vcmp.lt.s32.totalorder %v3412, 2
      %vm3414 = vcmp.eq.s32.totalorder %v3412, 0
      %v3415 = vxor.u32 %v3409, 2147483648
      %v3416 = vsel %vm3414, %v3408, %v3415
      %vm3417 = vcmp.eq.s32.totalorder %v3412, 2
      %v3418 = vxor.u32 %v3408, 2147483648
      %v3419 = vsel %vm3417, %v3418, %v3409
      %v3420 = vsel %vm3413, %v3416, %v3419
      %v3421 = vsel %vm3410, nan, %v3420
      %v3422 = vand.u32 2147483647, %v1433
      %vm3423 = vcmp.le.f32.partialorder %v3422, 0.7853982
      %vm3424 = vcmp.lt.s32.totalorder %v1433, 0
      %v3425 = vand.u32 %v1433, 2139095040
      %v3426 = vshrl.u32 %v3425, 23
      %v3427 = vsub.s32 %v3426, 127
      %v3428 = vand.u32 2147483647, %v1433
      %v3429 = vand.u32 %v3428, 8388607
      %v3430 = vor.u32 %v3429, 8388608
      %v3431 = vsub.s32 0, %v3430
      %v3432 = vadd.s32 %v3427, 1
      %vm3433 = vcmp.gt.s32.totalorder %v3432, 0
      %v3434 = vsel %vm3433, %v3432, 0
      %v3435 = vshrl.u32 %v3434, 5
      %v3436 = vand.u32 %v3434, 31
      %v3437 = vsub.s32 32, %v3436
      %v3438 = vshrl.u32 683565275, %v3437
      %v3439 = vshll.u32 683565275, %v3436
      %v3440 = vshrl.u32 2475754826, %v3437
      %v3441 = vor.u32 %v3439, %v3440
      %v3442 = vshll.u32 2475754826, %v3436
      %v3443 = vshrl.u32 2131351028, %v3437
      %v3444 = vor.u32 %v3442, %v3443
      %v3445 = vshll.u32 2131351028, %v3436
      %v3446 = vshrl.u32 2102212464, %v3437
      %v3447 = vor.u32 %v3445, %v3446
      %v3448 = vshll.u32 2102212464, %v3436
      %v3449 = vshrl.u32 920167782, %v3437
      %v3450 = vor.u32 %v3448, %v3449
      %v3451 = vshll.u32 920167782, %v3436
      %v3452 = vshrl.u32 1326507024, %v3437
      %v3453 = vor.u32 %v3451, %v3452
      %vm3454 = vcmp.lt.s32.totalorder %v3435, 1
      %vm3455 = vcmp.lt.s32.totalorder %v3435, 2
      %vm3456 = vcmp.lt.s32.totalorder %v3435, 3
      %vm3457 = vcmp.lt.s32.totalorder %v3435, 4
      %v3458 = vsel %vm3454, %v3438, %v3441
      %v3459 = vsel %vm3457, %v3447, 2102212464
      %v3460 = vsel %vm3456, %v3444, %v3459
      %v3461 = vsel %vm3455, %v3458, %v3460
      %v3462 = vsel %vm3454, %v3441, %v3444
      %v3463 = vsel %vm3457, %v3450, 920167782
      %v3464 = vsel %vm3456, %v3447, %v3463
      %v3465 = vsel %vm3455, %v3462, %v3464
      %v3466 = vsel %vm3454, %v3444, %v3447
      %v3467 = vsel %vm3457, %v3453, 1326507024
      %v3468 = vsel %vm3456, %v3450, %v3467
      %v3469 = vsel %vm3455, %v3466, %v3468
      %v3470 = vshll.u32 %v3430, 8
      %v3471 = vmul.u32.u64.compose %v3470, %v3469
      %v3472 = vextract.low.u32 %v3471
      %v3473 = vextract.high.u32 %v3471
      %v3474 = vmul.u32.u64.compose %v3470, %v3465
      %v3475 = vextract.low.u32 %v3474
      %v3476 = vextract.high.u32 %v3474
      %v3477 = vmul.u32 %v3470, %v3461
      %v3478 = vadd.s32 %v3473, %v3475
      %vm3479 = vc.u32 %v3473, %v3475
      %v3480 = vadd.s32 %v3476, 1
      %v3481 = vsel %vm3479, %v3480, %v3476
      %v3482 = vadd.s32 %v3477, %v3481
      %v3483 = vadd.s32 %v3482, 536870912
      %v3484 = vshrl.u32 %v3483, 30
      %v3485 = vshll.u32 %v3484, 30
      %v3486 = vsub.s32 %v3482, %v3485
      %vm3487 = vcmp.lt.s32.totalorder %v3486, 0
      %v3488 = vsub.s32 0, %v3486
      %v3489 = vsel %vm3487, %v3488, %v3486
      %v3490 = vclz %v3489
      %v3491 = vsub.s32 %v3490, 2
      %vm3492 = vcmp.gt.s32.totalorder 0, %v3491
      %v3493 = vsel %vm3492, 0, %v3491
      %v3494 = vsub.s32 32, %v3493
      %v3495 = vshll.u32 %v3486, %v3493
      %v3496 = vshrl.u32 %v3478, %v3494
      %v3497 = vor.u32 %v3495, %v3496
      %v3498 = vsub.s32 4294967266, %v3493
      %v3499 = vadd.s32 %v3498, 127
      %v3500 = vshll.u32 %v3499, 23
      %v3501 = vor.u32 4788187, %v3500
      %v3502 = vand.u32 2147483647, %v3501
      %v3504 = vcvt.s32.f32 %v3497
      %v3505 = vmul.f32 %v3504, %v3502
      %v3506 = vxor.u32 %v3505, 2147483648
      %v3507 = vsel %vm3424, %v3506, %v3505
      %v3508 = vsub.s32 4, %v3484
      %v3509 = vsel %vm3424, %v3508, %v3484
      %v3510 = vsel %vm3423, %v1433, %v3507
      %v3511 = vsel %vm3423, 0, %v3509
      %v3512 = vcosq.f32.pop %v3510
      %v3513 = vsinq.f32.pop %v3510
      %vm3514 = vweird.f32 %v1433
      %v3515 = vadd.s32 %v3511, 3
      %v3516 = vand.u32 %v3515, 3
      %vm3517 = vcmp.lt.s32.totalorder %v3516, 2
      %vm3518 = vcmp.eq.s32.totalorder %v3516, 0
      %v3519 = vxor.u32 %v3513, 2147483648
      %v3520 = vsel %vm3518, %v3512, %v3519
      %vm3521 = vcmp.eq.s32.totalorder %v3516, 2
      %v3522 = vxor.u32 %v3512, 2147483648
      %v3523 = vsel %vm3521, %v3522, %v3513
      %v3524 = vsel %vm3517, %v3520, %v3523
      %v3525 = vsel %vm3514, nan, %v3524
      %v3526 = vand.u32 2147483647, %v1434
      %vm3527 = vcmp.le.f32.partialorder %v3526, 0.7853982
      %vm3528 = vcmp.lt.s32.totalorder %v1434, 0
      %v3529 = vand.u32 %v1434, 2139095040
      %v3530 = vshrl.u32 %v3529, 23
      %v3531 = vsub.s32 %v3530, 127
      %v3532 = vand.u32 2147483647, %v1434
      %v3533 = vand.u32 %v3532, 8388607
      %v3534 = vor.u32 %v3533, 8388608
      %v3535 = vsub.s32 0, %v3534
      %v3536 = vadd.s32 %v3531, 1
      %vm3537 = vcmp.gt.s32.totalorder %v3536, 0
      %v3538 = vsel %vm3537, %v3536, 0
      %v3539 = vshrl.u32 %v3538, 5
      %v3540 = vand.u32 %v3538, 31
      %v3541 = vsub.s32 32, %v3540
      %v3542 = vshrl.u32 683565275, %v3541
      %v3543 = vshll.u32 683565275, %v3540
      %v3544 = vshrl.u32 2475754826, %v3541
      %v3545 = vor.u32 %v3543, %v3544
      %v3546 = vshll.u32 2475754826, %v3540
      %v3547 = vshrl.u32 2131351028, %v3541
      %v3548 = vor.u32 %v3546, %v3547
      %v3549 = vshll.u32 2131351028, %v3540
      %v3550 = vshrl.u32 2102212464, %v3541
      %v3551 = vor.u32 %v3549, %v3550
      %v3552 = vshll.u32 2102212464, %v3540
      %v3553 = vshrl.u32 920167782, %v3541
      %v3554 = vor.u32 %v3552, %v3553
      %v3555 = vshll.u32 920167782, %v3540
      %v3556 = vshrl.u32 1326507024, %v3541
      %v3557 = vor.u32 %v3555, %v3556
      %vm3558 = vcmp.lt.s32.totalorder %v3539, 1
      %vm3559 = vcmp.lt.s32.totalorder %v3539, 2
      %vm3560 = vcmp.lt.s32.totalorder %v3539, 3
      %vm3561 = vcmp.lt.s32.totalorder %v3539, 4
      %v3562 = vsel %vm3558, %v3542, %v3545
      %v3563 = vsel %vm3561, %v3551, 2102212464
      %v3564 = vsel %vm3560, %v3548, %v3563
      %v3565 = vsel %vm3559, %v3562, %v3564
      %v3566 = vsel %vm3558, %v3545, %v3548
      %v3567 = vsel %vm3561, %v3554, 920167782
      %v3568 = vsel %vm3560, %v3551, %v3567
      %v3569 = vsel %vm3559, %v3566, %v3568
      %v3570 = vsel %vm3558, %v3548, %v3551
      %v3571 = vsel %vm3561, %v3557, 1326507024
      %v3572 = vsel %vm3560, %v3554, %v3571
      %v3573 = vsel %vm3559, %v3570, %v3572
      %v3574 = vshll.u32 %v3534, 8
      %v3575 = vmul.u32.u64.compose %v3574, %v3573
      %v3576 = vextract.low.u32 %v3575
      %v3577 = vextract.high.u32 %v3575
      %v3578 = vmul.u32.u64.compose %v3574, %v3569
      %v3579 = vextract.low.u32 %v3578
      %v3580 = vextract.high.u32 %v3578
      %v3581 = vmul.u32 %v3574, %v3565
      %v3582 = vadd.s32 %v3577, %v3579
      %vm3583 = vc.u32 %v3577, %v3579
      %v3584 = vadd.s32 %v3580, 1
      %v3585 = vsel %vm3583, %v3584, %v3580
      %v3586 = vadd.s32 %v3581, %v3585
      %v3587 = vadd.s32 %v3586, 536870912
      %v3588 = vshrl.u32 %v3587, 30
      %v3589 = vshll.u32 %v3588, 30
      %v3590 = vsub.s32 %v3586, %v3589
      %vm3591 = vcmp.lt.s32.totalorder %v3590, 0
      %v3592 = vsub.s32 0, %v3590
      %v3593 = vsel %vm3591, %v3592, %v3590
      %v3594 = vclz %v3593
      %v3595 = vsub.s32 %v3594, 2
      %vm3596 = vcmp.gt.s32.totalorder 0, %v3595
      %v3597 = vsel %vm3596, 0, %v3595
      %v3598 = vsub.s32 32, %v3597
      %v3599 = vshll.u32 %v3590, %v3597
      %v3600 = vshrl.u32 %v3582, %v3598
      %v3601 = vor.u32 %v3599, %v3600
      %v3602 = vsub.s32 4294967266, %v3597
      %v3603 = vadd.s32 %v3602, 127
      %v3604 = vshll.u32 %v3603, 23
      %v3605 = vor.u32 4788187, %v3604
      %v3606 = vand.u32 2147483647, %v3605
      %v3608 = vcvt.s32.f32 %v3601
      %v3609 = vmul.f32 %v3608, %v3606
      %v3610 = vxor.u32 %v3609, 2147483648
      %v3611 = vsel %vm3528, %v3610, %v3609
      %v3612 = vsub.s32 4, %v3588
      %v3613 = vsel %vm3528, %v3612, %v3588
      %v3614 = vsel %vm3527, %v1434, %v3611
      %v3615 = vsel %vm3527, 0, %v3613
      %v3616 = vcosq.f32.pop %v3614
      %v3617 = vsinq.f32.pop %v3614
      %vm3618 = vweird.f32 %v1434
      %v3619 = vadd.s32 %v3615, 3
      %v3620 = vand.u32 %v3619, 3
      %vm3621 = vcmp.lt.s32.totalorder %v3620, 2
      %vm3622 = vcmp.eq.s32.totalorder %v3620, 0
      %v3623 = vxor.u32 %v3617, 2147483648
      %v3624 = vsel %vm3622, %v3616, %v3623
      %vm3625 = vcmp.eq.s32.totalorder %v3620, 2
      %v3626 = vxor.u32 %v3616, 2147483648
      %v3627 = vsel %vm3625, %v3626, %v3617
      %v3628 = vsel %vm3621, %v3624, %v3627
      %v3629 = vsel %vm3618, nan, %v3628
      %v3630 = vand.u32 2147483647, %v1435
      %vm3631 = vcmp.le.f32.partialorder %v3630, 0.7853982
      %vm3632 = vcmp.lt.s32.totalorder %v1435, 0
      %v3633 = vand.u32 %v1435, 2139095040
      %v3634 = vshrl.u32 %v3633, 23
      %v3635 = vsub.s32 %v3634, 127
      %v3636 = vand.u32 2147483647, %v1435
      %v3637 = vand.u32 %v3636, 8388607
      %v3638 = vor.u32 %v3637, 8388608
      %v3639 = vsub.s32 0, %v3638
      %v3640 = vadd.s32 %v3635, 1
      %vm3641 = vcmp.gt.s32.totalorder %v3640, 0
      %v3642 = vsel %vm3641, %v3640, 0
      %v3643 = vshrl.u32 %v3642, 5
      %v3644 = vand.u32 %v3642, 31
      %v3645 = vsub.s32 32, %v3644
      %v3646 = vshrl.u32 683565275, %v3645
      %v3647 = vshll.u32 683565275, %v3644
      %v3648 = vshrl.u32 2475754826, %v3645
      %v3649 = vor.u32 %v3647, %v3648
      %v3650 = vshll.u32 2475754826, %v3644
      %v3651 = vshrl.u32 2131351028, %v3645
      %v3652 = vor.u32 %v3650, %v3651
      %v3653 = vshll.u32 2131351028, %v3644
      %v3654 = vshrl.u32 2102212464, %v3645
      %v3655 = vor.u32 %v3653, %v3654
      %v3656 = vshll.u32 2102212464, %v3644
      %v3657 = vshrl.u32 920167782, %v3645
      %v3658 = vor.u32 %v3656, %v3657
      %v3659 = vshll.u32 920167782, %v3644
      %v3660 = vshrl.u32 1326507024, %v3645
      %v3661 = vor.u32 %v3659, %v3660
      %vm3662 = vcmp.lt.s32.totalorder %v3643, 1
      %vm3663 = vcmp.lt.s32.totalorder %v3643, 2
      %vm3664 = vcmp.lt.s32.totalorder %v3643, 3
      %vm3665 = vcmp.lt.s32.totalorder %v3643, 4
      %v3666 = vsel %vm3662, %v3646, %v3649
      %v3667 = vsel %vm3665, %v3655, 2102212464
      %v3668 = vsel %vm3664, %v3652, %v3667
      %v3669 = vsel %vm3663, %v3666, %v3668
      %v3670 = vsel %vm3662, %v3649, %v3652
      %v3671 = vsel %vm3665, %v3658, 920167782
      %v3672 = vsel %vm3664, %v3655, %v3671
      %v3673 = vsel %vm3663, %v3670, %v3672
      %v3674 = vsel %vm3662, %v3652, %v3655
      %v3675 = vsel %vm3665, %v3661, 1326507024
      %v3676 = vsel %vm3664, %v3658, %v3675
      %v3677 = vsel %vm3663, %v3674, %v3676
      %v3678 = vshll.u32 %v3638, 8
      %v3679 = vmul.u32.u64.compose %v3678, %v3677
      %v3680 = vextract.low.u32 %v3679
      %v3681 = vextract.high.u32 %v3679
      %v3682 = vmul.u32.u64.compose %v3678, %v3673
      %v3683 = vextract.low.u32 %v3682
      %v3684 = vextract.high.u32 %v3682
      %v3685 = vmul.u32 %v3678, %v3669
      %v3686 = vadd.s32 %v3681, %v3683
      %vm3687 = vc.u32 %v3681, %v3683
      %v3688 = vadd.s32 %v3684, 1
      %v3689 = vsel %vm3687, %v3688, %v3684
      %v3690 = vadd.s32 %v3685, %v3689
      %v3691 = vadd.s32 %v3690, 536870912
      %v3692 = vshrl.u32 %v3691, 30
      %v3693 = vshll.u32 %v3692, 30
      %v3694 = vsub.s32 %v3690, %v3693
      %vm3695 = vcmp.lt.s32.totalorder %v3694, 0
      %v3696 = vsub.s32 0, %v3694
      %v3697 = vsel %vm3695, %v3696, %v3694
      %v3698 = vclz %v3697
      %v3699 = vsub.s32 %v3698, 2
      %vm3700 = vcmp.gt.s32.totalorder 0, %v3699
      %v3701 = vsel %vm3700, 0, %v3699
      %v3702 = vsub.s32 32, %v3701
      %v3703 = vshll.u32 %v3694, %v3701
      %v3704 = vshrl.u32 %v3686, %v3702
      %v3705 = vor.u32 %v3703, %v3704
      %v3706 = vsub.s32 4294967266, %v3701
      %v3707 = vadd.s32 %v3706, 127
      %v3708 = vshll.u32 %v3707, 23
      %v3709 = vor.u32 4788187, %v3708
      %v3710 = vand.u32 2147483647, %v3709
      %v3712 = vcvt.s32.f32 %v3705
      %v3713 = vmul.f32 %v3712, %v3710
      %v3714 = vxor.u32 %v3713, 2147483648
      %v3715 = vsel %vm3632, %v3714, %v3713
      %v3716 = vsub.s32 4, %v3692
      %v3717 = vsel %vm3632, %v3716, %v3692
      %v3718 = vsel %vm3631, %v1435, %v3715
      %v3719 = vsel %vm3631, 0, %v3717
      %v3720 = vcosq.f32.pop %v3718
      %v3721 = vsinq.f32.pop %v3718
      %vm3722 = vweird.f32 %v1435
      %v3723 = vadd.s32 %v3719, 3
      %v3724 = vand.u32 %v3723, 3
      %vm3725 = vcmp.lt.s32.totalorder %v3724, 2
      %vm3726 = vcmp.eq.s32.totalorder %v3724, 0
      %v3727 = vxor.u32 %v3721, 2147483648
      %v3728 = vsel %vm3726, %v3720, %v3727
      %vm3729 = vcmp.eq.s32.totalorder %v3724, 2
      %v3730 = vxor.u32 %v3720, 2147483648
      %v3731 = vsel %vm3729, %v3730, %v3721
      %v3732 = vsel %vm3725, %v3728, %v3731
      %v3733 = vsel %vm3722, nan, %v3732
      %v3734 = vand.u32 2147483647, %v1436
      %vm3735 = vcmp.le.f32.partialorder %v3734, 0.7853982
      %vm3736 = vcmp.lt.s32.totalorder %v1436, 0
      %v3737 = vand.u32 %v1436, 2139095040
      %v3738 = vshrl.u32 %v3737, 23
      %v3739 = vsub.s32 %v3738, 127
      %v3740 = vand.u32 2147483647, %v1436
      %v3741 = vand.u32 %v3740, 8388607
      %v3742 = vor.u32 %v3741, 8388608
      %v3743 = vsub.s32 0, %v3742
      %v3744 = vadd.s32 %v3739, 1
      %vm3745 = vcmp.gt.s32.totalorder %v3744, 0
      %v3746 = vsel %vm3745, %v3744, 0
      %v3747 = vshrl.u32 %v3746, 5
      %v3748 = vand.u32 %v3746, 31
      %v3749 = vsub.s32 32, %v3748
      %v3750 = vshrl.u32 683565275, %v3749
      %v3751 = vshll.u32 683565275, %v3748
      %v3752 = vshrl.u32 2475754826, %v3749
      %v3753 = vor.u32 %v3751, %v3752
      %v3754 = vshll.u32 2475754826, %v3748
      %v3755 = vshrl.u32 2131351028, %v3749
      %v3756 = vor.u32 %v3754, %v3755
      %v3757 = vshll.u32 2131351028, %v3748
      %v3758 = vshrl.u32 2102212464, %v3749
      %v3759 = vor.u32 %v3757, %v3758
      %v3760 = vshll.u32 2102212464, %v3748
      %v3761 = vshrl.u32 920167782, %v3749
      %v3762 = vor.u32 %v3760, %v3761
      %v3763 = vshll.u32 920167782, %v3748
      %v3764 = vshrl.u32 1326507024, %v3749
      %v3765 = vor.u32 %v3763, %v3764
      %vm3766 = vcmp.lt.s32.totalorder %v3747, 1
      %vm3767 = vcmp.lt.s32.totalorder %v3747, 2
      %vm3768 = vcmp.lt.s32.totalorder %v3747, 3
      %vm3769 = vcmp.lt.s32.totalorder %v3747, 4
      %v3770 = vsel %vm3766, %v3750, %v3753
      %v3771 = vsel %vm3769, %v3759, 2102212464
      %v3772 = vsel %vm3768, %v3756, %v3771
      %v3773 = vsel %vm3767, %v3770, %v3772
      %v3774 = vsel %vm3766, %v3753, %v3756
      %v3775 = vsel %vm3769, %v3762, 920167782
      %v3776 = vsel %vm3768, %v3759, %v3775
      %v3777 = vsel %vm3767, %v3774, %v3776
      %v3778 = vsel %vm3766, %v3756, %v3759
      %v3779 = vsel %vm3769, %v3765, 1326507024
      %v3780 = vsel %vm3768, %v3762, %v3779
      %v3781 = vsel %vm3767, %v3778, %v3780
      %v3782 = vshll.u32 %v3742, 8
      %v3783 = vmul.u32.u64.compose %v3782, %v3781
      %v3784 = vextract.low.u32 %v3783
      %v3785 = vextract.high.u32 %v3783
      %v3786 = vmul.u32.u64.compose %v3782, %v3777
      %v3787 = vextract.low.u32 %v3786
      %v3788 = vextract.high.u32 %v3786
      %v3789 = vmul.u32 %v3782, %v3773
      %v3790 = vadd.s32 %v3785, %v3787
      %vm3791 = vc.u32 %v3785, %v3787
      %v3792 = vadd.s32 %v3788, 1
      %v3793 = vsel %vm3791, %v3792, %v3788
      %v3794 = vadd.s32 %v3789, %v3793
      %v3795 = vadd.s32 %v3794, 536870912
      %v3796 = vshrl.u32 %v3795, 30
      %v3797 = vshll.u32 %v3796, 30
      %v3798 = vsub.s32 %v3794, %v3797
      %vm3799 = vcmp.lt.s32.totalorder %v3798, 0
      %v3800 = vsub.s32 0, %v3798
      %v3801 = vsel %vm3799, %v3800, %v3798
      %v3802 = vclz %v3801
      %v3803 = vsub.s32 %v3802, 2
      %vm3804 = vcmp.gt.s32.totalorder 0, %v3803
      %v3805 = vsel %vm3804, 0, %v3803
      %v3806 = vsub.s32 32, %v3805
      %v3807 = vshll.u32 %v3798, %v3805
      %v3808 = vshrl.u32 %v3790, %v3806
      %v3809 = vor.u32 %v3807, %v3808
      %v3810 = vsub.s32 4294967266, %v3805
      %v3811 = vadd.s32 %v3810, 127
      %v3812 = vshll.u32 %v3811, 23
      %v3813 = vor.u32 4788187, %v3812
      %v3814 = vand.u32 2147483647, %v3813
      %v3816 = vcvt.s32.f32 %v3809
      %v3817 = vmul.f32 %v3816, %v3814
      %v3818 = vxor.u32 %v3817, 2147483648
      %v3819 = vsel %vm3736, %v3818, %v3817
      %v3820 = vsub.s32 4, %v3796
      %v3821 = vsel %vm3736, %v3820, %v3796
      %v3822 = vsel %vm3735, %v1436, %v3819
      %v3823 = vsel %vm3735, 0, %v3821
      %v3824 = vcosq.f32.pop %v3822
      %v3825 = vsinq.f32.pop %v3822
      %vm3826 = vweird.f32 %v1436
      %v3827 = vadd.s32 %v3823, 3
      %v3828 = vand.u32 %v3827, 3
      %vm3829 = vcmp.lt.s32.totalorder %v3828, 2
      %vm3830 = vcmp.eq.s32.totalorder %v3828, 0
      %v3831 = vxor.u32 %v3825, 2147483648
      %v3832 = vsel %vm3830, %v3824, %v3831
      %vm3833 = vcmp.eq.s32.totalorder %v3828, 2
      %v3834 = vxor.u32 %v3824, 2147483648
      %v3835 = vsel %vm3833, %v3834, %v3825
      %v3836 = vsel %vm3829, %v3832, %v3835
      %v3837 = vsel %vm3826, nan, %v3836
      %v3838 = vand.u32 2147483647, %v1437
      %vm3839 = vcmp.le.f32.partialorder %v3838, 0.7853982
      %vm3840 = vcmp.lt.s32.totalorder %v1437, 0
      %v3841 = vand.u32 %v1437, 2139095040
      %v3842 = vshrl.u32 %v3841, 23
      %v3843 = vsub.s32 %v3842, 127
      %v3844 = vand.u32 2147483647, %v1437
      %v3845 = vand.u32 %v3844, 8388607
      %v3846 = vor.u32 %v3845, 8388608
      %v3847 = vsub.s32 0, %v3846
      %v3848 = vadd.s32 %v3843, 1
      %vm3849 = vcmp.gt.s32.totalorder %v3848, 0
      %v3850 = vsel %vm3849, %v3848, 0
      %v3851 = vshrl.u32 %v3850, 5
      %v3852 = vand.u32 %v3850, 31
      %v3853 = vsub.s32 32, %v3852
      %v3854 = vshrl.u32 683565275, %v3853
      %v3855 = vshll.u32 683565275, %v3852
      %v3856 = vshrl.u32 2475754826, %v3853
      %v3857 = vor.u32 %v3855, %v3856
      %v3858 = vshll.u32 2475754826, %v3852
      %v3859 = vshrl.u32 2131351028, %v3853
      %v3860 = vor.u32 %v3858, %v3859
      %v3861 = vshll.u32 2131351028, %v3852
      %v3862 = vshrl.u32 2102212464, %v3853
      %v3863 = vor.u32 %v3861, %v3862
      %v3864 = vshll.u32 2102212464, %v3852
      %v3865 = vshrl.u32 920167782, %v3853
      %v3866 = vor.u32 %v3864, %v3865
      %v3867 = vshll.u32 920167782, %v3852
      %v3868 = vshrl.u32 1326507024, %v3853
      %v3869 = vor.u32 %v3867, %v3868
      %vm3870 = vcmp.lt.s32.totalorder %v3851, 1
      %vm3871 = vcmp.lt.s32.totalorder %v3851, 2
      %vm3872 = vcmp.lt.s32.totalorder %v3851, 3
      %vm3873 = vcmp.lt.s32.totalorder %v3851, 4
      %v3874 = vsel %vm3870, %v3854, %v3857
      %v3875 = vsel %vm3873, %v3863, 2102212464
      %v3876 = vsel %vm3872, %v3860, %v3875
      %v3877 = vsel %vm3871, %v3874, %v3876
      %v3878 = vsel %vm3870, %v3857, %v3860
      %v3879 = vsel %vm3873, %v3866, 920167782
      %v3880 = vsel %vm3872, %v3863, %v3879
      %v3881 = vsel %vm3871, %v3878, %v3880
      %v3882 = vsel %vm3870, %v3860, %v3863
      %v3883 = vsel %vm3873, %v3869, 1326507024
      %v3884 = vsel %vm3872, %v3866, %v3883
      %v3885 = vsel %vm3871, %v3882, %v3884
      %v3886 = vshll.u32 %v3846, 8
      %v3887 = vmul.u32.u64.compose %v3886, %v3885
      %v3888 = vextract.low.u32 %v3887
      %v3889 = vextract.high.u32 %v3887
      %v3890 = vmul.u32.u64.compose %v3886, %v3881
      %v3891 = vextract.low.u32 %v3890
      %v3892 = vextract.high.u32 %v3890
      %v3893 = vmul.u32 %v3886, %v3877
      %v3894 = vadd.s32 %v3889, %v3891
      %vm3895 = vc.u32 %v3889, %v3891
      %v3896 = vadd.s32 %v3892, 1
      %v3897 = vsel %vm3895, %v3896, %v3892
      %v3898 = vadd.s32 %v3893, %v3897
      %v3899 = vadd.s32 %v3898, 536870912
      %v3900 = vshrl.u32 %v3899, 30
      %v3901 = vshll.u32 %v3900, 30
      %v3902 = vsub.s32 %v3898, %v3901
      %vm3903 = vcmp.lt.s32.totalorder %v3902, 0
      %v3904 = vsub.s32 0, %v3902
      %v3905 = vsel %vm3903, %v3904, %v3902
      %v3906 = vclz %v3905
      %v3907 = vsub.s32 %v3906, 2
      %vm3908 = vcmp.gt.s32.totalorder 0, %v3907
      %v3909 = vsel %vm3908, 0, %v3907
      %v3910 = vsub.s32 32, %v3909
      %v3911 = vshll.u32 %v3902, %v3909
      %v3912 = vshrl.u32 %v3894, %v3910
      %v3913 = vor.u32 %v3911, %v3912
      %v3914 = vsub.s32 4294967266, %v3909
      %v3915 = vadd.s32 %v3914, 127
      %v3916 = vshll.u32 %v3915, 23
      %v3917 = vor.u32 4788187, %v3916
      %v3918 = vand.u32 2147483647, %v3917
      %v3920 = vcvt.s32.f32 %v3913
      %v3921 = vmul.f32 %v3920, %v3918
      %v3922 = vxor.u32 %v3921, 2147483648
      %v3923 = vsel %vm3840, %v3922, %v3921
      %v3924 = vsub.s32 4, %v3900
      %v3925 = vsel %vm3840, %v3924, %v3900
      %v3926 = vsel %vm3839, %v1437, %v3923
      %v3927 = vsel %vm3839, 0, %v3925
      %v3928 = vcosq.f32.pop %v3926
      %v3929 = vsinq.f32.pop %v3926
      %vm3930 = vweird.f32 %v1437
      %v3931 = vadd.s32 %v3927, 3
      %v3932 = vand.u32 %v3931, 3
      %vm3933 = vcmp.lt.s32.totalorder %v3932, 2
      %vm3934 = vcmp.eq.s32.totalorder %v3932, 0
      %v3935 = vxor.u32 %v3929, 2147483648
      %v3936 = vsel %vm3934, %v3928, %v3935
      %vm3937 = vcmp.eq.s32.totalorder %v3932, 2
      %v3938 = vxor.u32 %v3928, 2147483648
      %v3939 = vsel %vm3937, %v3938, %v3929
      %v3940 = vsel %vm3933, %v3936, %v3939
      %v3941 = vsel %vm3930, nan, %v3940
      %v3942 = vand.u32 2147483647, %v1438
      %vm3943 = vcmp.le.f32.partialorder %v3942, 0.7853982
      %vm3944 = vcmp.lt.s32.totalorder %v1438, 0
      %v3945 = vand.u32 %v1438, 2139095040
      %v3946 = vshrl.u32 %v3945, 23
      %v3947 = vsub.s32 %v3946, 127
      %v3948 = vand.u32 2147483647, %v1438
      %v3949 = vand.u32 %v3948, 8388607
      %v3950 = vor.u32 %v3949, 8388608
      %v3951 = vsub.s32 0, %v3950
      %v3952 = vadd.s32 %v3947, 1
      %vm3953 = vcmp.gt.s32.totalorder %v3952, 0
      %v3954 = vsel %vm3953, %v3952, 0
      %v3955 = vshrl.u32 %v3954, 5
      %v3956 = vand.u32 %v3954, 31
      %v3957 = vsub.s32 32, %v3956
      %v3958 = vshrl.u32 683565275, %v3957
      %v3959 = vshll.u32 683565275, %v3956
      %v3960 = vshrl.u32 2475754826, %v3957
      %v3961 = vor.u32 %v3959, %v3960
      %v3962 = vshll.u32 2475754826, %v3956
      %v3963 = vshrl.u32 2131351028, %v3957
      %v3964 = vor.u32 %v3962, %v3963
      %v3965 = vshll.u32 2131351028, %v3956
      %v3966 = vshrl.u32 2102212464, %v3957
      %v3967 = vor.u32 %v3965, %v3966
      %v3968 = vshll.u32 2102212464, %v3956
      %v3969 = vshrl.u32 920167782, %v3957
      %v3970 = vor.u32 %v3968, %v3969
      %v3971 = vshll.u32 920167782, %v3956
      %v3972 = vshrl.u32 1326507024, %v3957
      %v3973 = vor.u32 %v3971, %v3972
      %vm3974 = vcmp.lt.s32.totalorder %v3955, 1
      %vm3975 = vcmp.lt.s32.totalorder %v3955, 2
      %vm3976 = vcmp.lt.s32.totalorder %v3955, 3
      %vm3977 = vcmp.lt.s32.totalorder %v3955, 4
      %v3978 = vsel %vm3974, %v3958, %v3961
      %v3979 = vsel %vm3977, %v3967, 2102212464
      %v3980 = vsel %vm3976, %v3964, %v3979
      %v3981 = vsel %vm3975, %v3978, %v3980
      %v3982 = vsel %vm3974, %v3961, %v3964
      %v3983 = vsel %vm3977, %v3970, 920167782
      %v3984 = vsel %vm3976, %v3967, %v3983
      %v3985 = vsel %vm3975, %v3982, %v3984
      %v3986 = vsel %vm3974, %v3964, %v3967
      %v3987 = vsel %vm3977, %v3973, 1326507024
      %v3988 = vsel %vm3976, %v3970, %v3987
      %v3989 = vsel %vm3975, %v3986, %v3988
      %v3990 = vshll.u32 %v3950, 8
      %v3991 = vmul.u32.u64.compose %v3990, %v3989
      %v3992 = vextract.low.u32 %v3991
      %v3993 = vextract.high.u32 %v3991
      %v3994 = vmul.u32.u64.compose %v3990, %v3985
      %v3995 = vextract.low.u32 %v3994
      %v3996 = vextract.high.u32 %v3994
      %v3997 = vmul.u32 %v3990, %v3981
      %v3998 = vadd.s32 %v3993, %v3995
      %vm3999 = vc.u32 %v3993, %v3995
      %v4000 = vadd.s32 %v3996, 1
      %v4001 = vsel %vm3999, %v4000, %v3996
      %v4002 = vadd.s32 %v3997, %v4001
      %v4003 = vadd.s32 %v4002, 536870912
      %v4004 = vshrl.u32 %v4003, 30
      %v4005 = vshll.u32 %v4004, 30
      %v4006 = vsub.s32 %v4002, %v4005
      %vm4007 = vcmp.lt.s32.totalorder %v4006, 0
      %v4008 = vsub.s32 0, %v4006
      %v4009 = vsel %vm4007, %v4008, %v4006
      %v4010 = vclz %v4009
      %v4011 = vsub.s32 %v4010, 2
      %vm4012 = vcmp.gt.s32.totalorder 0, %v4011
      %v4013 = vsel %vm4012, 0, %v4011
      %v4014 = vsub.s32 32, %v4013
      %v4015 = vshll.u32 %v4006, %v4013
      %v4016 = vshrl.u32 %v3998, %v4014
      %v4017 = vor.u32 %v4015, %v4016
      %v4018 = vsub.s32 4294967266, %v4013
      %v4019 = vadd.s32 %v4018, 127
      %v4020 = vshll.u32 %v4019, 23
      %v4021 = vor.u32 4788187, %v4020
      %v4022 = vand.u32 2147483647, %v4021
      %v4024 = vcvt.s32.f32 %v4017
      %v4025 = vmul.f32 %v4024, %v4022
      %v4026 = vxor.u32 %v4025, 2147483648
      %v4027 = vsel %vm3944, %v4026, %v4025
      %v4028 = vsub.s32 4, %v4004
      %v4029 = vsel %vm3944, %v4028, %v4004
      %v4030 = vsel %vm3943, %v1438, %v4027
      %v4031 = vsel %vm3943, 0, %v4029
      %v4032 = vcosq.f32.pop %v4030
      %v4033 = vsinq.f32.pop %v4030
      %vm4034 = vweird.f32 %v1438
      %v4035 = vadd.s32 %v4031, 3
      %v4036 = vand.u32 %v4035, 3
      %vm4037 = vcmp.lt.s32.totalorder %v4036, 2
      %vm4038 = vcmp.eq.s32.totalorder %v4036, 0
      %v4039 = vxor.u32 %v4033, 2147483648
      %v4040 = vsel %vm4038, %v4032, %v4039
      %vm4041 = vcmp.eq.s32.totalorder %v4036, 2
      %v4042 = vxor.u32 %v4032, 2147483648
      %v4043 = vsel %vm4041, %v4042, %v4033
      %v4044 = vsel %vm4037, %v4040, %v4043
      %v4045 = vsel %vm4034, nan, %v4044
      %v4046 = vand.u32 2147483647, %v1439
      %vm4047 = vcmp.le.f32.partialorder %v4046, 0.7853982
      %vm4048 = vcmp.lt.s32.totalorder %v1439, 0
      %v4049 = vand.u32 %v1439, 2139095040
      %v4050 = vshrl.u32 %v4049, 23
      %v4051 = vsub.s32 %v4050, 127
      %v4052 = vand.u32 2147483647, %v1439
      %v4053 = vand.u32 %v4052, 8388607
      %v4054 = vor.u32 %v4053, 8388608
      %v4055 = vsub.s32 0, %v4054
      %v4056 = vadd.s32 %v4051, 1
      %vm4057 = vcmp.gt.s32.totalorder %v4056, 0
      %v4058 = vsel %vm4057, %v4056, 0
      %v4059 = vshrl.u32 %v4058, 5
      %v4060 = vand.u32 %v4058, 31
      %v4061 = vsub.s32 32, %v4060
      %v4062 = vshrl.u32 683565275, %v4061
      %v4063 = vshll.u32 683565275, %v4060
      %v4064 = vshrl.u32 2475754826, %v4061
      %v4065 = vor.u32 %v4063, %v4064
      %v4066 = vshll.u32 2475754826, %v4060
      %v4067 = vshrl.u32 2131351028, %v4061
      %v4068 = vor.u32 %v4066, %v4067
      %v4069 = vshll.u32 2131351028, %v4060
      %v4070 = vshrl.u32 2102212464, %v4061
      %v4071 = vor.u32 %v4069, %v4070
      %v4072 = vshll.u32 2102212464, %v4060
      %v4073 = vshrl.u32 920167782, %v4061
      %v4074 = vor.u32 %v4072, %v4073
      %v4075 = vshll.u32 920167782, %v4060
      %v4076 = vshrl.u32 1326507024, %v4061
      %v4077 = vor.u32 %v4075, %v4076
      %vm4078 = vcmp.lt.s32.totalorder %v4059, 1
      %vm4079 = vcmp.lt.s32.totalorder %v4059, 2
      %vm4080 = vcmp.lt.s32.totalorder %v4059, 3
      %vm4081 = vcmp.lt.s32.totalorder %v4059, 4
      %v4082 = vsel %vm4078, %v4062, %v4065
      %v4083 = vsel %vm4081, %v4071, 2102212464
      %v4084 = vsel %vm4080, %v4068, %v4083
      %v4085 = vsel %vm4079, %v4082, %v4084
      %v4086 = vsel %vm4078, %v4065, %v4068
      %v4087 = vsel %vm4081, %v4074, 920167782
      %v4088 = vsel %vm4080, %v4071, %v4087
      %v4089 = vsel %vm4079, %v4086, %v4088
      %v4090 = vsel %vm4078, %v4068, %v4071
      %v4091 = vsel %vm4081, %v4077, 1326507024
      %v4092 = vsel %vm4080, %v4074, %v4091
      %v4093 = vsel %vm4079, %v4090, %v4092
      %v4094 = vshll.u32 %v4054, 8
      %v4095 = vmul.u32.u64.compose %v4094, %v4093
      %v4096 = vextract.low.u32 %v4095
      %v4097 = vextract.high.u32 %v4095
      %v4098 = vmul.u32.u64.compose %v4094, %v4089
      %v4099 = vextract.low.u32 %v4098
      %v4100 = vextract.high.u32 %v4098
      %v4101 = vmul.u32 %v4094, %v4085
      %v4102 = vadd.s32 %v4097, %v4099
      %vm4103 = vc.u32 %v4097, %v4099
      %v4104 = vadd.s32 %v4100, 1
      %v4105 = vsel %vm4103, %v4104, %v4100
      %v4106 = vadd.s32 %v4101, %v4105
      %v4107 = vadd.s32 %v4106, 536870912
      %v4108 = vshrl.u32 %v4107, 30
      %v4109 = vshll.u32 %v4108, 30
      %v4110 = vsub.s32 %v4106, %v4109
      %vm4111 = vcmp.lt.s32.totalorder %v4110, 0
      %v4112 = vsub.s32 0, %v4110
      %v4113 = vsel %vm4111, %v4112, %v4110
      %v4114 = vclz %v4113
      %v4115 = vsub.s32 %v4114, 2
      %vm4116 = vcmp.gt.s32.totalorder 0, %v4115
      %v4117 = vsel %vm4116, 0, %v4115
      %v4118 = vsub.s32 32, %v4117
      %v4119 = vshll.u32 %v4110, %v4117
      %v4120 = vshrl.u32 %v4102, %v4118
      %v4121 = vor.u32 %v4119, %v4120
      %v4122 = vsub.s32 4294967266, %v4117
      %v4123 = vadd.s32 %v4122, 127
      %v4124 = vshll.u32 %v4123, 23
      %v4125 = vor.u32 4788187, %v4124
      %v4126 = vand.u32 2147483647, %v4125
      %v4128 = vcvt.s32.f32 %v4121
      %v4129 = vmul.f32 %v4128, %v4126
      %v4130 = vxor.u32 %v4129, 2147483648
      %v4131 = vsel %vm4048, %v4130, %v4129
      %v4132 = vsub.s32 4, %v4108
      %v4133 = vsel %vm4048, %v4132, %v4108
      %v4134 = vsel %vm4047, %v1439, %v4131
      %v4135 = vsel %vm4047, 0, %v4133
      %v4136 = vcosq.f32.pop %v4134
      %v4137 = vsinq.f32.pop %v4134
      %vm4138 = vweird.f32 %v1439
      %v4139 = vadd.s32 %v4135, 3
      %v4140 = vand.u32 %v4139, 3
      %vm4141 = vcmp.lt.s32.totalorder %v4140, 2
      %vm4142 = vcmp.eq.s32.totalorder %v4140, 0
      %v4143 = vxor.u32 %v4137, 2147483648
      %v4144 = vsel %vm4142, %v4136, %v4143
      %vm4145 = vcmp.eq.s32.totalorder %v4140, 2
      %v4146 = vxor.u32 %v4136, 2147483648
      %v4147 = vsel %vm4145, %v4146, %v4137
      %v4148 = vsel %vm4141, %v4144, %v4147
      %v4149 = vsel %vm4138, nan, %v4148
      %v4150 = vand.u32 2147483647, %v1440
      %vm4151 = vcmp.le.f32.partialorder %v4150, 0.7853982
      %vm4152 = vcmp.lt.s32.totalorder %v1440, 0
      %v4153 = vand.u32 %v1440, 2139095040
      %v4154 = vshrl.u32 %v4153, 23
      %v4155 = vsub.s32 %v4154, 127
      %v4156 = vand.u32 2147483647, %v1440
      %v4157 = vand.u32 %v4156, 8388607
      %v4158 = vor.u32 %v4157, 8388608
      %v4159 = vsub.s32 0, %v4158
      %v4160 = vadd.s32 %v4155, 1
      %vm4161 = vcmp.gt.s32.totalorder %v4160, 0
      %v4162 = vsel %vm4161, %v4160, 0
      %v4163 = vshrl.u32 %v4162, 5
      %v4164 = vand.u32 %v4162, 31
      %v4165 = vsub.s32 32, %v4164
      %v4166 = vshrl.u32 683565275, %v4165
      %v4167 = vshll.u32 683565275, %v4164
      %v4168 = vshrl.u32 2475754826, %v4165
      %v4169 = vor.u32 %v4167, %v4168
      %v4170 = vshll.u32 2475754826, %v4164
      %v4171 = vshrl.u32 2131351028, %v4165
      %v4172 = vor.u32 %v4170, %v4171
      %v4173 = vshll.u32 2131351028, %v4164
      %v4174 = vshrl.u32 2102212464, %v4165
      %v4175 = vor.u32 %v4173, %v4174
      %v4176 = vshll.u32 2102212464, %v4164
      %v4177 = vshrl.u32 920167782, %v4165
      %v4178 = vor.u32 %v4176, %v4177
      %v4179 = vshll.u32 920167782, %v4164
      %v4180 = vshrl.u32 1326507024, %v4165
      %v4181 = vor.u32 %v4179, %v4180
      %vm4182 = vcmp.lt.s32.totalorder %v4163, 1
      %vm4183 = vcmp.lt.s32.totalorder %v4163, 2
      %vm4184 = vcmp.lt.s32.totalorder %v4163, 3
      %vm4185 = vcmp.lt.s32.totalorder %v4163, 4
      %v4186 = vsel %vm4182, %v4166, %v4169
      %v4187 = vsel %vm4185, %v4175, 2102212464
      %v4188 = vsel %vm4184, %v4172, %v4187
      %v4189 = vsel %vm4183, %v4186, %v4188
      %v4190 = vsel %vm4182, %v4169, %v4172
      %v4191 = vsel %vm4185, %v4178, 920167782
      %v4192 = vsel %vm4184, %v4175, %v4191
      %v4193 = vsel %vm4183, %v4190, %v4192
      %v4194 = vsel %vm4182, %v4172, %v4175
      %v4195 = vsel %vm4185, %v4181, 1326507024
      %v4196 = vsel %vm4184, %v4178, %v4195
      %v4197 = vsel %vm4183, %v4194, %v4196
      %v4198 = vshll.u32 %v4158, 8
      %v4199 = vmul.u32.u64.compose %v4198, %v4197
      %v4200 = vextract.low.u32 %v4199
      %v4201 = vextract.high.u32 %v4199
      %v4202 = vmul.u32.u64.compose %v4198, %v4193
      %v4203 = vextract.low.u32 %v4202
      %v4204 = vextract.high.u32 %v4202
      %v4205 = vmul.u32 %v4198, %v4189
      %v4206 = vadd.s32 %v4201, %v4203
      %vm4207 = vc.u32 %v4201, %v4203
      %v4208 = vadd.s32 %v4204, 1
      %v4209 = vsel %vm4207, %v4208, %v4204
      %v4210 = vadd.s32 %v4205, %v4209
      %v4211 = vadd.s32 %v4210, 536870912
      %v4212 = vshrl.u32 %v4211, 30
      %v4213 = vshll.u32 %v4212, 30
      %v4214 = vsub.s32 %v4210, %v4213
      %vm4215 = vcmp.lt.s32.totalorder %v4214, 0
      %v4216 = vsub.s32 0, %v4214
      %v4217 = vsel %vm4215, %v4216, %v4214
      %v4218 = vclz %v4217
      %v4219 = vsub.s32 %v4218, 2
      %vm4220 = vcmp.gt.s32.totalorder 0, %v4219
      %v4221 = vsel %vm4220, 0, %v4219
      %v4222 = vsub.s32 32, %v4221
      %v4223 = vshll.u32 %v4214, %v4221
      %v4224 = vshrl.u32 %v4206, %v4222
      %v4225 = vor.u32 %v4223, %v4224
      %v4226 = vsub.s32 4294967266, %v4221
      %v4227 = vadd.s32 %v4226, 127
      %v4228 = vshll.u32 %v4227, 23
      %v4229 = vor.u32 4788187, %v4228
      %v4230 = vand.u32 2147483647, %v4229
      %v4232 = vcvt.s32.f32 %v4225
      %v4233 = vmul.f32 %v4232, %v4230
      %v4234 = vxor.u32 %v4233, 2147483648
      %v4235 = vsel %vm4152, %v4234, %v4233
      %v4236 = vsub.s32 4, %v4212
      %v4237 = vsel %vm4152, %v4236, %v4212
      %v4238 = vsel %vm4151, %v1440, %v4235
      %v4239 = vsel %vm4151, 0, %v4237
      %v4240 = vcosq.f32.pop %v4238
      %v4241 = vsinq.f32.pop %v4238
      %vm4242 = vweird.f32 %v1440
      %v4243 = vadd.s32 %v4239, 3
      %v4244 = vand.u32 %v4243, 3
      %vm4245 = vcmp.lt.s32.totalorder %v4244, 2
      %vm4246 = vcmp.eq.s32.totalorder %v4244, 0
      %v4247 = vxor.u32 %v4241, 2147483648
      %v4248 = vsel %vm4246, %v4240, %v4247
      %vm4249 = vcmp.eq.s32.totalorder %v4244, 2
      %v4250 = vxor.u32 %v4240, 2147483648
      %v4251 = vsel %vm4249, %v4250, %v4241
      %v4252 = vsel %vm4245, %v4248, %v4251
      %v4253 = vsel %vm4242, nan, %v4252
      %v4254 = vand.u32 2147483647, %v1441
      %vm4255 = vcmp.le.f32.partialorder %v4254, 0.7853982
      %vm4256 = vcmp.lt.s32.totalorder %v1441, 0
      %v4257 = vand.u32 %v1441, 2139095040
      %v4258 = vshrl.u32 %v4257, 23
      %v4259 = vsub.s32 %v4258, 127
      %v4260 = vand.u32 2147483647, %v1441
      %v4261 = vand.u32 %v4260, 8388607
      %v4262 = vor.u32 %v4261, 8388608
      %v4263 = vsub.s32 0, %v4262
      %v4264 = vadd.s32 %v4259, 1
      %vm4265 = vcmp.gt.s32.totalorder %v4264, 0
      %v4266 = vsel %vm4265, %v4264, 0
      %v4267 = vshrl.u32 %v4266, 5
      %v4268 = vand.u32 %v4266, 31
      %v4269 = vsub.s32 32, %v4268
      %v4270 = vshrl.u32 683565275, %v4269
      %v4271 = vshll.u32 683565275, %v4268
      %v4272 = vshrl.u32 2475754826, %v4269
      %v4273 = vor.u32 %v4271, %v4272
      %v4274 = vshll.u32 2475754826, %v4268
      %v4275 = vshrl.u32 2131351028, %v4269
      %v4276 = vor.u32 %v4274, %v4275
      %v4277 = vshll.u32 2131351028, %v4268
      %v4278 = vshrl.u32 2102212464, %v4269
      %v4279 = vor.u32 %v4277, %v4278
      %v4280 = vshll.u32 2102212464, %v4268
      %v4281 = vshrl.u32 920167782, %v4269
      %v4282 = vor.u32 %v4280, %v4281
      %v4283 = vshll.u32 920167782, %v4268
      %v4284 = vshrl.u32 1326507024, %v4269
      %v4285 = vor.u32 %v4283, %v4284
      %vm4286 = vcmp.lt.s32.totalorder %v4267, 1
      %vm4287 = vcmp.lt.s32.totalorder %v4267, 2
      %vm4288 = vcmp.lt.s32.totalorder %v4267, 3
      %vm4289 = vcmp.lt.s32.totalorder %v4267, 4
      %v4290 = vsel %vm4286, %v4270, %v4273
      %v4291 = vsel %vm4289, %v4279, 2102212464
      %v4292 = vsel %vm4288, %v4276, %v4291
      %v4293 = vsel %vm4287, %v4290, %v4292
      %v4294 = vsel %vm4286, %v4273, %v4276
      %v4295 = vsel %vm4289, %v4282, 920167782
      %v4296 = vsel %vm4288, %v4279, %v4295
      %v4297 = vsel %vm4287, %v4294, %v4296
      %v4298 = vsel %vm4286, %v4276, %v4279
      %v4299 = vsel %vm4289, %v4285, 1326507024
      %v4300 = vsel %vm4288, %v4282, %v4299
      %v4301 = vsel %vm4287, %v4298, %v4300
      %v4302 = vshll.u32 %v4262, 8
      %v4303 = vmul.u32.u64.compose %v4302, %v4301
      %v4304 = vextract.low.u32 %v4303
      %v4305 = vextract.high.u32 %v4303
      %v4306 = vmul.u32.u64.compose %v4302, %v4297
      %v4307 = vextract.low.u32 %v4306
      %v4308 = vextract.high.u32 %v4306
      %v4309 = vmul.u32 %v4302, %v4293
      %v4310 = vadd.s32 %v4305, %v4307
      %vm4311 = vc.u32 %v4305, %v4307
      %v4312 = vadd.s32 %v4308, 1
      %v4313 = vsel %vm4311, %v4312, %v4308
      %v4314 = vadd.s32 %v4309, %v4313
      %v4315 = vadd.s32 %v4314, 536870912
      %v4316 = vshrl.u32 %v4315, 30
      %v4317 = vshll.u32 %v4316, 30
      %v4318 = vsub.s32 %v4314, %v4317
      %vm4319 = vcmp.lt.s32.totalorder %v4318, 0
      %v4320 = vsub.s32 0, %v4318
      %v4321 = vsel %vm4319, %v4320, %v4318
      %v4322 = vclz %v4321
      %v4323 = vsub.s32 %v4322, 2
      %vm4324 = vcmp.gt.s32.totalorder 0, %v4323
      %v4325 = vsel %vm4324, 0, %v4323
      %v4326 = vsub.s32 32, %v4325
      %v4327 = vshll.u32 %v4318, %v4325
      %v4328 = vshrl.u32 %v4310, %v4326
      %v4329 = vor.u32 %v4327, %v4328
      %v4330 = vsub.s32 4294967266, %v4325
      %v4331 = vadd.s32 %v4330, 127
      %v4332 = vshll.u32 %v4331, 23
      %v4333 = vor.u32 4788187, %v4332
      %v4334 = vand.u32 2147483647, %v4333
      %v4336 = vcvt.s32.f32 %v4329
      %v4337 = vmul.f32 %v4336, %v4334
      %v4338 = vxor.u32 %v4337, 2147483648
      %v4339 = vsel %vm4256, %v4338, %v4337
      %v4340 = vsub.s32 4, %v4316
      %v4341 = vsel %vm4256, %v4340, %v4316
      %v4342 = vsel %vm4255, %v1441, %v4339
      %v4343 = vsel %vm4255, 0, %v4341
      %v4344 = vcosq.f32.pop %v4342
      %v4345 = vsinq.f32.pop %v4342
      %vm4346 = vweird.f32 %v1441
      %v4347 = vadd.s32 %v4343, 3
      %v4348 = vand.u32 %v4347, 3
      %vm4349 = vcmp.lt.s32.totalorder %v4348, 2
      %vm4350 = vcmp.eq.s32.totalorder %v4348, 0
      %v4351 = vxor.u32 %v4345, 2147483648
      %v4352 = vsel %vm4350, %v4344, %v4351
      %vm4353 = vcmp.eq.s32.totalorder %v4348, 2
      %v4354 = vxor.u32 %v4344, 2147483648
      %v4355 = vsel %vm4353, %v4354, %v4345
      %v4356 = vsel %vm4349, %v4352, %v4355
      %v4357 = vsel %vm4346, nan, %v4356
      %v4358 = vand.u32 2147483647, %v1442
      %vm4359 = vcmp.le.f32.partialorder %v4358, 0.7853982
      %vm4360 = vcmp.lt.s32.totalorder %v1442, 0
      %v4361 = vand.u32 %v1442, 2139095040
      %v4362 = vshrl.u32 %v4361, 23
      %v4363 = vsub.s32 %v4362, 127
      %v4364 = vand.u32 2147483647, %v1442
      %v4365 = vand.u32 %v4364, 8388607
      %v4366 = vor.u32 %v4365, 8388608
      %v4367 = vsub.s32 0, %v4366
      %v4368 = vadd.s32 %v4363, 1
      %vm4369 = vcmp.gt.s32.totalorder %v4368, 0
      %v4370 = vsel %vm4369, %v4368, 0
      %v4371 = vshrl.u32 %v4370, 5
      %v4372 = vand.u32 %v4370, 31
      %v4373 = vsub.s32 32, %v4372
      %v4374 = vshrl.u32 683565275, %v4373
      %v4375 = vshll.u32 683565275, %v4372
      %v4376 = vshrl.u32 2475754826, %v4373
      %v4377 = vor.u32 %v4375, %v4376
      %v4378 = vshll.u32 2475754826, %v4372
      %v4379 = vshrl.u32 2131351028, %v4373
      %v4380 = vor.u32 %v4378, %v4379
      %v4381 = vshll.u32 2131351028, %v4372
      %v4382 = vshrl.u32 2102212464, %v4373
      %v4383 = vor.u32 %v4381, %v4382
      %v4384 = vshll.u32 2102212464, %v4372
      %v4385 = vshrl.u32 920167782, %v4373
      %v4386 = vor.u32 %v4384, %v4385
      %v4387 = vshll.u32 920167782, %v4372
      %v4388 = vshrl.u32 1326507024, %v4373
      %v4389 = vor.u32 %v4387, %v4388
      %vm4390 = vcmp.lt.s32.totalorder %v4371, 1
      %vm4391 = vcmp.lt.s32.totalorder %v4371, 2
      %vm4392 = vcmp.lt.s32.totalorder %v4371, 3
      %vm4393 = vcmp.lt.s32.totalorder %v4371, 4
      %v4394 = vsel %vm4390, %v4374, %v4377
      %v4395 = vsel %vm4393, %v4383, 2102212464
      %v4396 = vsel %vm4392, %v4380, %v4395
      %v4397 = vsel %vm4391, %v4394, %v4396
      %v4398 = vsel %vm4390, %v4377, %v4380
      %v4399 = vsel %vm4393, %v4386, 920167782
      %v4400 = vsel %vm4392, %v4383, %v4399
      %v4401 = vsel %vm4391, %v4398, %v4400
      %v4402 = vsel %vm4390, %v4380, %v4383
      %v4403 = vsel %vm4393, %v4389, 1326507024
      %v4404 = vsel %vm4392, %v4386, %v4403
      %v4405 = vsel %vm4391, %v4402, %v4404
      %v4406 = vshll.u32 %v4366, 8
      %v4407 = vmul.u32.u64.compose %v4406, %v4405
      %v4408 = vextract.low.u32 %v4407
      %v4409 = vextract.high.u32 %v4407
      %v4410 = vmul.u32.u64.compose %v4406, %v4401
      %v4411 = vextract.low.u32 %v4410
      %v4412 = vextract.high.u32 %v4410
      %v4413 = vmul.u32 %v4406, %v4397
      %v4414 = vadd.s32 %v4409, %v4411
      %vm4415 = vc.u32 %v4409, %v4411
      %v4416 = vadd.s32 %v4412, 1
      %v4417 = vsel %vm4415, %v4416, %v4412
      %v4418 = vadd.s32 %v4413, %v4417
      %v4419 = vadd.s32 %v4418, 536870912
      %v4420 = vshrl.u32 %v4419, 30
      %v4421 = vshll.u32 %v4420, 30
      %v4422 = vsub.s32 %v4418, %v4421
      %vm4423 = vcmp.lt.s32.totalorder %v4422, 0
      %v4424 = vsub.s32 0, %v4422
      %v4425 = vsel %vm4423, %v4424, %v4422
      %v4426 = vclz %v4425
      %v4427 = vsub.s32 %v4426, 2
      %vm4428 = vcmp.gt.s32.totalorder 0, %v4427
      %v4429 = vsel %vm4428, 0, %v4427
      %v4430 = vsub.s32 32, %v4429
      %v4431 = vshll.u32 %v4422, %v4429
      %v4432 = vshrl.u32 %v4414, %v4430
      %v4433 = vor.u32 %v4431, %v4432
      %v4434 = vsub.s32 4294967266, %v4429
      %v4435 = vadd.s32 %v4434, 127
      %v4436 = vshll.u32 %v4435, 23
      %v4437 = vor.u32 4788187, %v4436
      %v4438 = vand.u32 2147483647, %v4437
      %v4440 = vcvt.s32.f32 %v4433
      %v4441 = vmul.f32 %v4440, %v4438
      %v4442 = vxor.u32 %v4441, 2147483648
      %v4443 = vsel %vm4360, %v4442, %v4441
      %v4444 = vsub.s32 4, %v4420
      %v4445 = vsel %vm4360, %v4444, %v4420
      %v4446 = vsel %vm4359, %v1442, %v4443
      %v4447 = vsel %vm4359, 0, %v4445
      %v4448 = vcosq.f32.pop %v4446
      %v4449 = vsinq.f32.pop %v4446
      %vm4450 = vweird.f32 %v1442
      %v4451 = vadd.s32 %v4447, 3
      %v4452 = vand.u32 %v4451, 3
      %vm4453 = vcmp.lt.s32.totalorder %v4452, 2
      %vm4454 = vcmp.eq.s32.totalorder %v4452, 0
      %v4455 = vxor.u32 %v4449, 2147483648
      %v4456 = vsel %vm4454, %v4448, %v4455
      %vm4457 = vcmp.eq.s32.totalorder %v4452, 2
      %v4458 = vxor.u32 %v4448, 2147483648
      %v4459 = vsel %vm4457, %v4458, %v4449
      %v4460 = vsel %vm4453, %v4456, %v4459
      %v4461 = vsel %vm4450, nan, %v4460
      %v4462 = vand.u32 2147483647, %v1443
      %vm4463 = vcmp.le.f32.partialorder %v4462, 0.7853982
      %vm4464 = vcmp.lt.s32.totalorder %v1443, 0
      %v4465 = vand.u32 %v1443, 2139095040
      %v4466 = vshrl.u32 %v4465, 23
      %v4467 = vsub.s32 %v4466, 127
      %v4468 = vand.u32 2147483647, %v1443
      %v4469 = vand.u32 %v4468, 8388607
      %v4470 = vor.u32 %v4469, 8388608
      %v4471 = vsub.s32 0, %v4470
      %v4472 = vadd.s32 %v4467, 1
      %vm4473 = vcmp.gt.s32.totalorder %v4472, 0
      %v4474 = vsel %vm4473, %v4472, 0
      %v4475 = vshrl.u32 %v4474, 5
      %v4476 = vand.u32 %v4474, 31
      %v4477 = vsub.s32 32, %v4476
      %v4478 = vshrl.u32 683565275, %v4477
      %v4479 = vshll.u32 683565275, %v4476
      %v4480 = vshrl.u32 2475754826, %v4477
      %v4481 = vor.u32 %v4479, %v4480
      %v4482 = vshll.u32 2475754826, %v4476
      %v4483 = vshrl.u32 2131351028, %v4477
      %v4484 = vor.u32 %v4482, %v4483
      %v4485 = vshll.u32 2131351028, %v4476
      %v4486 = vshrl.u32 2102212464, %v4477
      %v4487 = vor.u32 %v4485, %v4486
      %v4488 = vshll.u32 2102212464, %v4476
      %v4489 = vshrl.u32 920167782, %v4477
      %v4490 = vor.u32 %v4488, %v4489
      %v4491 = vshll.u32 920167782, %v4476
      %v4492 = vshrl.u32 1326507024, %v4477
      %v4493 = vor.u32 %v4491, %v4492
      %vm4494 = vcmp.lt.s32.totalorder %v4475, 1
      %vm4495 = vcmp.lt.s32.totalorder %v4475, 2
      %vm4496 = vcmp.lt.s32.totalorder %v4475, 3
      %vm4497 = vcmp.lt.s32.totalorder %v4475, 4
      %v4498 = vsel %vm4494, %v4478, %v4481
      %v4499 = vsel %vm4497, %v4487, 2102212464
      %v4500 = vsel %vm4496, %v4484, %v4499
      %v4501 = vsel %vm4495, %v4498, %v4500
      %v4502 = vsel %vm4494, %v4481, %v4484
      %v4503 = vsel %vm4497, %v4490, 920167782
      %v4504 = vsel %vm4496, %v4487, %v4503
      %v4505 = vsel %vm4495, %v4502, %v4504
      %v4506 = vsel %vm4494, %v4484, %v4487
      %v4507 = vsel %vm4497, %v4493, 1326507024
      %v4508 = vsel %vm4496, %v4490, %v4507
      %v4509 = vsel %vm4495, %v4506, %v4508
      %v4510 = vshll.u32 %v4470, 8
      %v4511 = vmul.u32.u64.compose %v4510, %v4509
      %v4512 = vextract.low.u32 %v4511
      %v4513 = vextract.high.u32 %v4511
      %v4514 = vmul.u32.u64.compose %v4510, %v4505
      %v4515 = vextract.low.u32 %v4514
      %v4516 = vextract.high.u32 %v4514
      %v4517 = vmul.u32 %v4510, %v4501
      %v4518 = vadd.s32 %v4513, %v4515
      %vm4519 = vc.u32 %v4513, %v4515
      %v4520 = vadd.s32 %v4516, 1
      %v4521 = vsel %vm4519, %v4520, %v4516
      %v4522 = vadd.s32 %v4517, %v4521
      %v4523 = vadd.s32 %v4522, 536870912
      %v4524 = vshrl.u32 %v4523, 30
      %v4525 = vshll.u32 %v4524, 30
      %v4526 = vsub.s32 %v4522, %v4525
      %vm4527 = vcmp.lt.s32.totalorder %v4526, 0
      %v4528 = vsub.s32 0, %v4526
      %v4529 = vsel %vm4527, %v4528, %v4526
      %v4530 = vclz %v4529
      %v4531 = vsub.s32 %v4530, 2
      %vm4532 = vcmp.gt.s32.totalorder 0, %v4531
      %v4533 = vsel %vm4532, 0, %v4531
      %v4534 = vsub.s32 32, %v4533
      %v4535 = vshll.u32 %v4526, %v4533
      %v4536 = vshrl.u32 %v4518, %v4534
      %v4537 = vor.u32 %v4535, %v4536
      %v4538 = vsub.s32 4294967266, %v4533
      %v4539 = vadd.s32 %v4538, 127
      %v4540 = vshll.u32 %v4539, 23
      %v4541 = vor.u32 4788187, %v4540
      %v4542 = vand.u32 2147483647, %v4541
      %v4544 = vcvt.s32.f32 %v4537
      %v4545 = vmul.f32 %v4544, %v4542
      %v4546 = vxor.u32 %v4545, 2147483648
      %v4547 = vsel %vm4464, %v4546, %v4545
      %v4548 = vsub.s32 4, %v4524
      %v4549 = vsel %vm4464, %v4548, %v4524
      %v4550 = vsel %vm4463, %v1443, %v4547
      %v4551 = vsel %vm4463, 0, %v4549
      %v4552 = vcosq.f32.pop %v4550
      %v4553 = vsinq.f32.pop %v4550
      %vm4554 = vweird.f32 %v1443
      %v4555 = vadd.s32 %v4551, 3
      %v4556 = vand.u32 %v4555, 3
      %vm4557 = vcmp.lt.s32.totalorder %v4556, 2
      %vm4558 = vcmp.eq.s32.totalorder %v4556, 0
      %v4559 = vxor.u32 %v4553, 2147483648
      %v4560 = vsel %vm4558, %v4552, %v4559
      %vm4561 = vcmp.eq.s32.totalorder %v4556, 2
      %v4562 = vxor.u32 %v4552, 2147483648
      %v4563 = vsel %vm4561, %v4562, %v4553
      %v4564 = vsel %vm4557, %v4560, %v4563
      %v4565 = vsel %vm4554, nan, %v4564
      %v4566 = vand.u32 2147483647, %v1444
      %vm4567 = vcmp.le.f32.partialorder %v4566, 0.7853982
      %vm4568 = vcmp.lt.s32.totalorder %v1444, 0
      %v4569 = vand.u32 %v1444, 2139095040
      %v4570 = vshrl.u32 %v4569, 23
      %v4571 = vsub.s32 %v4570, 127
      %v4572 = vand.u32 2147483647, %v1444
      %v4573 = vand.u32 %v4572, 8388607
      %v4574 = vor.u32 %v4573, 8388608
      %v4575 = vsub.s32 0, %v4574
      %v4576 = vadd.s32 %v4571, 1
      %vm4577 = vcmp.gt.s32.totalorder %v4576, 0
      %v4578 = vsel %vm4577, %v4576, 0
      %v4579 = vshrl.u32 %v4578, 5
      %v4580 = vand.u32 %v4578, 31
      %v4581 = vsub.s32 32, %v4580
      %v4582 = vshrl.u32 683565275, %v4581
      %v4583 = vshll.u32 683565275, %v4580
      %v4584 = vshrl.u32 2475754826, %v4581
      %v4585 = vor.u32 %v4583, %v4584
      %v4586 = vshll.u32 2475754826, %v4580
      %v4587 = vshrl.u32 2131351028, %v4581
      %v4588 = vor.u32 %v4586, %v4587
      %v4589 = vshll.u32 2131351028, %v4580
      %v4590 = vshrl.u32 2102212464, %v4581
      %v4591 = vor.u32 %v4589, %v4590
      %v4592 = vshll.u32 2102212464, %v4580
      %v4593 = vshrl.u32 920167782, %v4581
      %v4594 = vor.u32 %v4592, %v4593
      %v4595 = vshll.u32 920167782, %v4580
      %v4596 = vshrl.u32 1326507024, %v4581
      %v4597 = vor.u32 %v4595, %v4596
      %vm4598 = vcmp.lt.s32.totalorder %v4579, 1
      %vm4599 = vcmp.lt.s32.totalorder %v4579, 2
      %vm4600 = vcmp.lt.s32.totalorder %v4579, 3
      %vm4601 = vcmp.lt.s32.totalorder %v4579, 4
      %v4602 = vsel %vm4598, %v4582, %v4585
      %v4603 = vsel %vm4601, %v4591, 2102212464
      %v4604 = vsel %vm4600, %v4588, %v4603
      %v4605 = vsel %vm4599, %v4602, %v4604
      %v4606 = vsel %vm4598, %v4585, %v4588
      %v4607 = vsel %vm4601, %v4594, 920167782
      %v4608 = vsel %vm4600, %v4591, %v4607
      %v4609 = vsel %vm4599, %v4606, %v4608
      %v4610 = vsel %vm4598, %v4588, %v4591
      %v4611 = vsel %vm4601, %v4597, 1326507024
      %v4612 = vsel %vm4600, %v4594, %v4611
      %v4613 = vsel %vm4599, %v4610, %v4612
      %v4614 = vshll.u32 %v4574, 8
      %v4615 = vmul.u32.u64.compose %v4614, %v4613
      %v4616 = vextract.low.u32 %v4615
      %v4617 = vextract.high.u32 %v4615
      %v4618 = vmul.u32.u64.compose %v4614, %v4609
      %v4619 = vextract.low.u32 %v4618
      %v4620 = vextract.high.u32 %v4618
      %v4621 = vmul.u32 %v4614, %v4605
      %v4622 = vadd.s32 %v4617, %v4619
      %vm4623 = vc.u32 %v4617, %v4619
      %v4624 = vadd.s32 %v4620, 1
      %v4625 = vsel %vm4623, %v4624, %v4620
      %v4626 = vadd.s32 %v4621, %v4625
      %v4627 = vadd.s32 %v4626, 536870912
      %v4628 = vshrl.u32 %v4627, 30
      %v4629 = vshll.u32 %v4628, 30
      %v4630 = vsub.s32 %v4626, %v4629
      %vm4631 = vcmp.lt.s32.totalorder %v4630, 0
      %v4632 = vsub.s32 0, %v4630
      %v4633 = vsel %vm4631, %v4632, %v4630
      %v4634 = vclz %v4633
      %v4635 = vsub.s32 %v4634, 2
      %vm4636 = vcmp.gt.s32.totalorder 0, %v4635
      %v4637 = vsel %vm4636, 0, %v4635
      %v4638 = vsub.s32 32, %v4637
      %v4639 = vshll.u32 %v4630, %v4637
      %v4640 = vshrl.u32 %v4622, %v4638
      %v4641 = vor.u32 %v4639, %v4640
      %v4642 = vsub.s32 4294967266, %v4637
      %v4643 = vadd.s32 %v4642, 127
      %v4644 = vshll.u32 %v4643, 23
      %v4645 = vor.u32 4788187, %v4644
      %v4646 = vand.u32 2147483647, %v4645
      %v4648 = vcvt.s32.f32 %v4641
      %v4649 = vmul.f32 %v4648, %v4646
      %v4650 = vxor.u32 %v4649, 2147483648
      %v4651 = vsel %vm4568, %v4650, %v4649
      %v4652 = vsub.s32 4, %v4628
      %v4653 = vsel %vm4568, %v4652, %v4628
      %v4654 = vsel %vm4567, %v1444, %v4651
      %v4655 = vsel %vm4567, 0, %v4653
      %v4656 = vcosq.f32.pop %v4654
      %v4657 = vsinq.f32.pop %v4654
      %vm4658 = vweird.f32 %v1444
      %v4659 = vadd.s32 %v4655, 3
      %v4660 = vand.u32 %v4659, 3
      %vm4661 = vcmp.lt.s32.totalorder %v4660, 2
      %vm4662 = vcmp.eq.s32.totalorder %v4660, 0
      %v4663 = vxor.u32 %v4657, 2147483648
      %v4664 = vsel %vm4662, %v4656, %v4663
      %vm4665 = vcmp.eq.s32.totalorder %v4660, 2
      %v4666 = vxor.u32 %v4656, 2147483648
      %v4667 = vsel %vm4665, %v4666, %v4657
      %v4668 = vsel %vm4661, %v4664, %v4667
      %v4669 = vsel %vm4658, nan, %v4668
      %v4670 = vand.u32 2147483647, %v1445
      %vm4671 = vcmp.le.f32.partialorder %v4670, 0.7853982
      %vm4672 = vcmp.lt.s32.totalorder %v1445, 0
      %v4673 = vand.u32 %v1445, 2139095040
      %v4674 = vshrl.u32 %v4673, 23
      %v4675 = vsub.s32 %v4674, 127
      %v4676 = vand.u32 2147483647, %v1445
      %v4677 = vand.u32 %v4676, 8388607
      %v4678 = vor.u32 %v4677, 8388608
      %v4679 = vsub.s32 0, %v4678
      %v4680 = vadd.s32 %v4675, 1
      %vm4681 = vcmp.gt.s32.totalorder %v4680, 0
      %v4682 = vsel %vm4681, %v4680, 0
      %v4683 = vshrl.u32 %v4682, 5
      %v4684 = vand.u32 %v4682, 31
      %v4685 = vsub.s32 32, %v4684
      %v4686 = vshrl.u32 683565275, %v4685
      %v4687 = vshll.u32 683565275, %v4684
      %v4688 = vshrl.u32 2475754826, %v4685
      %v4689 = vor.u32 %v4687, %v4688
      %v4690 = vshll.u32 2475754826, %v4684
      %v4691 = vshrl.u32 2131351028, %v4685
      %v4692 = vor.u32 %v4690, %v4691
      %v4693 = vshll.u32 2131351028, %v4684
      %v4694 = vshrl.u32 2102212464, %v4685
      %v4695 = vor.u32 %v4693, %v4694
      %v4696 = vshll.u32 2102212464, %v4684
      %v4697 = vshrl.u32 920167782, %v4685
      %v4698 = vor.u32 %v4696, %v4697
      %v4699 = vshll.u32 920167782, %v4684
      %v4700 = vshrl.u32 1326507024, %v4685
      %v4701 = vor.u32 %v4699, %v4700
      %vm4702 = vcmp.lt.s32.totalorder %v4683, 1
      %vm4703 = vcmp.lt.s32.totalorder %v4683, 2
      %vm4704 = vcmp.lt.s32.totalorder %v4683, 3
      %vm4705 = vcmp.lt.s32.totalorder %v4683, 4
      %v4706 = vsel %vm4702, %v4686, %v4689
      %v4707 = vsel %vm4705, %v4695, 2102212464
      %v4708 = vsel %vm4704, %v4692, %v4707
      %v4709 = vsel %vm4703, %v4706, %v4708
      %v4710 = vsel %vm4702, %v4689, %v4692
      %v4711 = vsel %vm4705, %v4698, 920167782
      %v4712 = vsel %vm4704, %v4695, %v4711
      %v4713 = vsel %vm4703, %v4710, %v4712
      %v4714 = vsel %vm4702, %v4692, %v4695
      %v4715 = vsel %vm4705, %v4701, 1326507024
      %v4716 = vsel %vm4704, %v4698, %v4715
      %v4717 = vsel %vm4703, %v4714, %v4716
      %v4718 = vshll.u32 %v4678, 8
      %v4719 = vmul.u32.u64.compose %v4718, %v4717
      %v4720 = vextract.low.u32 %v4719
      %v4721 = vextract.high.u32 %v4719
      %v4722 = vmul.u32.u64.compose %v4718, %v4713
      %v4723 = vextract.low.u32 %v4722
      %v4724 = vextract.high.u32 %v4722
      %v4725 = vmul.u32 %v4718, %v4709
      %v4726 = vadd.s32 %v4721, %v4723
      %vm4727 = vc.u32 %v4721, %v4723
      %v4728 = vadd.s32 %v4724, 1
      %v4729 = vsel %vm4727, %v4728, %v4724
      %v4730 = vadd.s32 %v4725, %v4729
      %v4731 = vadd.s32 %v4730, 536870912
      %v4732 = vshrl.u32 %v4731, 30
      %v4733 = vshll.u32 %v4732, 30
      %v4734 = vsub.s32 %v4730, %v4733
      %vm4735 = vcmp.lt.s32.totalorder %v4734, 0
      %v4736 = vsub.s32 0, %v4734
      %v4737 = vsel %vm4735, %v4736, %v4734
      %v4738 = vclz %v4737
      %v4739 = vsub.s32 %v4738, 2
      %vm4740 = vcmp.gt.s32.totalorder 0, %v4739
      %v4741 = vsel %vm4740, 0, %v4739
      %v4742 = vsub.s32 32, %v4741
      %v4743 = vshll.u32 %v4734, %v4741
      %v4744 = vshrl.u32 %v4726, %v4742
      %v4745 = vor.u32 %v4743, %v4744
      %v4746 = vsub.s32 4294967266, %v4741
      %v4747 = vadd.s32 %v4746, 127
      %v4748 = vshll.u32 %v4747, 23
      %v4749 = vor.u32 4788187, %v4748
      %v4750 = vand.u32 2147483647, %v4749
      %v4752 = vcvt.s32.f32 %v4745
      %v4753 = vmul.f32 %v4752, %v4750
      %v4754 = vxor.u32 %v4753, 2147483648
      %v4755 = vsel %vm4672, %v4754, %v4753
      %v4756 = vsub.s32 4, %v4732
      %v4757 = vsel %vm4672, %v4756, %v4732
      %v4758 = vsel %vm4671, %v1445, %v4755
      %v4759 = vsel %vm4671, 0, %v4757
      %v4760 = vcosq.f32.pop %v4758
      %v4761 = vsinq.f32.pop %v4758
      %vm4762 = vweird.f32 %v1445
      %v4763 = vadd.s32 %v4759, 3
      %v4764 = vand.u32 %v4763, 3
      %vm4765 = vcmp.lt.s32.totalorder %v4764, 2
      %vm4766 = vcmp.eq.s32.totalorder %v4764, 0
      %v4767 = vxor.u32 %v4761, 2147483648
      %v4768 = vsel %vm4766, %v4760, %v4767
      %vm4769 = vcmp.eq.s32.totalorder %v4764, 2
      %v4770 = vxor.u32 %v4760, 2147483648
      %v4771 = vsel %vm4769, %v4770, %v4761
      %v4772 = vsel %vm4765, %v4768, %v4771
      %v4773 = vsel %vm4762, nan, %v4772
      %vm4774 = vcmp.lt.f32.partialorder %v1176, 5.0
      %vm4775 = vcmp.lt.f32.partialorder %v1177, 5.0
      %vm4776 = vcmp.lt.f32.partialorder %v1178, 5.0
      %vm4777 = vcmp.lt.f32.partialorder %v1179, 5.0
      %vm4778 = vcmp.lt.f32.partialorder %v1180, 5.0
      %vm4779 = vcmp.lt.f32.partialorder %v1181, 5.0
      %vm4780 = vcmp.lt.f32.partialorder %v1182, 5.0
      %vm4781 = vcmp.lt.f32.partialorder %v1183, 5.0
      %vm4782 = vcmp.lt.f32.partialorder %v1184, 5.0
      %vm4783 = vcmp.lt.f32.partialorder %v1185, 5.0
      %vm4784 = vcmp.lt.f32.partialorder %v1186, 5.0
      %vm4785 = vcmp.lt.f32.partialorder %v1187, 5.0
      %vm4786 = vcmp.lt.f32.partialorder %v1188, 5.0
      %vm4787 = vcmp.lt.f32.partialorder %v1189, 5.0
      %vm4788 = vcmp.lt.f32.partialorder %v1190, 5.0
      %vm4789 = vcmp.lt.f32.partialorder %v1191, 5.0
      %vm4790 = vcmp.lt.f32.partialorder %v1192, 5.0
      %vm4791 = vcmp.lt.f32.partialorder %v1193, 5.0
      %vm4792 = vcmp.lt.f32.partialorder %v1194, 5.0
      %vm4793 = vcmp.lt.f32.partialorder %v1195, 5.0
      %vm4794 = vcmp.lt.f32.partialorder %v1196, 5.0
      %vm4795 = vcmp.lt.f32.partialorder %v1197, 5.0
      %vm4796 = vcmp.lt.f32.partialorder %v1198, 5.0
      %vm4797 = vcmp.lt.f32.partialorder %v1199, 5.0
      %vm4798 = vcmp.lt.f32.partialorder %v1200, 5.0
      %vm4799 = vcmp.lt.f32.partialorder %v1201, 5.0
      %vm4800 = vcmp.lt.f32.partialorder %v1202, 5.0
      %vm4801 = vcmp.lt.f32.partialorder %v1203, 5.0
      %vm4802 = vcmp.lt.f32.partialorder %v1204, 5.0
      %vm4803 = vcmp.lt.f32.partialorder %v1205, 5.0
      %vm4804 = vcmp.lt.f32.partialorder %v1206, 5.0
      %vm4805 = vcmp.lt.f32.partialorder %v1207, 5.0
      %v4806 = vadd.f32 %v1549, 1.0
      %v4807 = vadd.f32 %v1653, 1.0
      %v4808 = vadd.f32 %v1757, 1.0
      %v4809 = vadd.f32 %v1861, 1.0
      %v4810 = vadd.f32 %v1965, 1.0
      %v4811 = vadd.f32 %v2069, 1.0
      %v4812 = vadd.f32 %v2173, 1.0
      %v4813 = vadd.f32 %v2277, 1.0
      %v4814 = vadd.f32 %v2381, 1.0
      %v4815 = vadd.f32 %v2485, 1.0
      %v4816 = vadd.f32 %v2589, 1.0
      %v4817 = vadd.f32 %v2693, 1.0
      %v4818 = vadd.f32 %v2797, 1.0
      %v4819 = vadd.f32 %v2901, 1.0
      %v4820 = vadd.f32 %v3005, 1.0
      %v4821 = vadd.f32 %v3109, 1.0
      %v4822 = vadd.f32 %v3213, 1.0
      %v4823 = vadd.f32 %v3317, 1.0
      %v4824 = vadd.f32 %v3421, 1.0
      %v4825 = vadd.f32 %v3525, 1.0
      %v4826 = vadd.f32 %v3629, 1.0
      %v4827 = vadd.f32 %v3733, 1.0
      %v4828 = vadd.f32 %v3837, 1.0
      %v4829 = vadd.f32 %v3941, 1.0
      %v4830 = vadd.f32 %v4045, 1.0
      %v4831 = vadd.f32 %v4149, 1.0
      %v4832 = vadd.f32 %v4253, 1.0
      %v4833 = vadd.f32 %v4357, 1.0
      %v4834 = vadd.f32 %v4461, 1.0
      %v4835 = vadd.f32 %v4565, 1.0
      %v4836 = vadd.f32 %v4669, 1.0
      %v4837 = vadd.f32 %v4773, 1.0
      %v4838 = vmul.f32 %v4806, 0.5
      %v4839 = vmul.f32 %v4807, 0.5
      %v4840 = vmul.f32 %v4808, 0.5
      %v4841 = vmul.f32 %v4809, 0.5
      %v4842 = vmul.f32 %v4810, 0.5
      %v4843 = vmul.f32 %v4811, 0.5
      %v4844 = vmul.f32 %v4812, 0.5
      %v4845 = vmul.f32 %v4813, 0.5
      %v4846 = vmul.f32 %v4814, 0.5
      %v4847 = vmul.f32 %v4815, 0.5
      %v4848 = vmul.f32 %v4816, 0.5
      %v4849 = vmul.f32 %v4817, 0.5
      %v4850 = vmul.f32 %v4818, 0.5
      %v4851 = vmul.f32 %v4819, 0.5
      %v4852 = vmul.f32 %v4820, 0.5
      %v4853 = vmul.f32 %v4821, 0.5
      %v4854 = vmul.f32 %v4822, 0.5
      %v4855 = vmul.f32 %v4823, 0.5
      %v4856 = vmul.f32 %v4824, 0.5
      %v4857 = vmul.f32 %v4825, 0.5
      %v4858 = vmul.f32 %v4826, 0.5
      %v4859 = vmul.f32 %v4827, 0.5
      %v4860 = vmul.f32 %v4828, 0.5
      %v4861 = vmul.f32 %v4829, 0.5
      %v4862 = vmul.f32 %v4830, 0.5
      %v4863 = vmul.f32 %v4831, 0.5
      %v4864 = vmul.f32 %v4832, 0.5
      %v4865 = vmul.f32 %v4833, 0.5
      %v4866 = vmul.f32 %v4834, 0.5
      %v4867 = vmul.f32 %v4835, 0.5
      %v4868 = vmul.f32 %v4836, 0.5
      %v4869 = vmul.f32 %v4837, 0.5
      %4902 = vrot.lane.b32.xlu0 %v4838, 112
      %v4903 = vpop.permute.xlu0 %4902
      %4904 = vrot.lane.b32.xlu0 %v4839, 112
      %v4905 = vpop.permute.xlu0 %4904
      %4906 = vrot.lane.b32.xlu0 %v4840, 112
      %v4907 = vpop.permute.xlu0 %4906
      %4908 = vrot.lane.b32.xlu0 %v4841, 112
      %v4909 = vpop.permute.xlu0 %4908
      %4910 = vrot.lane.b32.xlu0 %v4842, 112
      %v4911 = vpop.permute.xlu0 %4910
      %4912 = vrot.lane.b32.xlu0 %v4843, 112
      %v4913 = vpop.permute.xlu0 %4912
      %4914 = vrot.lane.b32.xlu0 %v4844, 112
      %v4915 = vpop.permute.xlu0 %4914
      %4916 = vrot.lane.b32.xlu0 %v4845, 112
      %v4917 = vpop.permute.xlu0 %4916
      %4918 = vrot.lane.b32.xlu0 %v4846, 112
      %v4919 = vpop.permute.xlu0 %4918
      %4920 = vrot.lane.b32.xlu0 %v4847, 112
      %v4921 = vpop.permute.xlu0 %4920
      %4922 = vrot.lane.b32.xlu0 %v4848, 112
      %v4923 = vpop.permute.xlu0 %4922
      %4924 = vrot.lane.b32.xlu0 %v4849, 112
      %v4925 = vpop.permute.xlu0 %4924
      %4926 = vrot.lane.b32.xlu0 %v4850, 112
      %v4927 = vpop.permute.xlu0 %4926
      %4928 = vrot.lane.b32.xlu0 %v4851, 112
      %v4929 = vpop.permute.xlu0 %4928
      %4930 = vrot.lane.b32.xlu0 %v4852, 112
      %v4931 = vpop.permute.xlu0 %4930
      %4932 = vrot.lane.b32.xlu0 %v4853, 112
      %v4933 = vpop.permute.xlu0 %4932
      %4934 = vrot.lane.b32.xlu0 %v4854, 112
      %v4935 = vpop.permute.xlu0 %4934
      %4936 = vrot.lane.b32.xlu0 %v4855, 112
      %v4937 = vpop.permute.xlu0 %4936
      %4938 = vrot.lane.b32.xlu0 %v4856, 112
      %v4939 = vpop.permute.xlu0 %4938
      %4940 = vrot.lane.b32.xlu0 %v4857, 112
      %v4941 = vpop.permute.xlu0 %4940
      %4942 = vrot.lane.b32.xlu0 %v4858, 112
      %v4943 = vpop.permute.xlu0 %4942
      %4944 = vrot.lane.b32.xlu0 %v4859, 112
      %v4945 = vpop.permute.xlu0 %4944
      %4946 = vrot.lane.b32.xlu0 %v4860, 112
      %v4947 = vpop.permute.xlu0 %4946
      %4948 = vrot.lane.b32.xlu0 %v4861, 112
      %v4949 = vpop.permute.xlu0 %4948
      %4950 = vrot.lane.b32.xlu0 %v4862, 112
      %v4951 = vpop.permute.xlu0 %4950
      %4952 = vrot.lane.b32.xlu0 %v4863, 112
      %v4953 = vpop.permute.xlu0 %4952
      %4954 = vrot.lane.b32.xlu0 %v4864, 112
      %v4955 = vpop.permute.xlu0 %4954
      %4956 = vrot.lane.b32.xlu0 %v4865, 112
      %v4957 = vpop.permute.xlu0 %4956
      %4958 = vrot.lane.b32.xlu0 %v4866, 112
      %v4959 = vpop.permute.xlu0 %4958
      %4960 = vrot.lane.b32.xlu0 %v4867, 112
      %v4961 = vpop.permute.xlu0 %4960
      %4962 = vrot.lane.b32.xlu0 %v4868, 112
      %v4963 = vpop.permute.xlu0 %4962
      %4964 = vrot.lane.b32.xlu0 %v4869, 112
      %v4965 = vpop.permute.xlu0 %4964
      %v4998 = vsel %vm4774, %v4903, 0.0
      %v4999 = vsel %vm4775, %v4905, 0.0
      %v5000 = vsel %vm4776, %v4907, 0.0
      %v5001 = vsel %vm4777, %v4909, 0.0
      %v5002 = vsel %vm4778, %v4911, 0.0
      %v5003 = vsel %vm4779, %v4913, 0.0
      %v5004 = vsel %vm4780, %v4915, 0.0
      %v5005 = vsel %vm4781, %v4917, 0.0
      %v5006 = vsel %vm4782, %v4919, 0.0
      %v5007 = vsel %vm4783, %v4921, 0.0
      %v5008 = vsel %vm4784, %v4923, 0.0
      %v5009 = vsel %vm4785, %v4925, 0.0
      %v5010 = vsel %vm4786, %v4927, 0.0
      %v5011 = vsel %vm4787, %v4929, 0.0
      %v5012 = vsel %vm4788, %v4931, 0.0
      %v5013 = vsel %vm4789, %v4933, 0.0
      %v5014 = vsel %vm4790, %v4935, 0.0
      %v5015 = vsel %vm4791, %v4937, 0.0
      %v5016 = vsel %vm4792, %v4939, 0.0
      %v5017 = vsel %vm4793, %v4941, 0.0
      %v5018 = vsel %vm4794, %v4943, 0.0
      %v5019 = vsel %vm4795, %v4945, 0.0
      %v5020 = vsel %vm4796, %v4947, 0.0
      %v5021 = vsel %vm4797, %v4949, 0.0
      %v5022 = vsel %vm4798, %v4951, 0.0
      %v5023 = vsel %vm4799, %v4953, 0.0
      %v5024 = vsel %vm4800, %v4955, 0.0
      %v5025 = vsel %vm4801, %v4957, 0.0
      %v5026 = vsel %vm4802, %v4959, 0.0
      %v5027 = vsel %vm4803, %v4961, 0.0
      %v5028 = vsel %vm4804, %v4963, 0.0
      %v5029 = vsel %vm4805, %v4965, 0.0
      %vm5030 = vcmp.eq.f32.partialorder %v1176, 0.0
      %vm5031 = vcmp.eq.f32.partialorder %v1177, 0.0
      %vm5032 = vcmp.eq.f32.partialorder %v1178, 0.0
      %vm5033 = vcmp.eq.f32.partialorder %v1179, 0.0
      %vm5034 = vcmp.eq.f32.partialorder %v1180, 0.0
      %vm5035 = vcmp.eq.f32.partialorder %v1181, 0.0
      %vm5036 = vcmp.eq.f32.partialorder %v1182, 0.0
      %vm5037 = vcmp.eq.f32.partialorder %v1183, 0.0
      %vm5038 = vcmp.eq.f32.partialorder %v1184, 0.0
      %vm5039 = vcmp.eq.f32.partialorder %v1185, 0.0
      %vm5040 = vcmp.eq.f32.partialorder %v1186, 0.0
      %vm5041 = vcmp.eq.f32.partialorder %v1187, 0.0
      %vm5042 = vcmp.eq.f32.partialorder %v1188, 0.0
      %vm5043 = vcmp.eq.f32.partialorder %v1189, 0.0
      %vm5044 = vcmp.eq.f32.partialorder %v1190, 0.0
      %vm5045 = vcmp.eq.f32.partialorder %v1191, 0.0
      %vm5046 = vcmp.eq.f32.partialorder %v1192, 0.0
      %vm5047 = vcmp.eq.f32.partialorder %v1193, 0.0
      %vm5048 = vcmp.eq.f32.partialorder %v1194, 0.0
      %vm5049 = vcmp.eq.f32.partialorder %v1195, 0.0
      %vm5050 = vcmp.eq.f32.partialorder %v1196, 0.0
      %vm5051 = vcmp.eq.f32.partialorder %v1197, 0.0
      %vm5052 = vcmp.eq.f32.partialorder %v1198, 0.0
      %vm5053 = vcmp.eq.f32.partialorder %v1199, 0.0
      %vm5054 = vcmp.eq.f32.partialorder %v1200, 0.0
      %vm5055 = vcmp.eq.f32.partialorder %v1201, 0.0
      %vm5056 = vcmp.eq.f32.partialorder %v1202, 0.0
      %vm5057 = vcmp.eq.f32.partialorder %v1203, 0.0
      %vm5058 = vcmp.eq.f32.partialorder %v1204, 0.0
      %vm5059 = vcmp.eq.f32.partialorder %v1205, 0.0
      %vm5060 = vcmp.eq.f32.partialorder %v1206, 0.0
      %vm5061 = vcmp.eq.f32.partialorder %v1207, 0.0
      %v5062 = vsel %vm5030, 1, 0
      %v5063 = vsel %vm5031, 1, 0
      %v5064 = vsel %vm5032, 1, 0
      %v5065 = vsel %vm5033, 1, 0
      %v5066 = vsel %vm5034, 1, 0
      %v5067 = vsel %vm5035, 1, 0
      %v5068 = vsel %vm5036, 1, 0
      %v5069 = vsel %vm5037, 1, 0
      %v5070 = vsel %vm5038, 1, 0
      %v5071 = vsel %vm5039, 1, 0
      %v5072 = vsel %vm5040, 1, 0
      %v5073 = vsel %vm5041, 1, 0
      %v5074 = vsel %vm5042, 1, 0
      %v5075 = vsel %vm5043, 1, 0
      %v5076 = vsel %vm5044, 1, 0
      %v5077 = vsel %vm5045, 1, 0
      %v5078 = vsel %vm5046, 1, 0
      %v5079 = vsel %vm5047, 1, 0
      %v5080 = vsel %vm5048, 1, 0
      %v5081 = vsel %vm5049, 1, 0
      %v5082 = vsel %vm5050, 1, 0
      %v5083 = vsel %vm5051, 1, 0
      %v5084 = vsel %vm5052, 1, 0
      %v5085 = vsel %vm5053, 1, 0
      %v5086 = vsel %vm5054, 1, 0
      %v5087 = vsel %vm5055, 1, 0
      %v5088 = vsel %vm5056, 1, 0
      %v5089 = vsel %vm5057, 1, 0
      %v5090 = vsel %vm5058, 1, 0
      %v5091 = vsel %vm5059, 1, 0
      %v5092 = vsel %vm5060, 1, 0
      %v5093 = vsel %vm5061, 1, 0
      %5094 = vset.pattern.permute.xlu0 0
      %5095 = vperm.xlu0 %5094, %v5062
      %v5096 = vpop.permute.xlu0 %5095
      %5097 = vset.pattern.permute.xlu0 0
      %5098 = vperm.xlu0 %5097, %v5063
      %v5099 = vpop.permute.xlu0 %5098
      %5100 = vset.pattern.permute.xlu0 0
      %5101 = vperm.xlu0 %5100, %v5064
      %v5102 = vpop.permute.xlu0 %5101
      %5103 = vset.pattern.permute.xlu0 0
      %5104 = vperm.xlu0 %5103, %v5065
      %v5105 = vpop.permute.xlu0 %5104
      %5106 = vset.pattern.permute.xlu0 0
      %5107 = vperm.xlu0 %5106, %v5066
      %v5108 = vpop.permute.xlu0 %5107
      %5109 = vset.pattern.permute.xlu0 0
      %5110 = vperm.xlu0 %5109, %v5067
      %v5111 = vpop.permute.xlu0 %5110
      %5112 = vset.pattern.permute.xlu0 0
      %5113 = vperm.xlu0 %5112, %v5068
      %v5114 = vpop.permute.xlu0 %5113
      %5115 = vset.pattern.permute.xlu0 0
      %5116 = vperm.xlu0 %5115, %v5069
      %v5117 = vpop.permute.xlu0 %5116
      %5118 = vset.pattern.permute.xlu0 0
      %5119 = vperm.xlu0 %5118, %v5070
      %v5120 = vpop.permute.xlu0 %5119
      %5121 = vset.pattern.permute.xlu0 0
      %5122 = vperm.xlu0 %5121, %v5071
      %v5123 = vpop.permute.xlu0 %5122
      %5124 = vset.pattern.permute.xlu0 0
      %5125 = vperm.xlu0 %5124, %v5072
      %v5126 = vpop.permute.xlu0 %5125
      %5127 = vset.pattern.permute.xlu0 0
      %5128 = vperm.xlu0 %5127, %v5073
      %v5129 = vpop.permute.xlu0 %5128
      %5130 = vset.pattern.permute.xlu0 0
      %5131 = vperm.xlu0 %5130, %v5074
      %v5132 = vpop.permute.xlu0 %5131
      %5133 = vset.pattern.permute.xlu0 0
      %5134 = vperm.xlu0 %5133, %v5075
      %v5135 = vpop.permute.xlu0 %5134
      %5136 = vset.pattern.permute.xlu0 0
      %5137 = vperm.xlu0 %5136, %v5076
      %v5138 = vpop.permute.xlu0 %5137
      %5139 = vset.pattern.permute.xlu0 0
      %5140 = vperm.xlu0 %5139, %v5077
      %v5141 = vpop.permute.xlu0 %5140
      %5142 = vset.pattern.permute.xlu0 0
      %5143 = vperm.xlu0 %5142, %v5078
      %v5144 = vpop.permute.xlu0 %5143
      %5145 = vset.pattern.permute.xlu0 0
      %5146 = vperm.xlu0 %5145, %v5079
      %v5147 = vpop.permute.xlu0 %5146
      %5148 = vset.pattern.permute.xlu0 0
      %5149 = vperm.xlu0 %5148, %v5080
      %v5150 = vpop.permute.xlu0 %5149
      %5151 = vset.pattern.permute.xlu0 0
      %5152 = vperm.xlu0 %5151, %v5081
      %v5153 = vpop.permute.xlu0 %5152
      %5154 = vset.pattern.permute.xlu0 0
      %5155 = vperm.xlu0 %5154, %v5082
      %v5156 = vpop.permute.xlu0 %5155
      %5157 = vset.pattern.permute.xlu0 0
      %5158 = vperm.xlu0 %5157, %v5083
      %v5159 = vpop.permute.xlu0 %5158
      %5160 = vset.pattern.permute.xlu0 0
      %5161 = vperm.xlu0 %5160, %v5084
      %v5162 = vpop.permute.xlu0 %5161
      %5163 = vset.pattern.permute.xlu0 0
      %5164 = vperm.xlu0 %5163, %v5085
      %v5165 = vpop.permute.xlu0 %5164
      %5166 = vset.pattern.permute.xlu0 0
      %5167 = vperm.xlu0 %5166, %v5086
      %v5168 = vpop.permute.xlu0 %5167
      %5169 = vset.pattern.permute.xlu0 0
      %5170 = vperm.xlu0 %5169, %v5087
      %v5171 = vpop.permute.xlu0 %5170
      %5172 = vset.pattern.permute.xlu0 0
      %5173 = vperm.xlu0 %5172, %v5088
      %v5174 = vpop.permute.xlu0 %5173
      %5175 = vset.pattern.permute.xlu0 0
      %5176 = vperm.xlu0 %5175, %v5089
      %v5177 = vpop.permute.xlu0 %5176
      %5178 = vset.pattern.permute.xlu0 0
      %5179 = vperm.xlu0 %5178, %v5090
      %v5180 = vpop.permute.xlu0 %5179
      %5181 = vset.pattern.permute.xlu0 0
      %5182 = vperm.xlu0 %5181, %v5091
      %v5183 = vpop.permute.xlu0 %5182
      %5184 = vset.pattern.permute.xlu0 0
      %5185 = vperm.xlu0 %5184, %v5092
      %v5186 = vpop.permute.xlu0 %5185
      %5187 = vset.pattern.permute.xlu0 0
      %5188 = vperm.xlu0 %5187, %v5093
      %v5189 = vpop.permute.xlu0 %5188
      %vm5190 = vcmp.eq.s32.totalorder %v5096, 1
      %vm5191 = vcmp.eq.s32.totalorder %v5099, 1
      %vm5192 = vcmp.eq.s32.totalorder %v5102, 1
      %vm5193 = vcmp.eq.s32.totalorder %v5105, 1
      %vm5194 = vcmp.eq.s32.totalorder %v5108, 1
      %vm5195 = vcmp.eq.s32.totalorder %v5111, 1
      %vm5196 = vcmp.eq.s32.totalorder %v5114, 1
      %vm5197 = vcmp.eq.s32.totalorder %v5117, 1
      %vm5198 = vcmp.eq.s32.totalorder %v5120, 1
      %vm5199 = vcmp.eq.s32.totalorder %v5123, 1
      %vm5200 = vcmp.eq.s32.totalorder %v5126, 1
      %vm5201 = vcmp.eq.s32.totalorder %v5129, 1
      %vm5202 = vcmp.eq.s32.totalorder %v5132, 1
      %vm5203 = vcmp.eq.s32.totalorder %v5135, 1
      %vm5204 = vcmp.eq.s32.totalorder %v5138, 1
      %vm5205 = vcmp.eq.s32.totalorder %v5141, 1
      %vm5206 = vcmp.eq.s32.totalorder %v5144, 1
      %vm5207 = vcmp.eq.s32.totalorder %v5147, 1
      %vm5208 = vcmp.eq.s32.totalorder %v5150, 1
      %vm5209 = vcmp.eq.s32.totalorder %v5153, 1
      %vm5210 = vcmp.eq.s32.totalorder %v5156, 1
      %vm5211 = vcmp.eq.s32.totalorder %v5159, 1
      %vm5212 = vcmp.eq.s32.totalorder %v5162, 1
      %vm5213 = vcmp.eq.s32.totalorder %v5165, 1
      %vm5214 = vcmp.eq.s32.totalorder %v5168, 1
      %vm5215 = vcmp.eq.s32.totalorder %v5171, 1
      %vm5216 = vcmp.eq.s32.totalorder %v5174, 1
      %vm5217 = vcmp.eq.s32.totalorder %v5177, 1
      %vm5218 = vcmp.eq.s32.totalorder %v5180, 1
      %vm5219 = vcmp.eq.s32.totalorder %v5183, 1
      %vm5220 = vcmp.eq.s32.totalorder %v5186, 1
      %vm5221 = vcmp.eq.s32.totalorder %v5189, 1
      %v5222 = vsel %vm5190, %v1373, %v1549
      %v5223 = vsel %vm5191, %v1373, %v1653
      %v5224 = vsel %vm5192, %v1373, %v1757
      %v5225 = vsel %vm5193, %v1373, %v1861
      %v5226 = vsel %vm5194, %v1373, %v1965
      %v5227 = vsel %vm5195, %v1373, %v2069
      %v5228 = vsel %vm5196, %v1373, %v2173
      %v5229 = vsel %vm5197, %v1373, %v2277
      %v5230 = vsel %vm5198, %v1373, %v2381
      %v5231 = vsel %vm5199, %v1373, %v2485
      %v5232 = vsel %vm5200, %v1373, %v2589
      %v5233 = vsel %vm5201, %v1373, %v2693
      %v5234 = vsel %vm5202, %v1373, %v2797
      %v5235 = vsel %vm5203, %v1373, %v2901
      %v5236 = vsel %vm5204, %v1373, %v3005
      %v5237 = vsel %vm5205, %v1373, %v3109
      %v5238 = vsel %vm5206, %v1373, %v3213
      %v5239 = vsel %vm5207, %v1373, %v3317
      %v5240 = vsel %vm5208, %v1373, %v3421
      %v5241 = vsel %vm5209, %v1373, %v3525
      %v5242 = vsel %vm5210, %v1373, %v3629
      %v5243 = vsel %vm5211, %v1373, %v3733
      %v5244 = vsel %vm5212, %v1373, %v3837
      %v5245 = vsel %vm5213, %v1373, %v3941
      %v5246 = vsel %vm5214, %v1373, %v4045
      %v5247 = vsel %vm5215, %v1373, %v4149
      %v5248 = vsel %vm5216, %v1373, %v4253
      %v5249 = vsel %vm5217, %v1373, %v4357
      %v5250 = vsel %vm5218, %v1373, %v4461
      %v5251 = vsel %vm5219, %v1373, %v4565
      %v5252 = vsel %vm5220, %v1373, %v4669
      %v5253 = vsel %vm5221, %v1373, %v4773
      %v5254 = vsel %vm5030, 1.0, %v1176
      %v5255 = vsel %vm5031, 1.0, %v1177
      %v5256 = vsel %vm5032, 1.0, %v1178
      %v5257 = vsel %vm5033, 1.0, %v1179
      %v5258 = vsel %vm5034, 1.0, %v1180
      %v5259 = vsel %vm5035, 1.0, %v1181
      %v5260 = vsel %vm5036, 1.0, %v1182
      %v5261 = vsel %vm5037, 1.0, %v1183
      %v5262 = vsel %vm5038, 1.0, %v1184
      %v5263 = vsel %vm5039, 1.0, %v1185
      %v5264 = vsel %vm5040, 1.0, %v1186
      %v5265 = vsel %vm5041, 1.0, %v1187
      %v5266 = vsel %vm5042, 1.0, %v1188
      %v5267 = vsel %vm5043, 1.0, %v1189
      %v5268 = vsel %vm5044, 1.0, %v1190
      %v5269 = vsel %vm5045, 1.0, %v1191
      %v5270 = vsel %vm5046, 1.0, %v1192
      %v5271 = vsel %vm5047, 1.0, %v1193
      %v5272 = vsel %vm5048, 1.0, %v1194
      %v5273 = vsel %vm5049, 1.0, %v1195
      %v5274 = vsel %vm5050, 1.0, %v1196
      %v5275 = vsel %vm5051, 1.0, %v1197
      %v5276 = vsel %vm5052, 1.0, %v1198
      %v5277 = vsel %vm5053, 1.0, %v1199
      %v5278 = vsel %vm5054, 1.0, %v1200
      %v5279 = vsel %vm5055, 1.0, %v1201
      %v5280 = vsel %vm5056, 1.0, %v1202
      %v5281 = vsel %vm5057, 1.0, %v1203
      %v5282 = vsel %vm5058, 1.0, %v1204
      %v5283 = vsel %vm5059, 1.0, %v1205
      %v5284 = vsel %vm5060, 1.0, %v1206
      %v5285 = vsel %vm5061, 1.0, %v1207
      %v5286 = vrcp.pop %v5254
      %v5287 = vmul.f32 %v4998, %v5286
      %v5288 = vrcp.pop %v5255
      %v5289 = vmul.f32 %v4999, %v5288
      %v5290 = vrcp.pop %v5256
      %v5291 = vmul.f32 %v5000, %v5290
      %v5292 = vrcp.pop %v5257
      %v5293 = vmul.f32 %v5001, %v5292
      %v5294 = vrcp.pop %v5258
      %v5295 = vmul.f32 %v5002, %v5294
      %v5296 = vrcp.pop %v5259
      %v5297 = vmul.f32 %v5003, %v5296
      %v5298 = vrcp.pop %v5260
      %v5299 = vmul.f32 %v5004, %v5298
      %v5300 = vrcp.pop %v5261
      %v5301 = vmul.f32 %v5005, %v5300
      %v5302 = vrcp.pop %v5262
      %v5303 = vmul.f32 %v5006, %v5302
      %v5304 = vrcp.pop %v5263
      %v5305 = vmul.f32 %v5007, %v5304
      %v5306 = vrcp.pop %v5264
      %v5307 = vmul.f32 %v5008, %v5306
      %v5308 = vrcp.pop %v5265
      %v5309 = vmul.f32 %v5009, %v5308
      %v5310 = vrcp.pop %v5266
      %v5311 = vmul.f32 %v5010, %v5310
      %v5312 = vrcp.pop %v5267
      %v5313 = vmul.f32 %v5011, %v5312
      %v5314 = vrcp.pop %v5268
      %v5315 = vmul.f32 %v5012, %v5314
      %v5316 = vrcp.pop %v5269
      %v5317 = vmul.f32 %v5013, %v5316
      %v5318 = vrcp.pop %v5270
      %v5319 = vmul.f32 %v5014, %v5318
      %v5320 = vrcp.pop %v5271
      %v5321 = vmul.f32 %v5015, %v5320
      %v5322 = vrcp.pop %v5272
      %v5323 = vmul.f32 %v5016, %v5322
      %v5324 = vrcp.pop %v5273
      %v5325 = vmul.f32 %v5017, %v5324
      %v5326 = vrcp.pop %v5274
      %v5327 = vmul.f32 %v5018, %v5326
      %v5328 = vrcp.pop %v5275
      %v5329 = vmul.f32 %v5019, %v5328
      %v5330 = vrcp.pop %v5276
      %v5331 = vmul.f32 %v5020, %v5330
      %v5332 = vrcp.pop %v5277
      %v5333 = vmul.f32 %v5021, %v5332
      %v5334 = vrcp.pop %v5278
      %v5335 = vmul.f32 %v5022, %v5334
      %v5336 = vrcp.pop %v5279
      %v5337 = vmul.f32 %v5023, %v5336
      %v5338 = vrcp.pop %v5280
      %v5339 = vmul.f32 %v5024, %v5338
      %v5340 = vrcp.pop %v5281
      %v5341 = vmul.f32 %v5025, %v5340
      %v5342 = vrcp.pop %v5282
      %v5343 = vmul.f32 %v5026, %v5342
      %v5344 = vrcp.pop %v5283
      %v5345 = vmul.f32 %v5027, %v5344
      %v5346 = vrcp.pop %v5284
      %v5347 = vmul.f32 %v5028, %v5346
      %v5348 = vrcp.pop %v5285
      %v5349 = vmul.f32 %v5029, %v5348
      %5351 = vset.pattern.permute.xlu0 0
      %5352 = vperm.xlu0 %5351, %v5287
      %v5353 = vpop.permute.xlu0 %5352
      %5356 = vset.pattern.permute.xlu0 0
      %5357 = vperm.xlu0 %5356, %v5289
      %v5358 = vpop.permute.xlu0 %5357
      %5361 = vset.pattern.permute.xlu0 0
      %5362 = vperm.xlu0 %5361, %v5291
      %v5363 = vpop.permute.xlu0 %5362
      %5366 = vset.pattern.permute.xlu0 0
      %5367 = vperm.xlu0 %5366, %v5293
      %v5368 = vpop.permute.xlu0 %5367
      %5371 = vset.pattern.permute.xlu0 0
      %5372 = vperm.xlu0 %5371, %v5295
      %v5373 = vpop.permute.xlu0 %5372
      %5376 = vset.pattern.permute.xlu0 0
      %5377 = vperm.xlu0 %5376, %v5297
      %v5378 = vpop.permute.xlu0 %5377
      %5381 = vset.pattern.permute.xlu0 0
      %5382 = vperm.xlu0 %5381, %v5299
      %v5383 = vpop.permute.xlu0 %5382
      %5386 = vset.pattern.permute.xlu0 0
      %5387 = vperm.xlu0 %5386, %v5301
      %v5388 = vpop.permute.xlu0 %5387
      %5391 = vset.pattern.permute.xlu0 0
      %5392 = vperm.xlu0 %5391, %v5303
      %v5393 = vpop.permute.xlu0 %5392
      %5396 = vset.pattern.permute.xlu0 0
      %5397 = vperm.xlu0 %5396, %v5305
      %v5398 = vpop.permute.xlu0 %5397
      %5401 = vset.pattern.permute.xlu0 0
      %5402 = vperm.xlu0 %5401, %v5307
      %v5403 = vpop.permute.xlu0 %5402
      %5406 = vset.pattern.permute.xlu0 0
      %5407 = vperm.xlu0 %5406, %v5309
      %v5408 = vpop.permute.xlu0 %5407
      %5411 = vset.pattern.permute.xlu0 0
      %5412 = vperm.xlu0 %5411, %v5311
      %v5413 = vpop.permute.xlu0 %5412
      %5416 = vset.pattern.permute.xlu0 0
      %5417 = vperm.xlu0 %5416, %v5313
      %v5418 = vpop.permute.xlu0 %5417
      %5421 = vset.pattern.permute.xlu0 0
      %5422 = vperm.xlu0 %5421, %v5315
      %v5423 = vpop.permute.xlu0 %5422
      %5426 = vset.pattern.permute.xlu0 0
      %5427 = vperm.xlu0 %5426, %v5317
      %v5428 = vpop.permute.xlu0 %5427
      %5431 = vset.pattern.permute.xlu0 0
      %5432 = vperm.xlu0 %5431, %v5319
      %v5433 = vpop.permute.xlu0 %5432
      %5436 = vset.pattern.permute.xlu0 0
      %5437 = vperm.xlu0 %5436, %v5321
      %v5438 = vpop.permute.xlu0 %5437
      %5441 = vset.pattern.permute.xlu0 0
      %5442 = vperm.xlu0 %5441, %v5323
      %v5443 = vpop.permute.xlu0 %5442
      %5446 = vset.pattern.permute.xlu0 0
      %5447 = vperm.xlu0 %5446, %v5325
      %v5448 = vpop.permute.xlu0 %5447
      %5451 = vset.pattern.permute.xlu0 0
      %5452 = vperm.xlu0 %5451, %v5327
      %v5453 = vpop.permute.xlu0 %5452
      %5456 = vset.pattern.permute.xlu0 0
      %5457 = vperm.xlu0 %5456, %v5329
      %v5458 = vpop.permute.xlu0 %5457
      %5461 = vset.pattern.permute.xlu0 0
      %5462 = vperm.xlu0 %5461, %v5331
      %v5463 = vpop.permute.xlu0 %5462
      %5466 = vset.pattern.permute.xlu0 0
      %5467 = vperm.xlu0 %5466, %v5333
      %v5468 = vpop.permute.xlu0 %5467
      %5471 = vset.pattern.permute.xlu0 0
      %5472 = vperm.xlu0 %5471, %v5335
      %v5473 = vpop.permute.xlu0 %5472
      %5476 = vset.pattern.permute.xlu0 0
      %5477 = vperm.xlu0 %5476, %v5337
      %v5478 = vpop.permute.xlu0 %5477
      %5481 = vset.pattern.permute.xlu0 0
      %5482 = vperm.xlu0 %5481, %v5339
      %v5483 = vpop.permute.xlu0 %5482
      %5486 = vset.pattern.permute.xlu0 0
      %5487 = vperm.xlu0 %5486, %v5341
      %v5488 = vpop.permute.xlu0 %5487
      %5491 = vset.pattern.permute.xlu0 0
      %5492 = vperm.xlu0 %5491, %v5343
      %v5493 = vpop.permute.xlu0 %5492
      %5496 = vset.pattern.permute.xlu0 0
      %5497 = vperm.xlu0 %5496, %v5345
      %v5498 = vpop.permute.xlu0 %5497
      %5501 = vset.pattern.permute.xlu0 0
      %5502 = vperm.xlu0 %5501, %v5347
      %v5503 = vpop.permute.xlu0 %5502
      %5506 = vset.pattern.permute.xlu0 0
      %5507 = vperm.xlu0 %5506, %v5349
      %v5508 = vpop.permute.xlu0 %5507
      %v5510 = vmul.f32 %v5222, %v5353
      %v5511 = vmul.f32 %v5223, %v5358
      %v5512 = vmul.f32 %v5224, %v5363
      %v5513 = vmul.f32 %v5225, %v5368
      %v5514 = vmul.f32 %v5226, %v5373
      %v5515 = vmul.f32 %v5227, %v5378
      %v5516 = vmul.f32 %v5228, %v5383
      %v5517 = vmul.f32 %v5229, %v5388
      %v5518 = vmul.f32 %v5230, %v5393
      %v5519 = vmul.f32 %v5231, %v5398
      %v5520 = vmul.f32 %v5232, %v5403
      %v5521 = vmul.f32 %v5233, %v5408
      %v5522 = vmul.f32 %v5234, %v5413
      %v5523 = vmul.f32 %v5235, %v5418
      %v5524 = vmul.f32 %v5236, %v5423
      %v5525 = vmul.f32 %v5237, %v5428
      %v5526 = vmul.f32 %v5238, %v5433
      %v5527 = vmul.f32 %v5239, %v5438
      %v5528 = vmul.f32 %v5240, %v5443
      %v5529 = vmul.f32 %v5241, %v5448
      %v5530 = vmul.f32 %v5242, %v5453
      %v5531 = vmul.f32 %v5243, %v5458
      %v5532 = vmul.f32 %v5244, %v5463
      %v5533 = vmul.f32 %v5245, %v5468
      %v5534 = vmul.f32 %v5246, %v5473
      %v5535 = vmul.f32 %v5247, %v5478
      %v5536 = vmul.f32 %v5248, %v5483
      %v5537 = vmul.f32 %v5249, %v5488
      %v5538 = vmul.f32 %v5250, %v5493
      %v5539 = vmul.f32 %v5251, %v5498
      %v5540 = vmul.f32 %v5252, %v5503
      %v5541 = vmul.f32 %v5253, %v5508
      %5574 = vrot.lane.b32.xlu0 %v4998, 16
      %v5575 = vpop.permute.xlu0 %5574
      %5576 = vrot.lane.b32.xlu0 %v4999, 16
      %v5577 = vpop.permute.xlu0 %5576
      %5578 = vrot.lane.b32.xlu0 %v5000, 16
      %v5579 = vpop.permute.xlu0 %5578
      %5580 = vrot.lane.b32.xlu0 %v5001, 16
      %v5581 = vpop.permute.xlu0 %5580
      %5582 = vrot.lane.b32.xlu0 %v5002, 16
      %v5583 = vpop.permute.xlu0 %5582
      %5584 = vrot.lane.b32.xlu0 %v5003, 16
      %v5585 = vpop.permute.xlu0 %5584
      %5586 = vrot.lane.b32.xlu0 %v5004, 16
      %v5587 = vpop.permute.xlu0 %5586
      %5588 = vrot.lane.b32.xlu0 %v5005, 16
      %v5589 = vpop.permute.xlu0 %5588
      %5590 = vrot.lane.b32.xlu0 %v5006, 16
      %v5591 = vpop.permute.xlu0 %5590
      %5592 = vrot.lane.b32.xlu0 %v5007, 16
      %v5593 = vpop.permute.xlu0 %5592
      %5594 = vrot.lane.b32.xlu0 %v5008, 16
      %v5595 = vpop.permute.xlu0 %5594
      %5596 = vrot.lane.b32.xlu0 %v5009, 16
      %v5597 = vpop.permute.xlu0 %5596
      %5598 = vrot.lane.b32.xlu0 %v5010, 16
      %v5599 = vpop.permute.xlu0 %5598
      %5600 = vrot.lane.b32.xlu0 %v5011, 16
      %v5601 = vpop.permute.xlu0 %5600
      %5602 = vrot.lane.b32.xlu0 %v5012, 16
      %v5603 = vpop.permute.xlu0 %5602
      %5604 = vrot.lane.b32.xlu0 %v5013, 16
      %v5605 = vpop.permute.xlu0 %5604
      %5606 = vrot.lane.b32.xlu0 %v5014, 16
      %v5607 = vpop.permute.xlu0 %5606
      %5608 = vrot.lane.b32.xlu0 %v5015, 16
      %v5609 = vpop.permute.xlu0 %5608
      %5610 = vrot.lane.b32.xlu0 %v5016, 16
      %v5611 = vpop.permute.xlu0 %5610
      %5612 = vrot.lane.b32.xlu0 %v5017, 16
      %v5613 = vpop.permute.xlu0 %5612
      %5614 = vrot.lane.b32.xlu0 %v5018, 16
      %v5615 = vpop.permute.xlu0 %5614
      %5616 = vrot.lane.b32.xlu0 %v5019, 16
      %v5617 = vpop.permute.xlu0 %5616
      %5618 = vrot.lane.b32.xlu0 %v5020, 16
      %v5619 = vpop.permute.xlu0 %5618
      %5620 = vrot.lane.b32.xlu0 %v5021, 16
      %v5621 = vpop.permute.xlu0 %5620
      %5622 = vrot.lane.b32.xlu0 %v5022, 16
      %v5623 = vpop.permute.xlu0 %5622
      %5624 = vrot.lane.b32.xlu0 %v5023, 16
      %v5625 = vpop.permute.xlu0 %5624
      %5626 = vrot.lane.b32.xlu0 %v5024, 16
      %v5627 = vpop.permute.xlu0 %5626
      %5628 = vrot.lane.b32.xlu0 %v5025, 16
      %v5629 = vpop.permute.xlu0 %5628
      %5630 = vrot.lane.b32.xlu0 %v5026, 16
      %v5631 = vpop.permute.xlu0 %5630
      %5632 = vrot.lane.b32.xlu0 %v5027, 16
      %v5633 = vpop.permute.xlu0 %5632
      %5634 = vrot.lane.b32.xlu0 %v5028, 16
      %v5635 = vpop.permute.xlu0 %5634
      %5636 = vrot.lane.b32.xlu0 %v5029, 16
      %v5637 = vpop.permute.xlu0 %5636
      %vm5670 = vcmask 130048
      %v5671 = vsel %vm5670, %v5510, %v5575
      %v5672 = vsel %vm5670, %v5511, %v5577
      %v5673 = vsel %vm5670, %v5512, %v5579
      %v5674 = vsel %vm5670, %v5513, %v5581
      %v5675 = vsel %vm5670, %v5514, %v5583
      %v5676 = vsel %vm5670, %v5515, %v5585
      %v5677 = vsel %vm5670, %v5516, %v5587
      %v5678 = vsel %vm5670, %v5517, %v5589
      %v5679 = vsel %vm5670, %v5518, %v5591
      %v5680 = vsel %vm5670, %v5519, %v5593
      %v5681 = vsel %vm5670, %v5520, %v5595
      %v5682 = vsel %vm5670, %v5521, %v5597
      %v5683 = vsel %vm5670, %v5522, %v5599
      %v5684 = vsel %vm5670, %v5523, %v5601
      %v5685 = vsel %vm5670, %v5524, %v5603
      %v5686 = vsel %vm5670, %v5525, %v5605
      %v5687 = vsel %vm5670, %v5526, %v5607
      %v5688 = vsel %vm5670, %v5527, %v5609
      %v5689 = vsel %vm5670, %v5528, %v5611
      %v5690 = vsel %vm5670, %v5529, %v5613
      %v5691 = vsel %vm5670, %v5530, %v5615
      %v5692 = vsel %vm5670, %v5531, %v5617
      %v5693 = vsel %vm5670, %v5532, %v5619
      %v5694 = vsel %vm5670, %v5533, %v5621
      %v5695 = vsel %vm5670, %v5534, %v5623
      %v5696 = vsel %vm5670, %v5535, %v5625
      %v5697 = vsel %vm5670, %v5536, %v5627
      %v5698 = vsel %vm5670, %v5537, %v5629
      %v5699 = vsel %vm5670, %v5538, %v5631
      %v5700 = vsel %vm5670, %v5539, %v5633
      %v5701 = vsel %vm5670, %v5540, %v5635
      %v5702 = vsel %vm5670, %v5541, %v5637
      %v5703 = vld [vmem:[%s8] sm:$0xff]
      %v5704 = vld [vmem:[%s8 + $0x8] sm:$0xff]
      %v5705 = vld [vmem:[%s8 + $0x10] sm:$0x1]
      %vm5706 = vcmask 138240
      %v5708 = vsel %vm5706, %v5671, 0
      %v5711 = vsel %vm5706, %v5672, 0
      %v5714 = vsel %vm5706, %v5673, 0
      %v5717 = vsel %vm5706, %v5674, 0
      %v5720 = vsel %vm5706, %v5675, 0
      %v5723 = vsel %vm5706, %v5676, 0
      %v5726 = vsel %vm5706, %v5677, 0
      %v5729 = vsel %vm5706, %v5678, 0
      %v5732 = vsel %vm5706, %v5679, 0
      %v5735 = vsel %vm5706, %v5680, 0
      %v5738 = vsel %vm5706, %v5681, 0
      %v5741 = vsel %vm5706, %v5682, 0
      %v5744 = vsel %vm5706, %v5683, 0
      %v5747 = vsel %vm5706, %v5684, 0
      %v5750 = vsel %vm5706, %v5685, 0
      %v5753 = vsel %vm5706, %v5686, 0
      %v5756 = vsel %vm5706, %v5687, 0
      %v5759 = vsel %vm5706, %v5688, 0
      %v5762 = vsel %vm5706, %v5689, 0
      %v5765 = vsel %vm5706, %v5690, 0
      %v5768 = vsel %vm5706, %v5691, 0
      %v5771 = vsel %vm5706, %v5692, 0
      %v5774 = vsel %vm5706, %v5693, 0
      %v5777 = vsel %vm5706, %v5694, 0
      %v5780 = vsel %vm5706, %v5695, 0
      %v5783 = vsel %vm5706, %v5696, 0
      %v5786 = vsel %vm5706, %v5697, 0
      %v5789 = vsel %vm5706, %v5698, 0
      %v5792 = vsel %vm5706, %v5699, 0
      %v5795 = vsel %vm5706, %v5700, 0
      %v5798 = vsel %vm5706, %v5701, 0
      %v5801 = vsel %vm5706, %v5702, 0
      %vm5803 = vcmask 1040384
      %v5805 = vsel %vm5803, %v5705, 0
      %5807 = vmatprep.subr.mxu0 0.0
      %5808 = vmatpush1.msra.mxu0 %v5703
      %5809 = vmatprep.subr.mxu0 0.0
      %5810 = vmatpush1.msra.mxu0 %v5704
      %5811 = vmatprep.subr.mxu0 0.0
      %5812 = vmatpush1.msra.mxu0 %v5805
      %5813 = vmatprep.subr.mxu0 0.0
      %5814 = vmatpush1.msra.mxu0 0.0
      %5815 = vmatprep.subr.mxu0 0.0
      %5816 = vmatpush1.msra.mxu0 0.0
      %5817 = vmatprep.subr.mxu0 0.0
      %5818 = vmatpush1.msra.mxu0 0.0
      %5819 = vmatprep.subr.mxu0 0.0
      %5820 = vmatpush1.msra.mxu0 0.0
      %5821 = vmatprep.subr.mxu0 0.0
      %5822 = vmatpush1.msra.mxu0 0.0
      %5823 = vmatprep.subr.mxu0 0.0
      %5824 = vmatpush1.msra.mxu0 0.0
      %5825 = vmatprep.subr.mxu0 0.0
      %5826 = vmatpush1.msra.mxu0 0.0
      %5827 = vmatprep.subr.mxu0 0.0
      %5828 = vmatpush1.msra.mxu0 0.0
      %5829 = vmatprep.subr.mxu0 0.0
      %5830 = vmatpush1.msra.mxu0 0.0
      %5831 = vmatprep.subr.mxu0 0.0
      %5832 = vmatpush1.msra.mxu0 0.0
      %5833 = vmatprep.subr.mxu0 0.0
      %5834 = vmatpush1.msra.mxu0 0.0
      %5835 = vmatprep.subr.mxu0 0.0
      %5836 = vmatpush1.msra.mxu0 0.0
      %5837 = vmatprep.subr.mxu0 0.0
      %5838 = vmatpush1.msra.mxu0 0.0
      %5839 = vmatprep.subr.mxu0 0.0
      %5840 = vmatpush1.msra.mxu0 0.0
      %5841 = vmatprep.subr.mxu0 0.0
      %5842 = vmatpush1.msra.mxu0 0.0
      %5843 = vmatprep.subr.mxu0 0.0
      %5844 = vmatpush1.msra.mxu0 0.0
      %5845 = vmatprep.subr.mxu0 0.0
      %5846 = vmatpush1.msra.mxu0 0.0
      %5847 = vmatprep.subr.mxu0 0.0
      %5848 = vmatpush1.msra.mxu0 0.0
      %5849 = vmatprep.subr.mxu0 0.0
      %5850 = vmatpush1.msra.mxu0 0.0
      %5851 = vmatprep.subr.mxu0 0.0
      %5852 = vmatpush1.msra.mxu0 0.0
      %5853 = vmatprep.subr.mxu0 0.0
      %5854 = vmatpush1.msra.mxu0 0.0
      %5855 = vmatprep.subr.mxu0 0.0
      %5856 = vmatpush1.msra.mxu0 0.0
      %5857 = vmatprep.subr.mxu0 0.0
      %5858 = vmatpush1.msra.mxu0 0.0
      %5859 = vmatprep.subr.mxu0 0.0
      %5860 = vmatpush1.msra.mxu0 0.0
      %5861 = vmatprep.subr.mxu0 0.0
      %5862 = vmatpush1.msra.mxu0 0.0
      %5863 = vmatprep.subr.mxu0 0.0
      %5864 = vmatpush1.msra.mxu0 0.0
      %5865 = vmatprep.subr.mxu0 0.0
      %5866 = vmatpush1.msra.mxu0 0.0
      %5867 = vmatprep.subr.mxu0 0.0
      %5868 = vmatpush1.msra.mxu0 0.0
      %5869 = vmatprep.subr.mxu0 0.0
      %5870 = vmatpush1.msra.mxu0 0.0
      %5871 = vmatprep.mubr.f32.mxu0 0.0
      %5872 = vmatmul.mubr.f32.gmra.mrb[0].mxu0 %v5708
      %v5873 = vpop.f32.mrb[0].mxu0
      %v5874 = vadd.f32 0.0, %v5873
      %v5875 = vpop.f32.mrb[0].mxu0
      %5876 = vmatprep.mubr.f32.mxu0 0.0
      %5877 = vmatmul.mubr.f32.gmra.mrb[0].mxu0 %v5711
      %v5878 = vpop.f32.mrb[0].mxu0
      %v5879 = vadd.f32 0.0, %v5878
      %v5880 = vpop.f32.mrb[0].mxu0
      %5881 = vmatprep.mubr.f32.mxu0 0.0
      %5882 = vmatmul.mubr.f32.gmra.mrb[0].mxu0 %v5714
      %v5883 = vpop.f32.mrb[0].mxu0
      %v5884 = vadd.f32 0.0, %v5883
      %v5885 = vpop.f32.mrb[0].mxu0
      %5886 = vmatprep.mubr.f32.mxu0 0.0
      %5887 = vmatmul.mubr.f32.gmra.mrb[0].mxu0 %v5717
      %v5888 = vpop.f32.mrb[0].mxu0
      %v5889 = vadd.f32 0.0, %v5888
      %v5890 = vpop.f32.mrb[0].mxu0
      %5891 = vmatprep.mubr.f32.mxu0 0.0
      %5892 = vmatmul.mubr.f32.gmra.mrb[0].mxu0 %v5720
      %v5893 = vpop.f32.mrb[0].mxu0
      %v5894 = vadd.f32 0.0, %v5893
      %v5895 = vpop.f32.mrb[0].mxu0
      %5896 = vmatprep.mubr.f32.mxu0 0.0
      %5897 = vmatmul.mubr.f32.gmra.mrb[0].mxu0 %v5723
      %v5898 = vpop.f32.mrb[0].mxu0
      %v5899 = vadd.f32 0.0, %v5898
      %v5900 = vpop.f32.mrb[0].mxu0
      %5901 = vmatprep.mubr.f32.mxu0 0.0
      %5902 = vmatmul.mubr.f32.gmra.mrb[0].mxu0 %v5726
      %v5903 = vpop.f32.mrb[0].mxu0
      %v5904 = vadd.f32 0.0, %v5903
      %v5905 = vpop.f32.mrb[0].mxu0
      %5906 = vmatprep.mubr.f32.mxu0 0.0
      %5907 = vmatmul.mubr.f32.gmra.mrb[0].mxu0 %v5729
      %v5908 = vpop.f32.mrb[0].mxu0
      %v5909 = vadd.f32 0.0, %v5908
      %v5910 = vpop.f32.mrb[0].mxu0
      %5911 = vmatprep.mubr.f32.mxu0 0.0
      %5912 = vmatmul.mubr.f32.gmra.mrb[0].mxu0 %v5732
      %v5913 = vpop.f32.mrb[0].mxu0
      %v5914 = vadd.f32 0.0, %v5913
      %v5915 = vpop.f32.mrb[0].mxu0
      %5916 = vmatprep.mubr.f32.mxu0 0.0
      %5917 = vmatmul.mubr.f32.gmra.mrb[0].mxu0 %v5735
      %v5918 = vpop.f32.mrb[0].mxu0
      %v5919 = vadd.f32 0.0, %v5918
      %v5920 = vpop.f32.mrb[0].mxu0
      %5921 = vmatprep.mubr.f32.mxu0 0.0
      %5922 = vmatmul.mubr.f32.gmra.mrb[0].mxu0 %v5738
      %v5923 = vpop.f32.mrb[0].mxu0
      %v5924 = vadd.f32 0.0, %v5923
      %v5925 = vpop.f32.mrb[0].mxu0
      %5926 = vmatprep.mubr.f32.mxu0 0.0
      %5927 = vmatmul.mubr.f32.gmra.mrb[0].mxu0 %v5741
      %v5928 = vpop.f32.mrb[0].mxu0
      %v5929 = vadd.f32 0.0, %v5928
      %v5930 = vpop.f32.mrb[0].mxu0
      %5931 = vmatprep.mubr.f32.mxu0 0.0
      %5932 = vmatmul.mubr.f32.gmra.mrb[0].mxu0 %v5744
      %v5933 = vpop.f32.mrb[0].mxu0
      %v5934 = vadd.f32 0.0, %v5933
      %v5935 = vpop.f32.mrb[0].mxu0
      %5936 = vmatprep.mubr.f32.mxu0 0.0
      %5937 = vmatmul.mubr.f32.gmra.mrb[0].mxu0 %v5747
      %v5938 = vpop.f32.mrb[0].mxu0
      %v5939 = vadd.f32 0.0, %v5938
      %v5940 = vpop.f32.mrb[0].mxu0
      %5941 = vmatprep.mubr.f32.mxu0 0.0
      %5942 = vmatmul.mubr.f32.gmra.mrb[0].mxu0 %v5750
      %v5943 = vpop.f32.mrb[0].mxu0
      %v5944 = vadd.f32 0.0, %v5943
      %v5945 = vpop.f32.mrb[0].mxu0
      %5946 = vmatprep.mubr.f32.mxu0 0.0
      %5947 = vmatmul.mubr.f32.gmra.mrb[0].mxu0 %v5753
      %v5948 = vpop.f32.mrb[0].mxu0
      %v5949 = vadd.f32 0.0, %v5948
      %v5950 = vpop.f32.mrb[0].mxu0
      %5951 = vmatprep.mubr.f32.mxu0 0.0
      %5952 = vmatmul.mubr.f32.gmra.mrb[0].mxu0 %v5756
      %v5953 = vpop.f32.mrb[0].mxu0
      %v5954 = vadd.f32 0.0, %v5953
      %v5955 = vpop.f32.mrb[0].mxu0
      %5956 = vmatprep.mubr.f32.mxu0 0.0
      %5957 = vmatmul.mubr.f32.gmra.mrb[0].mxu0 %v5759
      %v5958 = vpop.f32.mrb[0].mxu0
      %v5959 = vadd.f32 0.0, %v5958
      %v5960 = vpop.f32.mrb[0].mxu0
      %5961 = vmatprep.mubr.f32.mxu0 0.0
      %5962 = vmatmul.mubr.f32.gmra.mrb[0].mxu0 %v5762
      %v5963 = vpop.f32.mrb[0].mxu0
      %v5964 = vadd.f32 0.0, %v5963
      %v5965 = vpop.f32.mrb[0].mxu0
      %5966 = vmatprep.mubr.f32.mxu0 0.0
      %5967 = vmatmul.mubr.f32.gmra.mrb[0].mxu0 %v5765
      %v5968 = vpop.f32.mrb[0].mxu0
      %v5969 = vadd.f32 0.0, %v5968
      %v5970 = vpop.f32.mrb[0].mxu0
      %5971 = vmatprep.mubr.f32.mxu0 0.0
      %5972 = vmatmul.mubr.f32.gmra.mrb[0].mxu0 %v5768
      %v5973 = vpop.f32.mrb[0].mxu0
      %v5974 = vadd.f32 0.0, %v5973
      %v5975 = vpop.f32.mrb[0].mxu0
      %5976 = vmatprep.mubr.f32.mxu0 0.0
      %5977 = vmatmul.mubr.f32.gmra.mrb[0].mxu0 %v5771
      %v5978 = vpop.f32.mrb[0].mxu0
      %v5979 = vadd.f32 0.0, %v5978
      %v5980 = vpop.f32.mrb[0].mxu0
      %5981 = vmatprep.mubr.f32.mxu0 0.0
      %5982 = vmatmul.mubr.f32.gmra.mrb[0].mxu0 %v5774
      %v5983 = vpop.f32.mrb[0].mxu0
      %v5984 = vadd.f32 0.0, %v5983
      %v5985 = vpop.f32.mrb[0].mxu0
      %5986 = vmatprep.mubr.f32.mxu0 0.0
      %5987 = vmatmul.mubr.f32.gmra.mrb[0].mxu0 %v5777
      %v5988 = vpop.f32.mrb[0].mxu0
      %v5989 = vadd.f32 0.0, %v5988
      %v5990 = vpop.f32.mrb[0].mxu0
      %5991 = vmatprep.mubr.f32.mxu0 0.0
      %5992 = vmatmul.mubr.f32.gmra.mrb[0].mxu0 %v5780
      %v5993 = vpop.f32.mrb[0].mxu0
      %v5994 = vadd.f32 0.0, %v5993
      %v5995 = vpop.f32.mrb[0].mxu0
      %5996 = vmatprep.mubr.f32.mxu0 0.0
      %5997 = vmatmul.mubr.f32.gmra.mrb[0].mxu0 %v5783
      %v5998 = vpop.f32.mrb[0].mxu0
      %v5999 = vadd.f32 0.0, %v5998
      %v6000 = vpop.f32.mrb[0].mxu0
      %6001 = vmatprep.mubr.f32.mxu0 0.0
      %6002 = vmatmul.mubr.f32.gmra.mrb[0].mxu0 %v5786
      %v6003 = vpop.f32.mrb[0].mxu0
      %v6004 = vadd.f32 0.0, %v6003
      %v6005 = vpop.f32.mrb[0].mxu0
      %6006 = vmatprep.mubr.f32.mxu0 0.0
      %6007 = vmatmul.mubr.f32.gmra.mrb[0].mxu0 %v5789
      %v6008 = vpop.f32.mrb[0].mxu0
      %v6009 = vadd.f32 0.0, %v6008
      %v6010 = vpop.f32.mrb[0].mxu0
      %6011 = vmatprep.mubr.f32.mxu0 0.0
      %6012 = vmatmul.mubr.f32.gmra.mrb[0].mxu0 %v5792
      %v6013 = vpop.f32.mrb[0].mxu0
      %v6014 = vadd.f32 0.0, %v6013
      %v6015 = vpop.f32.mrb[0].mxu0
      %6016 = vmatprep.mubr.f32.mxu0 0.0
      %6017 = vmatmul.mubr.f32.gmra.mrb[0].mxu0 %v5795
      %v6018 = vpop.f32.mrb[0].mxu0
      %v6019 = vadd.f32 0.0, %v6018
      %v6020 = vpop.f32.mrb[0].mxu0
      %6021 = vmatprep.mubr.f32.mxu0 0.0
      %6022 = vmatmul.mubr.f32.gmra.mrb[0].mxu0 %v5798
      %v6023 = vpop.f32.mrb[0].mxu0
      %v6024 = vadd.f32 0.0, %v6023
      %v6025 = vpop.f32.mrb[0].mxu0
      %6026 = vmatprep.mubr.f32.mxu0 0.0
      %6027 = vmatmul.mubr.f32.gmra.mrb[0].mxu0 %v5801
      %v6028 = vpop.f32.mrb[0].mxu0
      %v6029 = vadd.f32 0.0, %v6028
      %v6030 = vpop.f32.mrb[0].mxu0
      %6031 = vdwg.mxu0
      %v6032 = vmul.f32 %v1050, %v5874
      %v6033 = vmul.f32 %v1053, %v5879
      %v6034 = vmul.f32 %v1058, %v5884
      %v6035 = vmul.f32 %v1061, %v5889
      %v6036 = vmul.f32 %v1066, %v5894
      %v6037 = vmul.f32 %v1069, %v5899
      %v6038 = vmul.f32 %v1074, %v5904
      %v6039 = vmul.f32 %v1077, %v5909
      %v6040 = vmul.f32 %v1082, %v5914
      %v6041 = vmul.f32 %v1085, %v5919
      %v6042 = vmul.f32 %v1090, %v5924
      %v6043 = vmul.f32 %v1093, %v5929
      %v6044 = vmul.f32 %v1098, %v5934
      %v6045 = vmul.f32 %v1101, %v5939
      %v6046 = vmul.f32 %v1106, %v5944
      %v6047 = vmul.f32 %v1109, %v5949
      %v6048 = vmul.f32 %v1114, %v5954
      %v6049 = vmul.f32 %v1117, %v5959
      %v6050 = vmul.f32 %v1122, %v5964
      %v6051 = vmul.f32 %v1125, %v5969
      %v6052 = vmul.f32 %v1130, %v5974
      %v6053 = vmul.f32 %v1133, %v5979
      %v6054 = vmul.f32 %v1138, %v5984
      %v6055 = vmul.f32 %v1141, %v5989
      %v6056 = vmul.f32 %v1146, %v5994
      %v6057 = vmul.f32 %v1149, %v5999
      %v6058 = vmul.f32 %v1154, %v6004
      %v6059 = vmul.f32 %v1157, %v6009
      %v6060 = vmul.f32 %v1162, %v6014
      %v6061 = vmul.f32 %v1165, %v6019
      %v6062 = vmul.f32 %v1170, %v6024
      %v6063 = vmul.f32 %v1173, %v6029
      %vm6064 = vcmask 785408
      %6065 = vst.msk [vmem:[%s356] sm:$0xff] %vm6064, %v6032
      %6066 = vst.msk [vmem:[%s356 + $0x8] sm:$0xff] %vm6064, %v6033
      %6067 = vst.msk [vmem:[%s356 + $0x10] sm:$0xff] %vm6064, %v6034
      %6068 = vst.msk [vmem:[%s356 + $0x18] sm:$0xff] %vm6064, %v6035
      %6069 = vst.msk [vmem:[%s356 + $0x20] sm:$0xff] %vm6064, %v6036
      %6070 = vst.msk [vmem:[%s356 + $0x28] sm:$0xff] %vm6064, %v6037
      %6071 = vst.msk [vmem:[%s356 + $0x30] sm:$0xff] %vm6064, %v6038
      %6072 = vst.msk [vmem:[%s356 + $0x38] sm:$0xff] %vm6064, %v6039
      %6073 = vst.msk [vmem:[%s356 + $0x40] sm:$0xff] %vm6064, %v6040
      %6074 = vst.msk [vmem:[%s356 + $0x48] sm:$0xff] %vm6064, %v6041
      %6075 = vst.msk [vmem:[%s356 + $0x50] sm:$0xff] %vm6064, %v6042
      %6076 = vst.msk [vmem:[%s356 + $0x58] sm:$0xff] %vm6064, %v6043
      %6077 = vst.msk [vmem:[%s356 + $0x60] sm:$0xff] %vm6064, %v6044
      %6078 = vst.msk [vmem:[%s356 + $0x68] sm:$0xff] %vm6064, %v6045
      %6079 = vst.msk [vmem:[%s356 + $0x70] sm:$0xff] %vm6064, %v6046
      %6080 = vst.msk [vmem:[%s356 + $0x78] sm:$0xff] %vm6064, %v6047
      %6081 = vst.msk [vmem:[%s356 + $0x80] sm:$0xff] %vm6064, %v6048
      %6082 = vst.msk [vmem:[%s356 + $0x88] sm:$0xff] %vm6064, %v6049
      %6083 = vst.msk [vmem:[%s356 + $0x90] sm:$0xff] %vm6064, %v6050
      %6084 = vst.msk [vmem:[%s356 + $0x98] sm:$0xff] %vm6064, %v6051
      %6085 = vst.msk [vmem:[%s356 + $0xa0] sm:$0xff] %vm6064, %v6052
      %6086 = vst.msk [vmem:[%s356 + $0xa8] sm:$0xff] %vm6064, %v6053
      %6087 = vst.msk [vmem:[%s356 + $0xb0] sm:$0xff] %vm6064, %v6054
      %6088 = vst.msk [vmem:[%s356 + $0xb8] sm:$0xff] %vm6064, %v6055
      %6089 = vst.msk [vmem:[%s356 + $0xc0] sm:$0xff] %vm6064, %v6056
      %6090 = vst.msk [vmem:[%s356 + $0xc8] sm:$0xff] %vm6064, %v6057
      %6091 = vst.msk [vmem:[%s356 + $0xd0] sm:$0xff] %vm6064, %v6058
      %6092 = vst.msk [vmem:[%s356 + $0xd8] sm:$0xff] %vm6064, %v6059
      %6093 = vst.msk [vmem:[%s356 + $0xe0] sm:$0xff] %vm6064, %v6060
      %6094 = vst.msk [vmem:[%s356 + $0xe8] sm:$0xff] %vm6064, %v6061
      %6095 = vst.msk [vmem:[%s356 + $0xf0] sm:$0xff] %vm6064, %v6062
      %6096 = vst.msk [vmem:[%s356 + $0xf8] sm:$0xff] %vm6064, %v6063
      %s6097 = smul.u32 32, %s20
      %p6098 = scmp.lt.s32.totalorder %s6097, 63
      %s6099 = scalar_select %p6098, %s6097, 63
      %s6100 = smul.addr %s6099, 8
      %s6101 = scalar_lea.vmem %s9, %s6100
      // Predicated region
      $region57: #{invariant_message.1} parent=55 // pred_check
        %p6102 = pneg %p237
      $region58: #{invariant_message.1} parent=55 // pred_check_branch
        %6104 = sbr.rel (%p6102) target = $region60
      $region59: #{invariant_message.1} parent=55 // pred_region
        %s6105 = smul.u32 32, %s20
      $region60: #{invariant_message.1} parent=55 // pred_fallthru
        _
    $region56: #{invariant_message.1} parent=5 // pred_fallthru
      _
    %p6106 = scmp.le.s32.totalorder 2, %s15
    // Predicated region
    $region61: #{invariant_message.1} parent=5 // pred_check
      %p6107 = pneg %p6106
    $region62: #{invariant_message.1} parent=5 // pred_check_branch
      %6109 = sbr.rel (%p6107) target = $region64
    $region63: #{invariant_message.1} parent=5 // pred_region
      %s6110 = ssub.s32 %s15, 2
      // Predicated region
      $region65: #{invariant_message.1} parent=63 // pred_check
        %p6111 = pneg %p243
      $region66: #{invariant_message.1} parent=63 // pred_check_branch
        %6113 = sbr.rel (%p6111) target = $region68
      $region67: #{invariant_message.1} parent=63 // pred_region
        %s6114 = smul.u32 32, %s21
        %p6115 = scmp.lt.s32.totalorder %s6114, 63
        %s6116 = scalar_select %p6115, %s6114, 63
        %s6117 = smul.addr %s6116, 8
        %s6118 = scalar_lea.vmem %s9, %s6117
      $region68: #{invariant_message.1} parent=63 // pred_fallthru
        _
    $region64: #{invariant_message.1} parent=5 // pred_fallthru
      _
  $region6: #{invariant_message.1} parent=0 // loop_footer
    %s19 = sadd.s32 1, %s15
  $region7: #{invariant_message.1} parent=0 // loop_footer_branch
    %14 = sbr.rel target = $region3
  $region8: #{invariant_message.1} parent=0 // loop_exit
    _

</llo_original>
